<compile_context>
chip_gen: v5e
topology: v5e:2x2
jax: 0.10.0
libtpu: 0.0.40
codegen_flags: <defaults>
</compile_context>

<pallas_src>
import math

import jax
import jax.numpy as jnp
import numpy as np
from jax.experimental import pallas as pl
from jax.experimental.pallas import tpu as pltpu

LEAKY_SLOPE = 0.2
BN_EPS = 1e-5
CH = 8  # sublane-padded channel count used for every in-kernel tensor


def _round_up(v, m):
    return (v + m - 1) // m * m


def _make_fused_kernel(off0, L_pad, L_w, T_pad, n_valid, deltas9):
    """Build the fused two-stage kernel (all shape constants closed over)."""
    inv_count = 1.0 / float(n_valid)

    def stage(src_ref, w_ref, g_ref, b_ref, patch_ref, maskf):
        # im2col over the 9 (kd, kh) tap groups only.  Each group is a full
        # (8, L_w) sublane tile -> unmasked, non-RMW, lane-dense stores.
        for g, d0 in enumerate(deltas9):
            s = off0 - 1 + d0
            patch_ref[g * CH:(g + 1) * CH, :] = src_ref[:, s:s + L_w]

        # Single MXU matmul per stage: (3*8, 9*8) @ (9*8, L_w) -> (24, L_w).
        m = jnp.dot(w_ref[...], patch_ref[...],
                    preferred_element_type=jnp.float32)

        # kw = 0/1/2 contributions are the three 8-row blocks of m taken at
        # lane offsets 0/1/2 (exact; the patch window is 2 lanes wider than
        # needed, so no wraparound / boundary fixups).
        acc = (m[0:CH, 0:L_pad]
               + m[CH:2 * CH, 1:1 + L_pad]
               + m[2 * CH:3 * CH, 2:2 + L_pad])                # (8, L_pad)

        # BatchNorm3d, train-mode batch stats over the valid columns only
        # (two-pass mean/var; padded rows have gamma=1/beta=0 -> exact zeros).
        mean = jnp.sum(acc * maskf, axis=1, keepdims=True) * inv_count
        cent = (acc - mean) * maskf
        var = jnp.sum(cent * cent, axis=1, keepdims=True) * inv_count
        scale = g_ref[...] * jax.lax.rsqrt(var + BN_EPS)        # (8, 1)
        shift = b_ref[...] - mean * scale

        # Fused normalize + affine + LeakyReLU(0.2); the final mask multiply
        # zeroes the halo columns and doubles as the next stage's zero padding.
        y = acc * scale + shift
        y = jnp.where(y >= 0, y, LEAKY_SLOPE * y)
        return y * maskf

    def kernel(x_ref, mask_ref, w1_ref, g1_ref, b1_ref,
               w2_ref, g2_ref, b2_ref, out_ref, patch_ref, a1_ref):
        maskf = mask_ref[...]                                   # (1, L_pad)

        # stage 1: conv1 -> bn1 -> leaky_relu   (channels in rows [0, C1))
        y1 = stage(x_ref, w1_ref, g1_ref, b1_ref, patch_ref, maskf)

        # Re-embed y1 on the padded flat grid (stage-2 input), still in VMEM:
        # zero only the two halo strips; the interior store is 128-aligned and
        # lane-dense (off0 and L_pad are multiples of 128).
        a1_ref[:, 0:off0] = jnp.zeros((CH, off0), jnp.float32)
        a1_ref[:, off0 + L_pad:T_pad] = jnp.zeros(
            (CH, T_pad - off0 - L_pad), jnp.float32)
        a1_ref[:, off0:off0 + L_pad] = y1

        # stage 2: conv2 -> bn2 -> leaky_relu   (channels in rows [C1, C1+C2))
        y2 = stage(a1_ref, w2_ref, g2_ref, b2_ref, patch_ref, maskf)

        # Channel concat == add of the two disjoint-row activations; one
        # full-tile, lane-dense output store.
        out_ref[...] = a1_ref[:, off0:off0 + L_pad] + y2

    return kernel


def _pack_conv_weight(w, cin, cout, cout_offset):
    """(27, cin, cout) taps -> (24, 72): row = kw*8 + (cout_offset + co),
    col = (kd*3 + kh)*8 + ci.  Unused rows/cols are zero."""
    w5 = w.reshape(3, 3, 3, cin, cout)                   # (kd, kh, kw, ci, co)
    wt = jnp.transpose(w5, (2, 4, 0, 1, 3))              # (kw, co, kd, kh, ci)
    wt = jnp.pad(wt, ((0, 0), (cout_offset, CH - cout_offset - cout),
                      (0, 0), (0, 0), (0, CH - cin)))
    return wt.reshape(3 * CH, 9 * CH).astype(jnp.float32)


def ss_multiscale_block3d(x_ncdhw, params):
    """Forward pass of SSMultiscaleBlock3d (NCDHW in, NCDHW out)."""
    N, Cin, D, H, W = x_ncdhw.shape
    C1 = params["w1"].shape[-1]
    C2 = params["w2"].shape[-1]
    assert Cin <= CH and C1 <= CH and C1 + C2 <= CH

    Dp, Hp, Wp = D + 2, H + 2, W + 2
    HpWp = Hp * Wp
    Ntot = N * Dp * HpWp
    off_max = HpWp + Wp + 1                    # |largest tap offset|
    L = Ntot - 2 * off_max                     # columns that hold every valid output
    L_pad = _round_up(L, 128)                  # lane-dense working window
    pad_left = (-off_max) % 128
    off0 = off_max + pad_left                  # multiple of 128
    L_w = _round_up(L_pad + 2, 128)            # patch window covers kw = 0..2
    deltas9 = [(kd - 1) * HpWp + (kh - 1) * Wp
               for kd in range(3) for kh in range(3)]
    T_pad = _round_up(max(off0 - 1 + max(deltas9) + L_w, pad_left + Ntot), 128)

    # channel-pad to 8, spatial halo pad, channel-first flatten, lane-align pad
    xp = jnp.pad(x_ncdhw, ((0, 0), (0, CH - Cin), (1, 1), (1, 1), (1, 1)))
    xf = jnp.transpose(xp, (1, 0, 2, 3, 4)).reshape(CH, Ntot)
    x_flat = jnp.pad(xf, ((0, 0), (pad_left, T_pad - pad_left - Ntot)))

    # Static validity mask over the L_pad working columns (numpy -> constant).
    q = np.arange(L_pad) + off_max
    wq = q % Wp
    hq = (q // Wp) % Hp
    dq = (q // HpWp) % Dp
    mask_np = ((q < Ntot) & (wq >= 1) & (wq <= W) & (hq >= 1) & (hq <= H)
               & (dq >= 1) & (dq <= D)).astype(np.float32)[None, :]
    mask = jnp.asarray(mask_np)
    n_valid = N * D * H * W

    # Weights / BN params padded to the 8-row layout (padded rows: gamma=1,
    # beta=0 so they produce exact zeros).
    w1p = _pack_conv_weight(params["w1"], Cin, C1, 0)
    w2p = _pack_conv_weight(params["w2"], C1, C2, C1)
    g1p = jnp.concatenate([params["g1"],
                           jnp.ones((CH - C1,), jnp.float32)]).reshape(CH, 1)
    b1p = jnp.concatenate([params["b1"],
                           jnp.zeros((CH - C1,), jnp.float32)]).reshape(CH, 1)
    g2p = jnp.concatenate([jnp.ones((C1,), jnp.float32), params["g2"],
                           jnp.ones((CH - C1 - C2,), jnp.float32)]).reshape(CH, 1)
    b2p = jnp.concatenate([jnp.zeros((C1,), jnp.float32), params["b2"],
                           jnp.zeros((CH - C1 - C2,), jnp.float32)]).reshape(CH, 1)

    kernel = _make_fused_kernel(off0, L_pad, L_w, T_pad, n_valid, deltas9)

    out_flat = pl.pallas_call(
        kernel,
        out_shape=jax.ShapeDtypeStruct((CH, L_pad), jnp.float32),
        in_specs=[pl.BlockSpec(memory_space=pltpu.MemorySpace.VMEM)] * 8,
        out_specs=pl.BlockSpec(memory_space=pltpu.MemorySpace.VMEM),
        scratch_shapes=[
            pltpu.VMEM((9 * CH, L_w), jnp.float32),  # im2col patch (reused by both stages)
            pltpu.VMEM((CH, T_pad), jnp.float32),    # stage-1 act on the padded flat grid
        ],
        compiler_params=pltpu.CompilerParams(vmem_limit_bytes=32 * 1024 * 1024),
    )(x_flat, mask, w1p, g1p, b1p, w2p, g2p, b2p)

    # Unflatten the lane-dense (8, L_pad) result back to NCDHW.
    cols = min(L_pad, Ntot - off_max)
    full = jnp.pad(out_flat[:, :cols],
                   ((0, 0), (off_max, Ntot - off_max - cols)))    # (8, Ntot)
    full = full.reshape(CH, N, Dp, Hp, Wp)
    out = full[:, :, 1:D + 1, 1:H + 1, 1:W + 1]
    return jnp.transpose(out, (1, 0, 2, 3, 4))[:, :C1 + C2]       # NCDHW


# -------------------- pure-JAX reference (for verification) -----------------
def _ref_stage(x_ndhwc, w, gamma, beta):
    cin, cout = w.shape[1], w.shape[2]
    wk = w.reshape(3, 3, 3, cin, cout)
    y = jax.lax.conv_general_dilated(
        x_ndhwc, wk, window_strides=(1, 1, 1), padding="SAME",
        dimension_numbers=("NDHWC", "DHWIO", "NDHWC"),
        precision=jax.lax.Precision.HIGHEST)
    mean = jnp.mean(y, axis=(0, 1, 2, 3), keepdims=True)
    var = jnp.mean(jnp.square(y - mean), axis=(0, 1, 2, 3), keepdims=True)
    yn = (y - mean) * jax.lax.rsqrt(var + BN_EPS)
    yn = yn * gamma.reshape(1, 1, 1, 1, -1) + beta.reshape(1, 1, 1, 1, -1)
    return jnp.where(yn >= 0, yn, LEAKY_SLOPE * yn)


def _ref_block(x_ncdhw, params):
    x = jnp.transpose(x_ncdhw, (0, 2, 3, 4, 1))
    a1 = _ref_stage(x, params["w1"], params["g1"], params["b1"])
    a2 = _ref_stage(a1, params["w2"], params["g2"], params["b2"])
    out = jnp.concatenate([a1, a2], axis=-1)   # NDHWC channel concat == NCDHW dim=1
    return jnp.transpose(out, (0, 4, 1, 2, 3))


# --------------------------------- main --------------------------------------
if __name__ == "__main__":
    # Module config: input_channels=4, output_channels=8, output_prop_2=0.5
    #   -> C2 = round(8*0.5) = 4, C1 = 8 - 4 = 4
    N, Cin, D, H, W = 2, 4, 8, 8, 8
    output_channels = 8
    C2 = round(output_channels * 0.5)
    C1 = output_channels - C2

    key = jax.random.PRNGKey(0)
    kx, kw1, kw2 = jax.random.split(key, 3)

    x = jax.random.normal(kx, (N, Cin, D, H, W), dtype=jnp.float32)

    # Conv weights as (kd*kh*kw, Cin, Cout) taps with a Kaiming-uniform-like
    # bound (as nn.Conv3d).  BN affine params at PyTorch init (gamma=1, beta=0).
    def make_w(k, cin, cout):
        bound = 1.0 / math.sqrt(cin * 27)
        return jax.random.uniform(k, (27, cin, cout), jnp.float32, -bound, bound)

    params = {
        "w1": make_w(kw1, Cin, C1),
        "g1": jnp.ones((C1,), jnp.float32),
        "b1": jnp.zeros((C1,), jnp.float32),
        "w2": make_w(kw2, C1, C2),
        "g2": jnp.ones((C2,), jnp.float32),
        "b2": jnp.zeros((C2,), jnp.float32),
    }

    out = jax.block_until_ready(jax.jit(ss_multiscale_block3d)(x, params))
    assert out.shape == (N, C1 + C2, D, H, W), out.shape

    ref = jax.block_until_ready(_ref_block(x, params))
    # Kernel uses default (bf16 MXU) matmul precision across two stacked
    # conv+BN stages; reference uses HIGHEST, so allow a few e-2 of slack.
    if not np.allclose(np.asarray(out), np.asarray(ref), rtol=3e-2, atol=3e-2):
        max_err = float(np.max(np.abs(np.asarray(out) - np.asarray(ref))))
        raise AssertionError(
            f"Pallas kernel output does not match JAX reference (max abs err {max_err})")

    print("KERNEL_OK")
</pallas_src>

<mosaic_0001>
module attributes {stable_mosaic.version = 11 : i64} {
  func.func @kernel(%arg0: memref<8x2176xf32, #tpu.memory_space<vmem>>, %arg1: memref<1x1792xf32, #tpu.memory_space<vmem>>, %arg2: memref<24x72xf32, #tpu.memory_space<vmem>>, %arg3: memref<8x1xf32, #tpu.memory_space<vmem>>, %arg4: memref<8x1xf32, #tpu.memory_space<vmem>>, %arg5: memref<24x72xf32, #tpu.memory_space<vmem>>, %arg6: memref<8x1xf32, #tpu.memory_space<vmem>>, %arg7: memref<8x1xf32, #tpu.memory_space<vmem>>, %arg8: memref<8x1792xf32, #tpu.memory_space<vmem>>, %arg9: memref<72x1920xf32, #tpu.memory_space<vmem>>, %arg10: memref<8x2176xf32, #tpu.memory_space<vmem>>) attributes {dimension_semantics = [], scalar_prefetch = 0 : i64, scratch_operands = 2 : i64, tpu.core_type = #tpu.core_type<tc>} {
    %c0 = arith.constant 0 : index
    %c0_0 = arith.constant 0 : index
    %0 = vector.load %arg1[%c0, %c0_0] : memref<1x1792xf32, #tpu.memory_space<vmem>>, vector<1x1792xf32>
    %c0_1 = arith.constant 0 : index
    %c17 = arith.constant 17 : index
    %1 = vector.load %arg0[%c0_1, %c17] : memref<8x2176xf32, #tpu.memory_space<vmem>>, vector<8x1920xf32>
    %c0_2 = arith.constant 0 : index
    %c0_3 = arith.constant 0 : index
    %2 = vector.load %arg9[%c0_2, %c0_3] : memref<72x1920xf32, #tpu.memory_space<vmem>>, vector<8x1920xf32>
    tpu.vector_store %arg9[%c0_2, %c0_3], %1 {strides = array<i32>} : memref<72x1920xf32, #tpu.memory_space<vmem>>, vector<8x1920xf32>,
    %c0_4 = arith.constant 0 : index
    %c27 = arith.constant 27 : index
    %3 = vector.load %arg0[%c0_4, %c27] : memref<8x2176xf32, #tpu.memory_space<vmem>>, vector<8x1920xf32>
    %c8 = arith.constant 8 : index
    %c0_5 = arith.constant 0 : index
    %4 = vector.load %arg9[%c8, %c0_5] : memref<72x1920xf32, #tpu.memory_space<vmem>>, vector<8x1920xf32>
    tpu.vector_store %arg9[%c8, %c0_5], %3 {strides = array<i32>} : memref<72x1920xf32, #tpu.memory_space<vmem>>, vector<8x1920xf32>,
    %c0_6 = arith.constant 0 : index
    %c37 = arith.constant 37 : index
    %5 = vector.load %arg0[%c0_6, %c37] : memref<8x2176xf32, #tpu.memory_space<vmem>>, vector<8x1920xf32>
    %c16 = arith.constant 16 : index
    %c0_7 = arith.constant 0 : index
    %6 = vector.load %arg9[%c16, %c0_7] : memref<72x1920xf32, #tpu.memory_space<vmem>>, vector<8x1920xf32>
    tpu.vector_store %arg9[%c16, %c0_7], %5 {strides = array<i32>} : memref<72x1920xf32, #tpu.memory_space<vmem>>, vector<8x1920xf32>,
    %c0_8 = arith.constant 0 : index
    %c117 = arith.constant 117 : index
    %7 = vector.load %arg0[%c0_8, %c117] : memref<8x2176xf32, #tpu.memory_space<vmem>>, vector<8x1920xf32>
    %c24 = arith.constant 24 : index
    %c0_9 = arith.constant 0 : index
    %8 = vector.load %arg9[%c24, %c0_9] : memref<72x1920xf32, #tpu.memory_space<vmem>>, vector<8x1920xf32>
    tpu.vector_store %arg9[%c24, %c0_9], %7 {strides = array<i32>} : memref<72x1920xf32, #tpu.memory_space<vmem>>, vector<8x1920xf32>,
    %c0_10 = arith.constant 0 : index
    %c127 = arith.constant 127 : index
    %9 = vector.load %arg0[%c0_10, %c127] : memref<8x2176xf32, #tpu.memory_space<vmem>>, vector<8x1920xf32>
    %c32 = arith.constant 32 : index
    %c0_11 = arith.constant 0 : index
    %10 = vector.load %arg9[%c32, %c0_11] : memref<72x1920xf32, #tpu.memory_space<vmem>>, vector<8x1920xf32>
    tpu.vector_store %arg9[%c32, %c0_11], %9 {strides = array<i32>} : memref<72x1920xf32, #tpu.memory_space<vmem>>, vector<8x1920xf32>,
    %c0_12 = arith.constant 0 : index
    %c137 = arith.constant 137 : index
    %11 = vector.load %arg0[%c0_12, %c137] : memref<8x2176xf32, #tpu.memory_space<vmem>>, vector<8x1920xf32>
    %c40 = arith.constant 40 : index
    %c0_13 = arith.constant 0 : index
    %12 = vector.load %arg9[%c40, %c0_13] : memref<72x1920xf32, #tpu.memory_space<vmem>>, vector<8x1920xf32>
    tpu.vector_store %arg9[%c40, %c0_13], %11 {strides = array<i32>} : memref<72x1920xf32, #tpu.memory_space<vmem>>, vector<8x1920xf32>,
    %c0_14 = arith.constant 0 : index
    %c217 = arith.constant 217 : index
    %13 = vector.load %arg0[%c0_14, %c217] : memref<8x2176xf32, #tpu.memory_space<vmem>>, vector<8x1920xf32>
    %c48 = arith.constant 48 : index
    %c0_15 = arith.constant 0 : index
    %14 = vector.load %arg9[%c48, %c0_15] : memref<72x1920xf32, #tpu.memory_space<vmem>>, vector<8x1920xf32>
    tpu.vector_store %arg9[%c48, %c0_15], %13 {strides = array<i32>} : memref<72x1920xf32, #tpu.memory_space<vmem>>, vector<8x1920xf32>,
    %c0_16 = arith.constant 0 : index
    %c227 = arith.constant 227 : index
    %15 = vector.load %arg0[%c0_16, %c227] : memref<8x2176xf32, #tpu.memory_space<vmem>>, vector<8x1920xf32>
    %c56 = arith.constant 56 : index
    %c0_17 = arith.constant 0 : index
    %16 = vector.load %arg9[%c56, %c0_17] : memref<72x1920xf32, #tpu.memory_space<vmem>>, vector<8x1920xf32>
    tpu.vector_store %arg9[%c56, %c0_17], %15 {strides = array<i32>} : memref<72x1920xf32, #tpu.memory_space<vmem>>, vector<8x1920xf32>,
    %c0_18 = arith.constant 0 : index
    %c237 = arith.constant 237 : index
    %17 = vector.load %arg0[%c0_18, %c237] : memref<8x2176xf32, #tpu.memory_space<vmem>>, vector<8x1920xf32>
    %c64 = arith.constant 64 : index
    %c0_19 = arith.constant 0 : index
    %18 = vector.load %arg9[%c64, %c0_19] : memref<72x1920xf32, #tpu.memory_space<vmem>>, vector<8x1920xf32>
    tpu.vector_store %arg9[%c64, %c0_19], %17 {strides = array<i32>} : memref<72x1920xf32, #tpu.memory_space<vmem>>, vector<8x1920xf32>,
    %c0_20 = arith.constant 0 : index
    %c0_21 = arith.constant 0 : index
    %19 = vector.load %arg2[%c0_20, %c0_21] : memref<24x72xf32, #tpu.memory_space<vmem>>, vector<24x72xf32>
    %c0_22 = arith.constant 0 : index
    %c0_23 = arith.constant 0 : index
    %20 = vector.load %arg9[%c0_22, %c0_23] : memref<72x1920xf32, #tpu.memory_space<vmem>>, vector<72x1920xf32>
    %cst = arith.constant dense<0.000000e+00> : vector<24x1920xf32>
    %21 = tpu.matmul %19, %20, %cst {dimension_numbers = #tpu.dot_dimension_numbers<[1], [0], [0], [1], [0, 0, 1, 1], [], []>} : vector<24x72xf32>, vector<72x1920xf32>, vector<24x1920xf32> -> vector<24x1920xf32>
    %22 = vector.extract_strided_slice %21 {offsets = [0, 0], sizes = [8, 1792], strides = [1, 1]} : vector<24x1920xf32> to vector<8x1792xf32>
    %23 = vector.extract_strided_slice %21 {offsets = [8, 1], sizes = [8, 1792], strides = [1, 1]} : vector<24x1920xf32> to vector<8x1792xf32>
    %24 = arith.addf %22, %23 : vector<8x1792xf32>
    %25 = vector.extract_strided_slice %21 {offsets = [16, 2], sizes = [8, 1792], strides = [1, 1]} : vector<24x1920xf32> to vector<8x1792xf32>
    %26 = arith.addf %24, %25 : vector<8x1792xf32>
    %27 = vector.broadcast %0 : vector<1x1792xf32> to vector<8x1792xf32>
    %28 = arith.mulf %26, %27 : vector<8x1792xf32>
    %cst_24 = arith.constant dense<0.000000e+00> : vector<8xf32>
    %29 = vector.multi_reduction <add>, %28, %cst_24 [1] : vector<8x1792xf32> to vector<8xf32>
    %30 = vector.shape_cast %29 : vector<8xf32> to vector<8x1xf32>
    %cst_25 = arith.constant 9.765625E-4 : f32
    %31 = vector.broadcast %cst_25 : f32 to vector<8x1xf32>
    %32 = arith.mulf %30, %31 : vector<8x1xf32>
    %33 = vector.broadcast %32 : vector<8x1xf32> to vector<8x1792xf32>
    %34 = arith.subf %26, %33 : vector<8x1792xf32>
    %35 = vector.broadcast %0 : vector<1x1792xf32> to vector<8x1792xf32>
    %36 = arith.mulf %34, %35 : vector<8x1792xf32>
    %37 = arith.mulf %36, %36 : vector<8x1792xf32>
    %cst_26 = arith.constant dense<0.000000e+00> : vector<8xf32>
    %38 = vector.multi_reduction <add>, %37, %cst_26 [1] : vector<8x1792xf32> to vector<8xf32>
    %39 = vector.shape_cast %38 : vector<8xf32> to vector<8x1xf32>
    %cst_27 = arith.constant 9.765625E-4 : f32
    %40 = vector.broadcast %cst_27 : f32 to vector<8x1xf32>
    %41 = arith.mulf %39, %40 : vector<8x1xf32>
    %c0_28 = arith.constant 0 : index
    %c0_29 = arith.constant 0 : index
    %42 = vector.load %arg3[%c0_28, %c0_29] : memref<8x1xf32, #tpu.memory_space<vmem>>, vector<8x1xf32>
    %cst_30 = arith.constant 9.99999974E-6 : f32
    %43 = vector.broadcast %cst_30 : f32 to vector<8x1xf32>
    %44 = arith.addf %41, %43 : vector<8x1xf32>
    %45 = math.rsqrt %44 : vector<8x1xf32>
    %46 = arith.mulf %42, %45 : vector<8x1xf32>
    %c0_31 = arith.constant 0 : index
    %c0_32 = arith.constant 0 : index
    %47 = vector.load %arg4[%c0_31, %c0_32] : memref<8x1xf32, #tpu.memory_space<vmem>>, vector<8x1xf32>
    %48 = arith.mulf %32, %46 : vector<8x1xf32>
    %49 = arith.subf %47, %48 : vector<8x1xf32>
    %50 = vector.broadcast %46 : vector<8x1xf32> to vector<8x1792xf32>
    %51 = arith.mulf %26, %50 : vector<8x1792xf32>
    %52 = vector.broadcast %49 : vector<8x1xf32> to vector<8x1792xf32>
    %53 = arith.addf %51, %52 : vector<8x1792xf32>
    %cst_33 = arith.constant 0.000000e+00 : f32
    %54 = vector.broadcast %cst_33 : f32 to vector<8x1792xf32>
    %55 = arith.cmpf oge, %53, %54 : vector<8x1792xf32>
    %cst_34 = arith.constant 2.000000e-01 : f32
    %56 = vector.broadcast %cst_34 : f32 to vector<8x1792xf32>
    %57 = arith.mulf %56, %53 : vector<8x1792xf32>
    %58 = arith.select %55, %53, %57 : vector<8x1792xi1>, vector<8x1792xf32>
    %59 = vector.broadcast %0 : vector<1x1792xf32> to vector<8x1792xf32>
    %60 = arith.mulf %58, %59 : vector<8x1792xf32>
    %cst_35 = arith.constant 0.000000e+00 : f32
    %61 = vector.broadcast %cst_35 : f32 to vector<8x128xf32>
    %c0_36 = arith.constant 0 : index
    %c0_37 = arith.constant 0 : index
    %62 = vector.load %arg10[%c0_36, %c0_37] : memref<8x2176xf32, #tpu.memory_space<vmem>>, vector<8x128xf32>
    tpu.vector_store %arg10[%c0_36, %c0_37], %61 {strides = array<i32>} : memref<8x2176xf32, #tpu.memory_space<vmem>>, vector<8x128xf32>,
    %cst_38 = arith.constant 0.000000e+00 : f32
    %63 = vector.broadcast %cst_38 : f32 to vector<8x256xf32>
    %c0_39 = arith.constant 0 : index
    %c1920 = arith.constant 1920 : index
    %64 = vector.load %arg10[%c0_39, %c1920] : memref<8x2176xf32, #tpu.memory_space<vmem>>, vector<8x256xf32>
    tpu.vector_store %arg10[%c0_39, %c1920], %63 {strides = array<i32>} : memref<8x2176xf32, #tpu.memory_space<vmem>>, vector<8x256xf32>,
    %c0_40 = arith.constant 0 : index
    %c128 = arith.constant 128 : index
    %65 = vector.load %arg10[%c0_40, %c128] : memref<8x2176xf32, #tpu.memory_space<vmem>>, vector<8x1792xf32>
    tpu.vector_store %arg10[%c0_40, %c128], %60 {strides = array<i32>} : memref<8x2176xf32, #tpu.memory_space<vmem>>, vector<8x1792xf32>,
    %c0_41 = arith.constant 0 : index
    %c17_42 = arith.constant 17 : index
    %66 = vector.load %arg10[%c0_41, %c17_42] : memref<8x2176xf32, #tpu.memory_space<vmem>>, vector<8x1920xf32>
    %c0_43 = arith.constant 0 : index
    %c0_44 = arith.constant 0 : index
    %67 = vector.load %arg9[%c0_43, %c0_44] : memref<72x1920xf32, #tpu.memory_space<vmem>>, vector<8x1920xf32>
    tpu.vector_store %arg9[%c0_43, %c0_44], %66 {strides = array<i32>} : memref<72x1920xf32, #tpu.memory_space<vmem>>, vector<8x1920xf32>,
    %c0_45 = arith.constant 0 : index
    %c27_46 = arith.constant 27 : index
    %68 = vector.load %arg10[%c0_45, %c27_46] : memref<8x2176xf32, #tpu.memory_space<vmem>>, vector<8x1920xf32>
    %c8_47 = arith.constant 8 : index
    %c0_48 = arith.constant 0 : index
    %69 = vector.load %arg9[%c8_47, %c0_48] : memref<72x1920xf32, #tpu.memory_space<vmem>>, vector<8x1920xf32>
    tpu.vector_store %arg9[%c8_47, %c0_48], %68 {strides = array<i32>} : memref<72x1920xf32, #tpu.memory_space<vmem>>, vector<8x1920xf32>,
    %c0_49 = arith.constant 0 : index
    %c37_50 = arith.constant 37 : index
    %70 = vector.load %arg10[%c0_49, %c37_50] : memref<8x2176xf32, #tpu.memory_space<vmem>>, vector<8x1920xf32>
    %c16_51 = arith.constant 16 : index
    %c0_52 = arith.constant 0 : index
    %71 = vector.load %arg9[%c16_51, %c0_52] : memref<72x1920xf32, #tpu.memory_space<vmem>>, vector<8x1920xf32>
    tpu.vector_store %arg9[%c16_51, %c0_52], %70 {strides = array<i32>} : memref<72x1920xf32, #tpu.memory_space<vmem>>, vector<8x1920xf32>,
    %c0_53 = arith.constant 0 : index
    %c117_54 = arith.constant 117 : index
    %72 = vector.load %arg10[%c0_53, %c117_54] : memref<8x2176xf32, #tpu.memory_space<vmem>>, vector<8x1920xf32>
    %c24_55 = arith.constant 24 : index
    %c0_56 = arith.constant 0 : index
    %73 = vector.load %arg9[%c24_55, %c0_56] : memref<72x1920xf32, #tpu.memory_space<vmem>>, vector<8x1920xf32>
    tpu.vector_store %arg9[%c24_55, %c0_56], %72 {strides = array<i32>} : memref<72x1920xf32, #tpu.memory_space<vmem>>, vector<8x1920xf32>,
    %c0_57 = arith.constant 0 : index
    %c127_58 = arith.constant 127 : index
    %74 = vector.load %arg10[%c0_57, %c127_58] : memref<8x2176xf32, #tpu.memory_space<vmem>>, vector<8x1920xf32>
    %c32_59 = arith.constant 32 : index
    %c0_60 = arith.constant 0 : index
    %75 = vector.load %arg9[%c32_59, %c0_60] : memref<72x1920xf32, #tpu.memory_space<vmem>>, vector<8x1920xf32>
    tpu.vector_store %arg9[%c32_59, %c0_60], %74 {strides = array<i32>} : memref<72x1920xf32, #tpu.memory_space<vmem>>, vector<8x1920xf32>,
    %c0_61 = arith.constant 0 : index
    %c137_62 = arith.constant 137 : index
    %76 = vector.load %arg10[%c0_61, %c137_62] : memref<8x2176xf32, #tpu.memory_space<vmem>>, vector<8x1920xf32>
    %c40_63 = arith.constant 40 : index
    %c0_64 = arith.constant 0 : index
    %77 = vector.load %arg9[%c40_63, %c0_64] : memref<72x1920xf32, #tpu.memory_space<vmem>>, vector<8x1920xf32>
    tpu.vector_store %arg9[%c40_63, %c0_64], %76 {strides = array<i32>} : memref<72x1920xf32, #tpu.memory_space<vmem>>, vector<8x1920xf32>,
    %c0_65 = arith.constant 0 : index
    %c217_66 = arith.constant 217 : index
    %78 = vector.load %arg10[%c0_65, %c217_66] : memref<8x2176xf32, #tpu.memory_space<vmem>>, vector<8x1920xf32>
    %c48_67 = arith.constant 48 : index
    %c0_68 = arith.constant 0 : index
    %79 = vector.load %arg9[%c48_67, %c0_68] : memref<72x1920xf32, #tpu.memory_space<vmem>>, vector<8x1920xf32>
    tpu.vector_store %arg9[%c48_67, %c0_68], %78 {strides = array<i32>} : memref<72x1920xf32, #tpu.memory_space<vmem>>, vector<8x1920xf32>,
    %c0_69 = arith.constant 0 : index
    %c227_70 = arith.constant 227 : index
    %80 = vector.load %arg10[%c0_69, %c227_70] : memref<8x2176xf32, #tpu.memory_space<vmem>>, vector<8x1920xf32>
    %c56_71 = arith.constant 56 : index
    %c0_72 = arith.constant 0 : index
    %81 = vector.load %arg9[%c56_71, %c0_72] : memref<72x1920xf32, #tpu.memory_space<vmem>>, vector<8x1920xf32>
    tpu.vector_store %arg9[%c56_71, %c0_72], %80 {strides = array<i32>} : memref<72x1920xf32, #tpu.memory_space<vmem>>, vector<8x1920xf32>,
    %c0_73 = arith.constant 0 : index
    %c237_74 = arith.constant 237 : index
    %82 = vector.load %arg10[%c0_73, %c237_74] : memref<8x2176xf32, #tpu.memory_space<vmem>>, vector<8x1920xf32>
    %c64_75 = arith.constant 64 : index
    %c0_76 = arith.constant 0 : index
    %83 = vector.load %arg9[%c64_75, %c0_76] : memref<72x1920xf32, #tpu.memory_space<vmem>>, vector<8x1920xf32>
    tpu.vector_store %arg9[%c64_75, %c0_76], %82 {strides = array<i32>} : memref<72x1920xf32, #tpu.memory_space<vmem>>, vector<8x1920xf32>,
    %c0_77 = arith.constant 0 : index
    %c0_78 = arith.constant 0 : index
    %84 = vector.load %arg5[%c0_77, %c0_78] : memref<24x72xf32, #tpu.memory_space<vmem>>, vector<24x72xf32>
    %c0_79 = arith.constant 0 : index
    %c0_80 = arith.constant 0 : index
    %85 = vector.load %arg9[%c0_79, %c0_80] : memref<72x1920xf32, #tpu.memory_space<vmem>>, vector<72x1920xf32>
    %cst_81 = arith.constant dense<0.000000e+00> : vector<24x1920xf32>
    %86 = tpu.matmul %84, %85, %cst_81 {dimension_numbers = #tpu.dot_dimension_numbers<[1], [0], [0], [1], [0, 0, 1, 1], [], []>} : vector<24x72xf32>, vector<72x1920xf32>, vector<24x1920xf32> -> vector<24x1920xf32>
    %87 = vector.extract_strided_slice %86 {offsets = [0, 0], sizes = [8, 1792], strides = [1, 1]} : vector<24x1920xf32> to vector<8x1792xf32>
    %88 = vector.extract_strided_slice %86 {offsets = [8, 1], sizes = [8, 1792], strides = [1, 1]} : vector<24x1920xf32> to vector<8x1792xf32>
    %89 = arith.addf %87, %88 : vector<8x1792xf32>
    %90 = vector.extract_strided_slice %86 {offsets = [16, 2], sizes = [8, 1792], strides = [1, 1]} : vector<24x1920xf32> to vector<8x1792xf32>
    %91 = arith.addf %89, %90 : vector<8x1792xf32>
    %92 = vector.broadcast %0 : vector<1x1792xf32> to vector<8x1792xf32>
    %93 = arith.mulf %91, %92 : vector<8x1792xf32>
    %cst_82 = arith.constant dense<0.000000e+00> : vector<8xf32>
    %94 = vector.multi_reduction <add>, %93, %cst_82 [1] : vector<8x1792xf32> to vector<8xf32>
    %95 = vector.shape_cast %94 : vector<8xf32> to vector<8x1xf32>
    %cst_83 = arith.constant 9.765625E-4 : f32
    %96 = vector.broadcast %cst_83 : f32 to vector<8x1xf32>
    %97 = arith.mulf %95, %96 : vector<8x1xf32>
    %98 = vector.broadcast %97 : vector<8x1xf32> to vector<8x1792xf32>
    %99 = arith.subf %91, %98 : vector<8x1792xf32>
    %100 = vector.broadcast %0 : vector<1x1792xf32> to vector<8x1792xf32>
    %101 = arith.mulf %99, %100 : vector<8x1792xf32>
    %102 = arith.mulf %101, %101 : vector<8x1792xf32>
    %cst_84 = arith.constant dense<0.000000e+00> : vector<8xf32>
    %103 = vector.multi_reduction <add>, %102, %cst_84 [1] : vector<8x1792xf32> to vector<8xf32>
    %104 = vector.shape_cast %103 : vector<8xf32> to vector<8x1xf32>
    %cst_85 = arith.constant 9.765625E-4 : f32
    %105 = vector.broadcast %cst_85 : f32 to vector<8x1xf32>
    %106 = arith.mulf %104, %105 : vector<8x1xf32>
    %c0_86 = arith.constant 0 : index
    %c0_87 = arith.constant 0 : index
    %107 = vector.load %arg6[%c0_86, %c0_87] : memref<8x1xf32, #tpu.memory_space<vmem>>, vector<8x1xf32>
    %cst_88 = arith.constant 9.99999974E-6 : f32
    %108 = vector.broadcast %cst_88 : f32 to vector<8x1xf32>
    %109 = arith.addf %106, %108 : vector<8x1xf32>
    %110 = math.rsqrt %109 : vector<8x1xf32>
    %111 = arith.mulf %107, %110 : vector<8x1xf32>
    %c0_89 = arith.constant 0 : index
    %c0_90 = arith.constant 0 : index
    %112 = vector.load %arg7[%c0_89, %c0_90] : memref<8x1xf32, #tpu.memory_space<vmem>>, vector<8x1xf32>
    %113 = arith.mulf %97, %111 : vector<8x1xf32>
    %114 = arith.subf %112, %113 : vector<8x1xf32>
    %115 = vector.broadcast %111 : vector<8x1xf32> to vector<8x1792xf32>
    %116 = arith.mulf %91, %115 : vector<8x1792xf32>
    %117 = vector.broadcast %114 : vector<8x1xf32> to vector<8x1792xf32>
    %118 = arith.addf %116, %117 : vector<8x1792xf32>
    %cst_91 = arith.constant 0.000000e+00 : f32
    %119 = vector.broadcast %cst_91 : f32 to vector<8x1792xf32>
    %120 = arith.cmpf oge, %118, %119 : vector<8x1792xf32>
    %cst_92 = arith.constant 2.000000e-01 : f32
    %121 = vector.broadcast %cst_92 : f32 to vector<8x1792xf32>
    %122 = arith.mulf %121, %118 : vector<8x1792xf32>
    %123 = arith.select %120, %118, %122 : vector<8x1792xi1>, vector<8x1792xf32>
    %124 = vector.broadcast %0 : vector<1x1792xf32> to vector<8x1792xf32>
    %125 = arith.mulf %123, %124 : vector<8x1792xf32>
    %c0_93 = arith.constant 0 : index
    %c128_94 = arith.constant 128 : index
    %126 = vector.load %arg10[%c0_93, %c128_94] : memref<8x2176xf32, #tpu.memory_space<vmem>>, vector<8x1792xf32>
    %127 = arith.addf %126, %125 : vector<8x1792xf32>
    %c0_95 = arith.constant 0 : index
    %c0_96 = arith.constant 0 : index
    %128 = vector.load %arg8[%c0_95, %c0_96] : memref<8x1792xf32, #tpu.memory_space<vmem>>, vector<8x1792xf32>
    tpu.vector_store %arg8[%c0_95, %c0_96], %127 {strides = array<i32>} : memref<8x1792xf32, #tpu.memory_space<vmem>>, vector<8x1792xf32>,
    return
  }
}

</mosaic_0001>

<llo_original>
// kernel: ss_multiscale_block3d.1
$region0: #{ss_multiscale_block3d.1}
  #allocation0 [shape = 'u32[]', space=smem, size = 0x4, offset = 0x4, fixed_abs, tag = 'smem constant byte address 0x4 - core index']
  #allocation1 [shape = 'u32[72,128]{1,0:T(1,128)}', space=vmem, size = 0x9000, scoped, tag = 'internal scratch']
  #allocation2 [shape = 'f32[72,1920]{1,0:T(8,128)}', space=vmem, size = 0x87000, scoped, tag = 'scratch operand']
  #allocation3 [shape = 'f32[8,2176]{1,0:T(8,128)}', space=vmem, size = 0x11000, scoped, tag = 'scratch operand']
  %s0 = inlined_call_operand.vmem [shape: f32[8,2176], index: 0, kind: input, shape index: {}]
  %s1 = inlined_call_operand.vmem [shape: f32[1,1792], index: 1, kind: input, shape index: {}]
  %s2 = inlined_call_operand.vmem [shape: f32[24,72], index: 2, kind: input, shape index: {}]
  %s3 = inlined_call_operand.vmem [shape: f32[8,1], index: 3, kind: input, shape index: {}]
  %s4 = inlined_call_operand.vmem [shape: f32[8,1], index: 4, kind: input, shape index: {}]
  %s5 = inlined_call_operand.vmem [shape: f32[24,72], index: 5, kind: input, shape index: {}]
  %s6 = inlined_call_operand.vmem [shape: f32[8,1], index: 6, kind: input, shape index: {}]
  %s7 = inlined_call_operand.vmem [shape: f32[8,1], index: 7, kind: input, shape index: {}]
  %s8 = inlined_call_operand.vmem [shape: f32[8,1792], index: 8, kind: output, shape index: {}]
  %s9 = sld [smem:[#allocation0]]
  $region42: #{ss_multiscale_block3d.1} parent=0
    _
  %s11 = ssub.s32 1, %s9
  %s12 = scalar_select 0, %s11, %s9
  // Predicated region
  $region2: #{ss_multiscale_block3d.1} parent=0 // pred_check
    _
  $region3: #{ss_multiscale_block3d.1} parent=0 // pred_check_branch
    %14 = sbr.rel (0) target = $region5
  $region4: #{ss_multiscale_block3d.1} parent=0 // pred_region
    _
  $region5: #{ss_multiscale_block3d.1} parent=0 // pred_fallthru
    _
  // Predicated region
  $region6: #{ss_multiscale_block3d.1} parent=0 // pred_check
    _
  $region7: #{ss_multiscale_block3d.1} parent=0 // pred_check_branch
    %16 = sbr.rel (0) target = $region9
  $region8: #{ss_multiscale_block3d.1} parent=0 // pred_region
    _
  $region9: #{ss_multiscale_block3d.1} parent=0 // pred_fallthru
    _
  // Predicated region
  $region10: #{ss_multiscale_block3d.1} parent=0 // pred_check
    _
  $region11: #{ss_multiscale_block3d.1} parent=0 // pred_check_branch
    %18 = sbr.rel (0) target = $region13
  $region12: #{ss_multiscale_block3d.1} parent=0 // pred_region
    _
  $region13: #{ss_multiscale_block3d.1} parent=0 // pred_fallthru
    _
  // Predicated region
  $region14: #{ss_multiscale_block3d.1} parent=0 // pred_check
    _
  $region15: #{ss_multiscale_block3d.1} parent=0 // pred_check_branch
    %20 = sbr.rel (0) target = $region17
  $region16: #{ss_multiscale_block3d.1} parent=0 // pred_region
    _
  $region17: #{ss_multiscale_block3d.1} parent=0 // pred_fallthru
    _
  // Predicated region
  $region18: #{ss_multiscale_block3d.1} parent=0 // pred_check
    _
  $region19: #{ss_multiscale_block3d.1} parent=0 // pred_check_branch
    %22 = sbr.rel (0) target = $region21
  $region20: #{ss_multiscale_block3d.1} parent=0 // pred_region
    _
  $region21: #{ss_multiscale_block3d.1} parent=0 // pred_fallthru
    _
  // Predicated region
  $region22: #{ss_multiscale_block3d.1} parent=0 // pred_check
    _
  $region23: #{ss_multiscale_block3d.1} parent=0 // pred_check_branch
    %24 = sbr.rel (0) target = $region25
  $region24: #{ss_multiscale_block3d.1} parent=0 // pred_region
    _
  $region25: #{ss_multiscale_block3d.1} parent=0 // pred_fallthru
    _
  // Predicated region
  $region26: #{ss_multiscale_block3d.1} parent=0 // pred_check
    _
  $region27: #{ss_multiscale_block3d.1} parent=0 // pred_check_branch
    %26 = sbr.rel (0) target = $region29
  $region28: #{ss_multiscale_block3d.1} parent=0 // pred_region
    _
  $region29: #{ss_multiscale_block3d.1} parent=0 // pred_fallthru
    _
  // Predicated region
  $region30: #{ss_multiscale_block3d.1} parent=0 // pred_check
    _
  $region31: #{ss_multiscale_block3d.1} parent=0 // pred_check_branch
    %28 = sbr.rel (0) target = $region33
  $region32: #{ss_multiscale_block3d.1} parent=0 // pred_region
    _
  $region33: #{ss_multiscale_block3d.1} parent=0 // pred_fallthru
    _
  %v29 = vld [vmem:[%s1] sm:$0xff]
  %v30 = vld [vmem:[%s1 + $0x8] sm:$0x3f]
  %v31 = vld [vmem:[%s0] sm:$0xff]
  %v32 = vld [vmem:[%s0 + $0x8] sm:$0xff]
  %v33 = vld [vmem:[%s0 + $0x10] sm:$0xff]
  %v34 = vld [vmem:[%s0 + $0x18] sm:$0xff]
  %v35 = vld [vmem:[%s0 + $0x20] sm:$0xff]
  %v36 = vld [vmem:[%s0 + $0x28] sm:$0xff]
  %v37 = vld [vmem:[%s0 + $0x30] sm:$0xff]
  %v38 = vld [vmem:[%s0 + $0x38] sm:$0xff]
  %v39 = vld [vmem:[%s0 + $0x40] sm:$0xff]
  %v40 = vld [vmem:[%s0 + $0x48] sm:$0xff]
  %v41 = vld [vmem:[%s0 + $0x50] sm:$0xff]
  %v42 = vld [vmem:[%s0 + $0x58] sm:$0xff]
  %v43 = vld [vmem:[%s0 + $0x60] sm:$0xff]
  %v44 = vld [vmem:[%s0 + $0x68] sm:$0xff]
  %v45 = vld [vmem:[%s0 + $0x70] sm:$0xff]
  %v46 = vld [vmem:[%s0 + $0x78] sm:$0xff]
  %63 = vrot.lane.b32.xlu0 %v31, 111
  %v64 = vpop.permute.xlu0 %63
  %65 = vrot.lane.b32.xlu0 %v32, 111
  %v66 = vpop.permute.xlu0 %65
  %67 = vrot.lane.b32.xlu0 %v33, 111
  %v68 = vpop.permute.xlu0 %67
  %69 = vrot.lane.b32.xlu0 %v34, 111
  %v70 = vpop.permute.xlu0 %69
  %71 = vrot.lane.b32.xlu0 %v35, 111
  %v72 = vpop.permute.xlu0 %71
  %73 = vrot.lane.b32.xlu0 %v36, 111
  %v74 = vpop.permute.xlu0 %73
  %75 = vrot.lane.b32.xlu0 %v37, 111
  %v76 = vpop.permute.xlu0 %75
  %77 = vrot.lane.b32.xlu0 %v38, 111
  %v78 = vpop.permute.xlu0 %77
  %79 = vrot.lane.b32.xlu0 %v39, 111
  %v80 = vpop.permute.xlu0 %79
  %81 = vrot.lane.b32.xlu0 %v40, 111
  %v82 = vpop.permute.xlu0 %81
  %83 = vrot.lane.b32.xlu0 %v41, 111
  %v84 = vpop.permute.xlu0 %83
  %85 = vrot.lane.b32.xlu0 %v42, 111
  %v86 = vpop.permute.xlu0 %85
  %87 = vrot.lane.b32.xlu0 %v43, 111
  %v88 = vpop.permute.xlu0 %87
  %89 = vrot.lane.b32.xlu0 %v44, 111
  %v90 = vpop.permute.xlu0 %89
  %91 = vrot.lane.b32.xlu0 %v45, 111
  %v92 = vpop.permute.xlu0 %91
  %93 = vrot.lane.b32.xlu0 %v46, 111
  %v94 = vpop.permute.xlu0 %93
  %vm95 = vcmask 908288
  %v96 = vsel %vm95, %v64, %v66
  %v97 = vsel %vm95, %v66, %v68
  %v98 = vsel %vm95, %v68, %v70
  %v99 = vsel %vm95, %v70, %v72
  %v100 = vsel %vm95, %v72, %v74
  %v101 = vsel %vm95, %v74, %v76
  %v102 = vsel %vm95, %v76, %v78
  %v103 = vsel %vm95, %v78, %v80
  %v104 = vsel %vm95, %v80, %v82
  %v105 = vsel %vm95, %v82, %v84
  %v106 = vsel %vm95, %v84, %v86
  %v107 = vsel %vm95, %v86, %v88
  %v108 = vsel %vm95, %v88, %v90
  %v109 = vsel %vm95, %v90, %v92
  %v110 = vsel %vm95, %v92, %v94
  %126 = vst [vmem:[#allocation2] sm:$0xff] %v96
  %127 = vst [vmem:[#allocation2 + $0x8] sm:$0xff] %v97
  %128 = vst [vmem:[#allocation2 + $0x10] sm:$0xff] %v98
  %129 = vst [vmem:[#allocation2 + $0x18] sm:$0xff] %v99
  %130 = vst [vmem:[#allocation2 + $0x20] sm:$0xff] %v100
  %131 = vst [vmem:[#allocation2 + $0x28] sm:$0xff] %v101
  %132 = vst [vmem:[#allocation2 + $0x30] sm:$0xff] %v102
  %133 = vst [vmem:[#allocation2 + $0x38] sm:$0xff] %v103
  %134 = vst [vmem:[#allocation2 + $0x40] sm:$0xff] %v104
  %135 = vst [vmem:[#allocation2 + $0x48] sm:$0xff] %v105
  %136 = vst [vmem:[#allocation2 + $0x50] sm:$0xff] %v106
  %137 = vst [vmem:[#allocation2 + $0x58] sm:$0xff] %v107
  %138 = vst [vmem:[#allocation2 + $0x60] sm:$0xff] %v108
  %139 = vst [vmem:[#allocation2 + $0x68] sm:$0xff] %v109
  %140 = vst [vmem:[#allocation2 + $0x70] sm:$0xff] %v110
  %v141 = vld [vmem:[%s0] sm:$0xff]
  %v142 = vld [vmem:[%s0 + $0x8] sm:$0xff]
  %v143 = vld [vmem:[%s0 + $0x10] sm:$0xff]
  %v144 = vld [vmem:[%s0 + $0x18] sm:$0xff]
  %v145 = vld [vmem:[%s0 + $0x20] sm:$0xff]
  %v146 = vld [vmem:[%s0 + $0x28] sm:$0xff]
  %v147 = vld [vmem:[%s0 + $0x30] sm:$0xff]
  %v148 = vld [vmem:[%s0 + $0x38] sm:$0xff]
  %v149 = vld [vmem:[%s0 + $0x40] sm:$0xff]
  %v150 = vld [vmem:[%s0 + $0x48] sm:$0xff]
  %v151 = vld [vmem:[%s0 + $0x50] sm:$0xff]
  %v152 = vld [vmem:[%s0 + $0x58] sm:$0xff]
  %v153 = vld [vmem:[%s0 + $0x60] sm:$0xff]
  %v154 = vld [vmem:[%s0 + $0x68] sm:$0xff]
  %v155 = vld [vmem:[%s0 + $0x70] sm:$0xff]
  %v156 = vld [vmem:[%s0 + $0x78] sm:$0xff]
  %173 = vrot.lane.b32.xlu0 %v141, 101
  %v174 = vpop.permute.xlu0 %173
  %175 = vrot.lane.b32.xlu0 %v142, 101
  %v176 = vpop.permute.xlu0 %175
  %177 = vrot.lane.b32.xlu0 %v143, 101
  %v178 = vpop.permute.xlu0 %177
  %179 = vrot.lane.b32.xlu0 %v144, 101
  %v180 = vpop.permute.xlu0 %179
  %181 = vrot.lane.b32.xlu0 %v145, 101
  %v182 = vpop.permute.xlu0 %181
  %183 = vrot.lane.b32.xlu0 %v146, 101
  %v184 = vpop.permute.xlu0 %183
  %185 = vrot.lane.b32.xlu0 %v147, 101
  %v186 = vpop.permute.xlu0 %185
  %187 = vrot.lane.b32.xlu0 %v148, 101
  %v188 = vpop.permute.xlu0 %187
  %189 = vrot.lane.b32.xlu0 %v149, 101
  %v190 = vpop.permute.xlu0 %189
  %191 = vrot.lane.b32.xlu0 %v150, 101
  %v192 = vpop.permute.xlu0 %191
  %193 = vrot.lane.b32.xlu0 %v151, 101
  %v194 = vpop.permute.xlu0 %193
  %195 = vrot.lane.b32.xlu0 %v152, 101
  %v196 = vpop.permute.xlu0 %195
  %197 = vrot.lane.b32.xlu0 %v153, 101
  %v198 = vpop.permute.xlu0 %197
  %199 = vrot.lane.b32.xlu0 %v154, 101
  %v200 = vpop.permute.xlu0 %199
  %201 = vrot.lane.b32.xlu0 %v155, 101
  %v202 = vpop.permute.xlu0 %201
  %203 = vrot.lane.b32.xlu0 %v156, 101
  %v204 = vpop.permute.xlu0 %203
  %vm205 = vcmask 826368
  %v206 = vsel %vm205, %v174, %v176
  %v207 = vsel %vm205, %v176, %v178
  %v208 = vsel %vm205, %v178, %v180
  %v209 = vsel %vm205, %v180, %v182
  %v210 = vsel %vm205, %v182, %v184
  %v211 = vsel %vm205, %v184, %v186
  %v212 = vsel %vm205, %v186, %v188
  %v213 = vsel %vm205, %v188, %v190
  %v214 = vsel %vm205, %v190, %v192
  %v215 = vsel %vm205, %v192, %v194
  %v216 = vsel %vm205, %v194, %v196
  %v217 = vsel %vm205, %v196, %v198
  %v218 = vsel %vm205, %v198, %v200
  %v219 = vsel %vm205, %v200, %v202
  %v220 = vsel %vm205, %v202, %v204
  %236 = vst [vmem:[#allocation2 + $0x78] sm:$0xff] %v206
  %237 = vst [vmem:[#allocation2 + $0x80] sm:$0xff] %v207
  %238 = vst [vmem:[#allocation2 + $0x88] sm:$0xff] %v208
  %239 = vst [vmem:[#allocation2 + $0x90] sm:$0xff] %v209
  %240 = vst [vmem:[#allocation2 + $0x98] sm:$0xff] %v210
  %241 = vst [vmem:[#allocation2 + $0xa0] sm:$0xff] %v211
  %242 = vst [vmem:[#allocation2 + $0xa8] sm:$0xff] %v212
  %243 = vst [vmem:[#allocation2 + $0xb0] sm:$0xff] %v213
  %244 = vst [vmem:[#allocation2 + $0xb8] sm:$0xff] %v214
  %245 = vst [vmem:[#allocation2 + $0xc0] sm:$0xff] %v215
  %246 = vst [vmem:[#allocation2 + $0xc8] sm:$0xff] %v216
  %247 = vst [vmem:[#allocation2 + $0xd0] sm:$0xff] %v217
  %248 = vst [vmem:[#allocation2 + $0xd8] sm:$0xff] %v218
  %249 = vst [vmem:[#allocation2 + $0xe0] sm:$0xff] %v219
  %250 = vst [vmem:[#allocation2 + $0xe8] sm:$0xff] %v220
  %v251 = vld [vmem:[%s0] sm:$0xff]
  %v252 = vld [vmem:[%s0 + $0x8] sm:$0xff]
  %v253 = vld [vmem:[%s0 + $0x10] sm:$0xff]
  %v254 = vld [vmem:[%s0 + $0x18] sm:$0xff]
  %v255 = vld [vmem:[%s0 + $0x20] sm:$0xff]
  %v256 = vld [vmem:[%s0 + $0x28] sm:$0xff]
  %v257 = vld [vmem:[%s0 + $0x30] sm:$0xff]
  %v258 = vld [vmem:[%s0 + $0x38] sm:$0xff]
  %v259 = vld [vmem:[%s0 + $0x40] sm:$0xff]
  %v260 = vld [vmem:[%s0 + $0x48] sm:$0xff]
  %v261 = vld [vmem:[%s0 + $0x50] sm:$0xff]
  %v262 = vld [vmem:[%s0 + $0x58] sm:$0xff]
  %v263 = vld [vmem:[%s0 + $0x60] sm:$0xff]
  %v264 = vld [vmem:[%s0 + $0x68] sm:$0xff]
  %v265 = vld [vmem:[%s0 + $0x70] sm:$0xff]
  %v266 = vld [vmem:[%s0 + $0x78] sm:$0xff]
  %283 = vrot.lane.b32.xlu0 %v251, 91
  %v284 = vpop.permute.xlu0 %283
  %285 = vrot.lane.b32.xlu0 %v252, 91
  %v286 = vpop.permute.xlu0 %285
  %287 = vrot.lane.b32.xlu0 %v253, 91
  %v288 = vpop.permute.xlu0 %287
  %289 = vrot.lane.b32.xlu0 %v254, 91
  %v290 = vpop.permute.xlu0 %289
  %291 = vrot.lane.b32.xlu0 %v255, 91
  %v292 = vpop.permute.xlu0 %291
  %293 = vrot.lane.b32.xlu0 %v256, 91
  %v294 = vpop.permute.xlu0 %293
  %295 = vrot.lane.b32.xlu0 %v257, 91
  %v296 = vpop.permute.xlu0 %295
  %297 = vrot.lane.b32.xlu0 %v258, 91
  %v298 = vpop.permute.xlu0 %297
  %299 = vrot.lane.b32.xlu0 %v259, 91
  %v300 = vpop.permute.xlu0 %299
  %301 = vrot.lane.b32.xlu0 %v260, 91
  %v302 = vpop.permute.xlu0 %301
  %303 = vrot.lane.b32.xlu0 %v261, 91
  %v304 = vpop.permute.xlu0 %303
  %305 = vrot.lane.b32.xlu0 %v262, 91
  %v306 = vpop.permute.xlu0 %305
  %307 = vrot.lane.b32.xlu0 %v263, 91
  %v308 = vpop.permute.xlu0 %307
  %309 = vrot.lane.b32.xlu0 %v264, 91
  %v310 = vpop.permute.xlu0 %309
  %311 = vrot.lane.b32.xlu0 %v265, 91
  %v312 = vpop.permute.xlu0 %311
  %313 = vrot.lane.b32.xlu0 %v266, 91
  %v314 = vpop.permute.xlu0 %313
  %vm315 = vcmask 744448
  %v316 = vsel %vm315, %v284, %v286
  %v317 = vsel %vm315, %v286, %v288
  %v318 = vsel %vm315, %v288, %v290
  %v319 = vsel %vm315, %v290, %v292
  %v320 = vsel %vm315, %v292, %v294
  %v321 = vsel %vm315, %v294, %v296
  %v322 = vsel %vm315, %v296, %v298
  %v323 = vsel %vm315, %v298, %v300
  %v324 = vsel %vm315, %v300, %v302
  %v325 = vsel %vm315, %v302, %v304
  %v326 = vsel %vm315, %v304, %v306
  %v327 = vsel %vm315, %v306, %v308
  %v328 = vsel %vm315, %v308, %v310
  %v329 = vsel %vm315, %v310, %v312
  %v330 = vsel %vm315, %v312, %v314
  %346 = vst [vmem:[#allocation2 + $0xf0] sm:$0xff] %v316
  %347 = vst [vmem:[#allocation2 + $0xf8] sm:$0xff] %v317
  %348 = vst [vmem:[#allocation2 + $0x100] sm:$0xff] %v318
  %349 = vst [vmem:[#allocation2 + $0x108] sm:$0xff] %v319
  %350 = vst [vmem:[#allocation2 + $0x110] sm:$0xff] %v320
  %351 = vst [vmem:[#allocation2 + $0x118] sm:$0xff] %v321
  %352 = vst [vmem:[#allocation2 + $0x120] sm:$0xff] %v322
  %353 = vst [vmem:[#allocation2 + $0x128] sm:$0xff] %v323
  %354 = vst [vmem:[#allocation2 + $0x130] sm:$0xff] %v324
  %355 = vst [vmem:[#allocation2 + $0x138] sm:$0xff] %v325
  %356 = vst [vmem:[#allocation2 + $0x140] sm:$0xff] %v326
  %357 = vst [vmem:[#allocation2 + $0x148] sm:$0xff] %v327
  %358 = vst [vmem:[#allocation2 + $0x150] sm:$0xff] %v328
  %359 = vst [vmem:[#allocation2 + $0x158] sm:$0xff] %v329
  %360 = vst [vmem:[#allocation2 + $0x160] sm:$0xff] %v330
  %v361 = vld [vmem:[%s0] sm:$0xff]
  %v362 = vld [vmem:[%s0 + $0x8] sm:$0xff]
  %v363 = vld [vmem:[%s0 + $0x10] sm:$0xff]
  %v364 = vld [vmem:[%s0 + $0x18] sm:$0xff]
  %v365 = vld [vmem:[%s0 + $0x20] sm:$0xff]
  %v366 = vld [vmem:[%s0 + $0x28] sm:$0xff]
  %v367 = vld [vmem:[%s0 + $0x30] sm:$0xff]
  %v368 = vld [vmem:[%s0 + $0x38] sm:$0xff]
  %v369 = vld [vmem:[%s0 + $0x40] sm:$0xff]
  %v370 = vld [vmem:[%s0 + $0x48] sm:$0xff]
  %v371 = vld [vmem:[%s0 + $0x50] sm:$0xff]
  %v372 = vld [vmem:[%s0 + $0x58] sm:$0xff]
  %v373 = vld [vmem:[%s0 + $0x60] sm:$0xff]
  %v374 = vld [vmem:[%s0 + $0x68] sm:$0xff]
  %v375 = vld [vmem:[%s0 + $0x70] sm:$0xff]
  %v376 = vld [vmem:[%s0 + $0x78] sm:$0xff]
  %393 = vrot.lane.b32.xlu0 %v361, 11
  %v394 = vpop.permute.xlu0 %393
  %395 = vrot.lane.b32.xlu0 %v362, 11
  %v396 = vpop.permute.xlu0 %395
  %397 = vrot.lane.b32.xlu0 %v363, 11
  %v398 = vpop.permute.xlu0 %397
  %399 = vrot.lane.b32.xlu0 %v364, 11
  %v400 = vpop.permute.xlu0 %399
  %401 = vrot.lane.b32.xlu0 %v365, 11
  %v402 = vpop.permute.xlu0 %401
  %403 = vrot.lane.b32.xlu0 %v366, 11
  %v404 = vpop.permute.xlu0 %403
  %405 = vrot.lane.b32.xlu0 %v367, 11
  %v406 = vpop.permute.xlu0 %405
  %407 = vrot.lane.b32.xlu0 %v368, 11
  %v408 = vpop.permute.xlu0 %407
  %409 = vrot.lane.b32.xlu0 %v369, 11
  %v410 = vpop.permute.xlu0 %409
  %411 = vrot.lane.b32.xlu0 %v370, 11
  %v412 = vpop.permute.xlu0 %411
  %413 = vrot.lane.b32.xlu0 %v371, 11
  %v414 = vpop.permute.xlu0 %413
  %415 = vrot.lane.b32.xlu0 %v372, 11
  %v416 = vpop.permute.xlu0 %415
  %417 = vrot.lane.b32.xlu0 %v373, 11
  %v418 = vpop.permute.xlu0 %417
  %419 = vrot.lane.b32.xlu0 %v374, 11
  %v420 = vpop.permute.xlu0 %419
  %421 = vrot.lane.b32.xlu0 %v375, 11
  %v422 = vpop.permute.xlu0 %421
  %423 = vrot.lane.b32.xlu0 %v376, 11
  %v424 = vpop.permute.xlu0 %423
  %vm425 = vcmask 89088
  %v426 = vsel %vm425, %v394, %v396
  %v427 = vsel %vm425, %v396, %v398
  %v428 = vsel %vm425, %v398, %v400
  %v429 = vsel %vm425, %v400, %v402
  %v430 = vsel %vm425, %v402, %v404
  %v431 = vsel %vm425, %v404, %v406
  %v432 = vsel %vm425, %v406, %v408
  %v433 = vsel %vm425, %v408, %v410
  %v434 = vsel %vm425, %v410, %v412
  %v435 = vsel %vm425, %v412, %v414
  %v436 = vsel %vm425, %v414, %v416
  %v437 = vsel %vm425, %v416, %v418
  %v438 = vsel %vm425, %v418, %v420
  %v439 = vsel %vm425, %v420, %v422
  %v440 = vsel %vm425, %v422, %v424
  %456 = vst [vmem:[#allocation2 + $0x168] sm:$0xff] %v426
  %457 = vst [vmem:[#allocation2 + $0x170] sm:$0xff] %v427
  %458 = vst [vmem:[#allocation2 + $0x178] sm:$0xff] %v428
  %459 = vst [vmem:[#allocation2 + $0x180] sm:$0xff] %v429
  %460 = vst [vmem:[#allocation2 + $0x188] sm:$0xff] %v430
  %461 = vst [vmem:[#allocation2 + $0x190] sm:$0xff] %v431
  %462 = vst [vmem:[#allocation2 + $0x198] sm:$0xff] %v432
  %463 = vst [vmem:[#allocation2 + $0x1a0] sm:$0xff] %v433
  %464 = vst [vmem:[#allocation2 + $0x1a8] sm:$0xff] %v434
  %465 = vst [vmem:[#allocation2 + $0x1b0] sm:$0xff] %v435
  %466 = vst [vmem:[#allocation2 + $0x1b8] sm:$0xff] %v436
  %467 = vst [vmem:[#allocation2 + $0x1c0] sm:$0xff] %v437
  %468 = vst [vmem:[#allocation2 + $0x1c8] sm:$0xff] %v438
  %469 = vst [vmem:[#allocation2 + $0x1d0] sm:$0xff] %v439
  %470 = vst [vmem:[#allocation2 + $0x1d8] sm:$0xff] %v440
  %v471 = vld [vmem:[%s0] sm:$0xff]
  %v472 = vld [vmem:[%s0 + $0x8] sm:$0xff]
  %v473 = vld [vmem:[%s0 + $0x10] sm:$0xff]
  %v474 = vld [vmem:[%s0 + $0x18] sm:$0xff]
  %v475 = vld [vmem:[%s0 + $0x20] sm:$0xff]
  %v476 = vld [vmem:[%s0 + $0x28] sm:$0xff]
  %v477 = vld [vmem:[%s0 + $0x30] sm:$0xff]
  %v478 = vld [vmem:[%s0 + $0x38] sm:$0xff]
  %v479 = vld [vmem:[%s0 + $0x40] sm:$0xff]
  %v480 = vld [vmem:[%s0 + $0x48] sm:$0xff]
  %v481 = vld [vmem:[%s0 + $0x50] sm:$0xff]
  %v482 = vld [vmem:[%s0 + $0x58] sm:$0xff]
  %v483 = vld [vmem:[%s0 + $0x60] sm:$0xff]
  %v484 = vld [vmem:[%s0 + $0x68] sm:$0xff]
  %v485 = vld [vmem:[%s0 + $0x70] sm:$0xff]
  %v486 = vld [vmem:[%s0 + $0x78] sm:$0xff]
  %503 = vrot.lane.b32.xlu0 %v471, 1
  %v504 = vpop.permute.xlu0 %503
  %505 = vrot.lane.b32.xlu0 %v472, 1
  %v506 = vpop.permute.xlu0 %505
  %507 = vrot.lane.b32.xlu0 %v473, 1
  %v508 = vpop.permute.xlu0 %507
  %509 = vrot.lane.b32.xlu0 %v474, 1
  %v510 = vpop.permute.xlu0 %509
  %511 = vrot.lane.b32.xlu0 %v475, 1
  %v512 = vpop.permute.xlu0 %511
  %513 = vrot.lane.b32.xlu0 %v476, 1
  %v514 = vpop.permute.xlu0 %513
  %515 = vrot.lane.b32.xlu0 %v477, 1
  %v516 = vpop.permute.xlu0 %515
  %517 = vrot.lane.b32.xlu0 %v478, 1
  %v518 = vpop.permute.xlu0 %517
  %519 = vrot.lane.b32.xlu0 %v479, 1
  %v520 = vpop.permute.xlu0 %519
  %521 = vrot.lane.b32.xlu0 %v480, 1
  %v522 = vpop.permute.xlu0 %521
  %523 = vrot.lane.b32.xlu0 %v481, 1
  %v524 = vpop.permute.xlu0 %523
  %525 = vrot.lane.b32.xlu0 %v482, 1
  %v526 = vpop.permute.xlu0 %525
  %527 = vrot.lane.b32.xlu0 %v483, 1
  %v528 = vpop.permute.xlu0 %527
  %529 = vrot.lane.b32.xlu0 %v484, 1
  %v530 = vpop.permute.xlu0 %529
  %531 = vrot.lane.b32.xlu0 %v485, 1
  %v532 = vpop.permute.xlu0 %531
  %533 = vrot.lane.b32.xlu0 %v486, 1
  %v534 = vpop.permute.xlu0 %533
  %vm535 = vcmask 7168
  %v536 = vsel %vm535, %v504, %v506
  %v537 = vsel %vm535, %v506, %v508
  %v538 = vsel %vm535, %v508, %v510
  %v539 = vsel %vm535, %v510, %v512
  %v540 = vsel %vm535, %v512, %v514
  %v541 = vsel %vm535, %v514, %v516
  %v542 = vsel %vm535, %v516, %v518
  %v543 = vsel %vm535, %v518, %v520
  %v544 = vsel %vm535, %v520, %v522
  %v545 = vsel %vm535, %v522, %v524
  %v546 = vsel %vm535, %v524, %v526
  %v547 = vsel %vm535, %v526, %v528
  %v548 = vsel %vm535, %v528, %v530
  %v549 = vsel %vm535, %v530, %v532
  %v550 = vsel %vm535, %v532, %v534
  %566 = vst [vmem:[#allocation2 + $0x1e0] sm:$0xff] %v536
  %567 = vst [vmem:[#allocation2 + $0x1e8] sm:$0xff] %v537
  %568 = vst [vmem:[#allocation2 + $0x1f0] sm:$0xff] %v538
  %569 = vst [vmem:[#allocation2 + $0x1f8] sm:$0xff] %v539
  %570 = vst [vmem:[#allocation2 + $0x200] sm:$0xff] %v540
  %571 = vst [vmem:[#allocation2 + $0x208] sm:$0xff] %v541
  %572 = vst [vmem:[#allocation2 + $0x210] sm:$0xff] %v542
  %573 = vst [vmem:[#allocation2 + $0x218] sm:$0xff] %v543
  %574 = vst [vmem:[#allocation2 + $0x220] sm:$0xff] %v544
  %575 = vst [vmem:[#allocation2 + $0x228] sm:$0xff] %v545
  %576 = vst [vmem:[#allocation2 + $0x230] sm:$0xff] %v546
  %577 = vst [vmem:[#allocation2 + $0x238] sm:$0xff] %v547
  %578 = vst [vmem:[#allocation2 + $0x240] sm:$0xff] %v548
  %579 = vst [vmem:[#allocation2 + $0x248] sm:$0xff] %v549
  %580 = vst [vmem:[#allocation2 + $0x250] sm:$0xff] %v550
  %v581 = vld [vmem:[%s0 + $0x8] sm:$0xff]
  %v582 = vld [vmem:[%s0 + $0x10] sm:$0xff]
  %v583 = vld [vmem:[%s0 + $0x18] sm:$0xff]
  %v584 = vld [vmem:[%s0 + $0x20] sm:$0xff]
  %v585 = vld [vmem:[%s0 + $0x28] sm:$0xff]
  %v586 = vld [vmem:[%s0 + $0x30] sm:$0xff]
  %v587 = vld [vmem:[%s0 + $0x38] sm:$0xff]
  %v588 = vld [vmem:[%s0 + $0x40] sm:$0xff]
  %v589 = vld [vmem:[%s0 + $0x48] sm:$0xff]
  %v590 = vld [vmem:[%s0 + $0x50] sm:$0xff]
  %v591 = vld [vmem:[%s0 + $0x58] sm:$0xff]
  %v592 = vld [vmem:[%s0 + $0x60] sm:$0xff]
  %v593 = vld [vmem:[%s0 + $0x68] sm:$0xff]
  %v594 = vld [vmem:[%s0 + $0x70] sm:$0xff]
  %v595 = vld [vmem:[%s0 + $0x78] sm:$0xff]
  %v596 = vld [vmem:[%s0 + $0x80] sm:$0xff]
  %613 = vrot.lane.b32.xlu0 %v581, 119
  %v614 = vpop.permute.xlu0 %613
  %615 = vrot.lane.b32.xlu0 %v582, 119
  %v616 = vpop.permute.xlu0 %615
  %617 = vrot.lane.b32.xlu0 %v583, 119
  %v618 = vpop.permute.xlu0 %617
  %619 = vrot.lane.b32.xlu0 %v584, 119
  %v620 = vpop.permute.xlu0 %619
  %621 = vrot.lane.b32.xlu0 %v585, 119
  %v622 = vpop.permute.xlu0 %621
  %623 = vrot.lane.b32.xlu0 %v586, 119
  %v624 = vpop.permute.xlu0 %623
  %625 = vrot.lane.b32.xlu0 %v587, 119
  %v626 = vpop.permute.xlu0 %625
  %627 = vrot.lane.b32.xlu0 %v588, 119
  %v628 = vpop.permute.xlu0 %627
  %629 = vrot.lane.b32.xlu0 %v589, 119
  %v630 = vpop.permute.xlu0 %629
  %631 = vrot.lane.b32.xlu0 %v590, 119
  %v632 = vpop.permute.xlu0 %631
  %633 = vrot.lane.b32.xlu0 %v591, 119
  %v634 = vpop.permute.xlu0 %633
  %635 = vrot.lane.b32.xlu0 %v592, 119
  %v636 = vpop.permute.xlu0 %635
  %637 = vrot.lane.b32.xlu0 %v593, 119
  %v638 = vpop.permute.xlu0 %637
  %639 = vrot.lane.b32.xlu0 %v594, 119
  %v640 = vpop.permute.xlu0 %639
  %641 = vrot.lane.b32.xlu0 %v595, 119
  %v642 = vpop.permute.xlu0 %641
  %643 = vrot.lane.b32.xlu0 %v596, 119
  %v644 = vpop.permute.xlu0 %643
  %vm645 = vcmask 973824
  %v646 = vsel %vm645, %v614, %v616
  %v647 = vsel %vm645, %v616, %v618
  %v648 = vsel %vm645, %v618, %v620
  %v649 = vsel %vm645, %v620, %v622
  %v650 = vsel %vm645, %v622, %v624
  %v651 = vsel %vm645, %v624, %v626
  %v652 = vsel %vm645, %v626, %v628
  %v653 = vsel %vm645, %v628, %v630
  %v654 = vsel %vm645, %v630, %v632
  %v655 = vsel %vm645, %v632, %v634
  %v656 = vsel %vm645, %v634, %v636
  %v657 = vsel %vm645, %v636, %v638
  %v658 = vsel %vm645, %v638, %v640
  %v659 = vsel %vm645, %v640, %v642
  %v660 = vsel %vm645, %v642, %v644
  %676 = vst [vmem:[#allocation2 + $0x258] sm:$0xff] %v646
  %677 = vst [vmem:[#allocation2 + $0x260] sm:$0xff] %v647
  %678 = vst [vmem:[#allocation2 + $0x268] sm:$0xff] %v648
  %679 = vst [vmem:[#allocation2 + $0x270] sm:$0xff] %v649
  %680 = vst [vmem:[#allocation2 + $0x278] sm:$0xff] %v650
  %681 = vst [vmem:[#allocation2 + $0x280] sm:$0xff] %v651
  %682 = vst [vmem:[#allocation2 + $0x288] sm:$0xff] %v652
  %683 = vst [vmem:[#allocation2 + $0x290] sm:$0xff] %v653
  %684 = vst [vmem:[#allocation2 + $0x298] sm:$0xff] %v654
  %685 = vst [vmem:[#allocation2 + $0x2a0] sm:$0xff] %v655
  %686 = vst [vmem:[#allocation2 + $0x2a8] sm:$0xff] %v656
  %687 = vst [vmem:[#allocation2 + $0x2b0] sm:$0xff] %v657
  %688 = vst [vmem:[#allocation2 + $0x2b8] sm:$0xff] %v658
  %689 = vst [vmem:[#allocation2 + $0x2c0] sm:$0xff] %v659
  %690 = vst [vmem:[#allocation2 + $0x2c8] sm:$0xff] %v660
  %v691 = vld [vmem:[%s0 + $0x8] sm:$0xff]
  %v692 = vld [vmem:[%s0 + $0x10] sm:$0xff]
  %v693 = vld [vmem:[%s0 + $0x18] sm:$0xff]
  %v694 = vld [vmem:[%s0 + $0x20] sm:$0xff]
  %v695 = vld [vmem:[%s0 + $0x28] sm:$0xff]
  %v696 = vld [vmem:[%s0 + $0x30] sm:$0xff]
  %v697 = vld [vmem:[%s0 + $0x38] sm:$0xff]
  %v698 = vld [vmem:[%s0 + $0x40] sm:$0xff]
  %v699 = vld [vmem:[%s0 + $0x48] sm:$0xff]
  %v700 = vld [vmem:[%s0 + $0x50] sm:$0xff]
  %v701 = vld [vmem:[%s0 + $0x58] sm:$0xff]
  %v702 = vld [vmem:[%s0 + $0x60] sm:$0xff]
  %v703 = vld [vmem:[%s0 + $0x68] sm:$0xff]
  %v704 = vld [vmem:[%s0 + $0x70] sm:$0xff]
  %v705 = vld [vmem:[%s0 + $0x78] sm:$0xff]
  %v706 = vld [vmem:[%s0 + $0x80] sm:$0xff]
  %723 = vrot.lane.b32.xlu0 %v691, 39
  %v724 = vpop.permute.xlu0 %723
  %725 = vrot.lane.b32.xlu0 %v692, 39
  %v726 = vpop.permute.xlu0 %725
  %727 = vrot.lane.b32.xlu0 %v693, 39
  %v728 = vpop.permute.xlu0 %727
  %729 = vrot.lane.b32.xlu0 %v694, 39
  %v730 = vpop.permute.xlu0 %729
  %731 = vrot.lane.b32.xlu0 %v695, 39
  %v732 = vpop.permute.xlu0 %731
  %733 = vrot.lane.b32.xlu0 %v696, 39
  %v734 = vpop.permute.xlu0 %733
  %735 = vrot.lane.b32.xlu0 %v697, 39
  %v736 = vpop.permute.xlu0 %735
  %737 = vrot.lane.b32.xlu0 %v698, 39
  %v738 = vpop.permute.xlu0 %737
  %739 = vrot.lane.b32.xlu0 %v699, 39
  %v740 = vpop.permute.xlu0 %739
  %741 = vrot.lane.b32.xlu0 %v700, 39
  %v742 = vpop.permute.xlu0 %741
  %743 = vrot.lane.b32.xlu0 %v701, 39
  %v744 = vpop.permute.xlu0 %743
  %745 = vrot.lane.b32.xlu0 %v702, 39
  %v746 = vpop.permute.xlu0 %745
  %747 = vrot.lane.b32.xlu0 %v703, 39
  %v748 = vpop.permute.xlu0 %747
  %749 = vrot.lane.b32.xlu0 %v704, 39
  %v750 = vpop.permute.xlu0 %749
  %751 = vrot.lane.b32.xlu0 %v705, 39
  %v752 = vpop.permute.xlu0 %751
  %753 = vrot.lane.b32.xlu0 %v706, 39
  %v754 = vpop.permute.xlu0 %753
  %vm755 = vcmask 318464
  %v756 = vsel %vm755, %v724, %v726
  %v757 = vsel %vm755, %v726, %v728
  %v758 = vsel %vm755, %v728, %v730
  %v759 = vsel %vm755, %v730, %v732
  %v760 = vsel %vm755, %v732, %v734
  %v761 = vsel %vm755, %v734, %v736
  %v762 = vsel %vm755, %v736, %v738
  %v763 = vsel %vm755, %v738, %v740
  %v764 = vsel %vm755, %v740, %v742
  %v765 = vsel %vm755, %v742, %v744
  %v766 = vsel %vm755, %v744, %v746
  %v767 = vsel %vm755, %v746, %v748
  %v768 = vsel %vm755, %v748, %v750
  %v769 = vsel %vm755, %v750, %v752
  %v770 = vsel %vm755, %v752, %v754
  %786 = vst [vmem:[#allocation2 + $0x2d0] sm:$0xff] %v756
  %787 = vst [vmem:[#allocation2 + $0x2d8] sm:$0xff] %v757
  %788 = vst [vmem:[#allocation2 + $0x2e0] sm:$0xff] %v758
  %789 = vst [vmem:[#allocation2 + $0x2e8] sm:$0xff] %v759
  %790 = vst [vmem:[#allocation2 + $0x2f0] sm:$0xff] %v760
  %791 = vst [vmem:[#allocation2 + $0x2f8] sm:$0xff] %v761
  %792 = vst [vmem:[#allocation2 + $0x300] sm:$0xff] %v762
  %793 = vst [vmem:[#allocation2 + $0x308] sm:$0xff] %v763
  %794 = vst [vmem:[#allocation2 + $0x310] sm:$0xff] %v764
  %795 = vst [vmem:[#allocation2 + $0x318] sm:$0xff] %v765
  %796 = vst [vmem:[#allocation2 + $0x320] sm:$0xff] %v766
  %797 = vst [vmem:[#allocation2 + $0x328] sm:$0xff] %v767
  %798 = vst [vmem:[#allocation2 + $0x330] sm:$0xff] %v768
  %799 = vst [vmem:[#allocation2 + $0x338] sm:$0xff] %v769
  %800 = vst [vmem:[#allocation2 + $0x340] sm:$0xff] %v770
  %v801 = vld [vmem:[%s0 + $0x8] sm:$0xff]
  %v802 = vld [vmem:[%s0 + $0x10] sm:$0xff]
  %v803 = vld [vmem:[%s0 + $0x18] sm:$0xff]
  %v804 = vld [vmem:[%s0 + $0x20] sm:$0xff]
  %v805 = vld [vmem:[%s0 + $0x28] sm:$0xff]
  %v806 = vld [vmem:[%s0 + $0x30] sm:$0xff]
  %v807 = vld [vmem:[%s0 + $0x38] sm:$0xff]
  %v808 = vld [vmem:[%s0 + $0x40] sm:$0xff]
  %v809 = vld [vmem:[%s0 + $0x48] sm:$0xff]
  %v810 = vld [vmem:[%s0 + $0x50] sm:$0xff]
  %v811 = vld [vmem:[%s0 + $0x58] sm:$0xff]
  %v812 = vld [vmem:[%s0 + $0x60] sm:$0xff]
  %v813 = vld [vmem:[%s0 + $0x68] sm:$0xff]
  %v814 = vld [vmem:[%s0 + $0x70] sm:$0xff]
  %v815 = vld [vmem:[%s0 + $0x78] sm:$0xff]
  %v816 = vld [vmem:[%s0 + $0x80] sm:$0xff]
  %833 = vrot.lane.b32.xlu0 %v801, 29
  %v834 = vpop.permute.xlu0 %833
  %835 = vrot.lane.b32.xlu0 %v802, 29
  %v836 = vpop.permute.xlu0 %835
  %837 = vrot.lane.b32.xlu0 %v803, 29
  %v838 = vpop.permute.xlu0 %837
  %839 = vrot.lane.b32.xlu0 %v804, 29
  %v840 = vpop.permute.xlu0 %839
  %841 = vrot.lane.b32.xlu0 %v805, 29
  %v842 = vpop.permute.xlu0 %841
  %843 = vrot.lane.b32.xlu0 %v806, 29
  %v844 = vpop.permute.xlu0 %843
  %845 = vrot.lane.b32.xlu0 %v807, 29
  %v846 = vpop.permute.xlu0 %845
  %847 = vrot.lane.b32.xlu0 %v808, 29
  %v848 = vpop.permute.xlu0 %847
  %849 = vrot.lane.b32.xlu0 %v809, 29
  %v850 = vpop.permute.xlu0 %849
  %851 = vrot.lane.b32.xlu0 %v810, 29
  %v852 = vpop.permute.xlu0 %851
  %853 = vrot.lane.b32.xlu0 %v811, 29
  %v854 = vpop.permute.xlu0 %853
  %855 = vrot.lane.b32.xlu0 %v812, 29
  %v856 = vpop.permute.xlu0 %855
  %857 = vrot.lane.b32.xlu0 %v813, 29
  %v858 = vpop.permute.xlu0 %857
  %859 = vrot.lane.b32.xlu0 %v814, 29
  %v860 = vpop.permute.xlu0 %859
  %861 = vrot.lane.b32.xlu0 %v815, 29
  %v862 = vpop.permute.xlu0 %861
  %863 = vrot.lane.b32.xlu0 %v816, 29
  %v864 = vpop.permute.xlu0 %863
  %vm865 = vcmask 236544
  %v866 = vsel %vm865, %v834, %v836
  %v867 = vsel %vm865, %v836, %v838
  %v868 = vsel %vm865, %v838, %v840
  %v869 = vsel %vm865, %v840, %v842
  %v870 = vsel %vm865, %v842, %v844
  %v871 = vsel %vm865, %v844, %v846
  %v872 = vsel %vm865, %v846, %v848
  %v873 = vsel %vm865, %v848, %v850
  %v874 = vsel %vm865, %v850, %v852
  %v875 = vsel %vm865, %v852, %v854
  %v876 = vsel %vm865, %v854, %v856
  %v877 = vsel %vm865, %v856, %v858
  %v878 = vsel %vm865, %v858, %v860
  %v879 = vsel %vm865, %v860, %v862
  %v880 = vsel %vm865, %v862, %v864
  %896 = vst [vmem:[#allocation2 + $0x348] sm:$0xff] %v866
  %897 = vst [vmem:[#allocation2 + $0x350] sm:$0xff] %v867
  %898 = vst [vmem:[#allocation2 + $0x358] sm:$0xff] %v868
  %899 = vst [vmem:[#allocation2 + $0x360] sm:$0xff] %v869
  %900 = vst [vmem:[#allocation2 + $0x368] sm:$0xff] %v870
  %901 = vst [vmem:[#allocation2 + $0x370] sm:$0xff] %v871
  %902 = vst [vmem:[#allocation2 + $0x378] sm:$0xff] %v872
  %903 = vst [vmem:[#allocation2 + $0x380] sm:$0xff] %v873
  %904 = vst [vmem:[#allocation2 + $0x388] sm:$0xff] %v874
  %905 = vst [vmem:[#allocation2 + $0x390] sm:$0xff] %v875
  %906 = vst [vmem:[#allocation2 + $0x398] sm:$0xff] %v876
  %907 = vst [vmem:[#allocation2 + $0x3a0] sm:$0xff] %v877
  %908 = vst [vmem:[#allocation2 + $0x3a8] sm:$0xff] %v878
  %909 = vst [vmem:[#allocation2 + $0x3b0] sm:$0xff] %v879
  %910 = vst [vmem:[#allocation2 + $0x3b8] sm:$0xff] %v880
  %v911 = vld [vmem:[%s0 + $0x8] sm:$0xff]
  %v912 = vld [vmem:[%s0 + $0x10] sm:$0xff]
  %v913 = vld [vmem:[%s0 + $0x18] sm:$0xff]
  %v914 = vld [vmem:[%s0 + $0x20] sm:$0xff]
  %v915 = vld [vmem:[%s0 + $0x28] sm:$0xff]
  %v916 = vld [vmem:[%s0 + $0x30] sm:$0xff]
  %v917 = vld [vmem:[%s0 + $0x38] sm:$0xff]
  %v918 = vld [vmem:[%s0 + $0x40] sm:$0xff]
  %v919 = vld [vmem:[%s0 + $0x48] sm:$0xff]
  %v920 = vld [vmem:[%s0 + $0x50] sm:$0xff]
  %v921 = vld [vmem:[%s0 + $0x58] sm:$0xff]
  %v922 = vld [vmem:[%s0 + $0x60] sm:$0xff]
  %v923 = vld [vmem:[%s0 + $0x68] sm:$0xff]
  %v924 = vld [vmem:[%s0 + $0x70] sm:$0xff]
  %v925 = vld [vmem:[%s0 + $0x78] sm:$0xff]
  %v926 = vld [vmem:[%s0 + $0x80] sm:$0xff]
  %943 = vrot.lane.b32.xlu0 %v911, 19
  %v944 = vpop.permute.xlu0 %943
  %945 = vrot.lane.b32.xlu0 %v912, 19
  %v946 = vpop.permute.xlu0 %945
  %947 = vrot.lane.b32.xlu0 %v913, 19
  %v948 = vpop.permute.xlu0 %947
  %949 = vrot.lane.b32.xlu0 %v914, 19
  %v950 = vpop.permute.xlu0 %949
  %951 = vrot.lane.b32.xlu0 %v915, 19
  %v952 = vpop.permute.xlu0 %951
  %953 = vrot.lane.b32.xlu0 %v916, 19
  %v954 = vpop.permute.xlu0 %953
  %955 = vrot.lane.b32.xlu0 %v917, 19
  %v956 = vpop.permute.xlu0 %955
  %957 = vrot.lane.b32.xlu0 %v918, 19
  %v958 = vpop.permute.xlu0 %957
  %959 = vrot.lane.b32.xlu0 %v919, 19
  %v960 = vpop.permute.xlu0 %959
  %961 = vrot.lane.b32.xlu0 %v920, 19
  %v962 = vpop.permute.xlu0 %961
  %963 = vrot.lane.b32.xlu0 %v921, 19
  %v964 = vpop.permute.xlu0 %963
  %965 = vrot.lane.b32.xlu0 %v922, 19
  %v966 = vpop.permute.xlu0 %965
  %967 = vrot.lane.b32.xlu0 %v923, 19
  %v968 = vpop.permute.xlu0 %967
  %969 = vrot.lane.b32.xlu0 %v924, 19
  %v970 = vpop.permute.xlu0 %969
  %971 = vrot.lane.b32.xlu0 %v925, 19
  %v972 = vpop.permute.xlu0 %971
  %973 = vrot.lane.b32.xlu0 %v926, 19
  %v974 = vpop.permute.xlu0 %973
  %vm975 = vcmask 154624
  %v976 = vsel %vm975, %v944, %v946
  %v977 = vsel %vm975, %v946, %v948
  %v978 = vsel %vm975, %v948, %v950
  %v979 = vsel %vm975, %v950, %v952
  %v980 = vsel %vm975, %v952, %v954
  %v981 = vsel %vm975, %v954, %v956
  %v982 = vsel %vm975, %v956, %v958
  %v983 = vsel %vm975, %v958, %v960
  %v984 = vsel %vm975, %v960, %v962
  %v985 = vsel %vm975, %v962, %v964
  %v986 = vsel %vm975, %v964, %v966
  %v987 = vsel %vm975, %v966, %v968
  %v988 = vsel %vm975, %v968, %v970
  %v989 = vsel %vm975, %v970, %v972
  %v990 = vsel %vm975, %v972, %v974
  %1006 = vst [vmem:[#allocation2 + $0x3c0] sm:$0xff] %v976
  %1007 = vst [vmem:[#allocation2 + $0x3c8] sm:$0xff] %v977
  %1008 = vst [vmem:[#allocation2 + $0x3d0] sm:$0xff] %v978
  %1009 = vst [vmem:[#allocation2 + $0x3d8] sm:$0xff] %v979
  %1010 = vst [vmem:[#allocation2 + $0x3e0] sm:$0xff] %v980
  %1011 = vst [vmem:[#allocation2 + $0x3e8] sm:$0xff] %v981
  %1012 = vst [vmem:[#allocation2 + $0x3f0] sm:$0xff] %v982
  %1013 = vst [vmem:[#allocation2 + $0x3f8] sm:$0xff] %v983
  %1014 = vst [vmem:[#allocation2 + $0x400] sm:$0xff] %v984
  %1015 = vst [vmem:[#allocation2 + $0x408] sm:$0xff] %v985
  %1016 = vst [vmem:[#allocation2 + $0x410] sm:$0xff] %v986
  %1017 = vst [vmem:[#allocation2 + $0x418] sm:$0xff] %v987
  %1018 = vst [vmem:[#allocation2 + $0x420] sm:$0xff] %v988
  %1019 = vst [vmem:[#allocation2 + $0x428] sm:$0xff] %v989
  %1020 = vst [vmem:[#allocation2 + $0x430] sm:$0xff] %v990
  %v1021 = vld [vmem:[%s2] sm:$0xff]
  %v1022 = vld [vmem:[%s2 + $0x8] sm:$0xff]
  %v1023 = vld [vmem:[%s2 + $0x10] sm:$0xff]
  %v1024 = vld [vmem:[#allocation2] sm:$0xff]
  %v1025 = vld [vmem:[#allocation2 + $0x8] sm:$0xff]
  %v1026 = vld [vmem:[#allocation2 + $0x10] sm:$0xff]
  %v1027 = vld [vmem:[#allocation2 + $0x18] sm:$0xff]
  %v1028 = vld [vmem:[#allocation2 + $0x20] sm:$0xff]
  %v1029 = vld [vmem:[#allocation2 + $0x28] sm:$0xff]
  %v1030 = vld [vmem:[#allocation2 + $0x30] sm:$0xff]
  %v1031 = vld [vmem:[#allocation2 + $0x38] sm:$0xff]
  %v1032 = vld [vmem:[#allocation2 + $0x40] sm:$0xff]
  %v1033 = vld [vmem:[#allocation2 + $0x48] sm:$0xff]
  %v1034 = vld [vmem:[#allocation2 + $0x50] sm:$0xff]
  %v1035 = vld [vmem:[#allocation2 + $0x58] sm:$0xff]
  %v1036 = vld [vmem:[#allocation2 + $0x60] sm:$0xff]
  %v1037 = vld [vmem:[#allocation2 + $0x68] sm:$0xff]
  %v1038 = vld [vmem:[#allocation2 + $0x70] sm:$0xff]
  %v1039 = vld [vmem:[#allocation2 + $0x78] sm:$0xff]
  %v1040 = vld [vmem:[#allocation2 + $0x80] sm:$0xff]
  %v1041 = vld [vmem:[#allocation2 + $0x88] sm:$0xff]
  %v1042 = vld [vmem:[#allocation2 + $0x90] sm:$0xff]
  %v1043 = vld [vmem:[#allocation2 + $0x98] sm:$0xff]
  %v1044 = vld [vmem:[#allocation2 + $0xa0] sm:$0xff]
  %v1045 = vld [vmem:[#allocation2 + $0xa8] sm:$0xff]
  %v1046 = vld [vmem:[#allocation2 + $0xb0] sm:$0xff]
  %v1047 = vld [vmem:[#allocation2 + $0xb8] sm:$0xff]
  %v1048 = vld [vmem:[#allocation2 + $0xc0] sm:$0xff]
  %v1049 = vld [vmem:[#allocation2 + $0xc8] sm:$0xff]
  %v1050 = vld [vmem:[#allocation2 + $0xd0] sm:$0xff]
  %v1051 = vld [vmem:[#allocation2 + $0xd8] sm:$0xff]
  %v1052 = vld [vmem:[#allocation2 + $0xe0] sm:$0xff]
  %v1053 = vld [vmem:[#allocation2 + $0xe8] sm:$0xff]
  %v1054 = vld [vmem:[#allocation2 + $0xf0] sm:$0xff]
  %v1055 = vld [vmem:[#allocation2 + $0xf8] sm:$0xff]
  %v1056 = vld [vmem:[#allocation2 + $0x100] sm:$0xff]
  %v1057 = vld [vmem:[#allocation2 + $0x108] sm:$0xff]
  %v1058 = vld [vmem:[#allocation2 + $0x110] sm:$0xff]
  %v1059 = vld [vmem:[#allocation2 + $0x118] sm:$0xff]
  %v1060 = vld [vmem:[#allocation2 + $0x120] sm:$0xff]
  %v1061 = vld [vmem:[#allocation2 + $0x128] sm:$0xff]
  %v1062 = vld [vmem:[#allocation2 + $0x130] sm:$0xff]
  %v1063 = vld [vmem:[#allocation2 + $0x138] sm:$0xff]
  %v1064 = vld [vmem:[#allocation2 + $0x140] sm:$0xff]
  %v1065 = vld [vmem:[#allocation2 + $0x148] sm:$0xff]
  %v1066 = vld [vmem:[#allocation2 + $0x150] sm:$0xff]
  %v1067 = vld [vmem:[#allocation2 + $0x158] sm:$0xff]
  %v1068 = vld [vmem:[#allocation2 + $0x160] sm:$0xff]
  %v1069 = vld [vmem:[#allocation2 + $0x168] sm:$0xff]
  %v1070 = vld [vmem:[#allocation2 + $0x170] sm:$0xff]
  %v1071 = vld [vmem:[#allocation2 + $0x178] sm:$0xff]
  %v1072 = vld [vmem:[#allocation2 + $0x180] sm:$0xff]
  %v1073 = vld [vmem:[#allocation2 + $0x188] sm:$0xff]
  %v1074 = vld [vmem:[#allocation2 + $0x190] sm:$0xff]
  %v1075 = vld [vmem:[#allocation2 + $0x198] sm:$0xff]
  %v1076 = vld [vmem:[#allocation2 + $0x1a0] sm:$0xff]
  %v1077 = vld [vmem:[#allocation2 + $0x1a8] sm:$0xff]
  %v1078 = vld [vmem:[#allocation2 + $0x1b0] sm:$0xff]
  %v1079 = vld [vmem:[#allocation2 + $0x1b8] sm:$0xff]
  %v1080 = vld [vmem:[#allocation2 + $0x1c0] sm:$0xff]
  %v1081 = vld [vmem:[#allocation2 + $0x1c8] sm:$0xff]
  %v1082 = vld [vmem:[#allocation2 + $0x1d0] sm:$0xff]
  %v1083 = vld [vmem:[#allocation2 + $0x1d8] sm:$0xff]
  %v1084 = vld [vmem:[#allocation2 + $0x1e0] sm:$0xff]
  %v1085 = vld [vmem:[#allocation2 + $0x1e8] sm:$0xff]
  %v1086 = vld [vmem:[#allocation2 + $0x1f0] sm:$0xff]
  %v1087 = vld [vmem:[#allocation2 + $0x1f8] sm:$0xff]
  %v1088 = vld [vmem:[#allocation2 + $0x200] sm:$0xff]
  %v1089 = vld [vmem:[#allocation2 + $0x208] sm:$0xff]
  %v1090 = vld [vmem:[#allocation2 + $0x210] sm:$0xff]
  %v1091 = vld [vmem:[#allocation2 + $0x218] sm:$0xff]
  %v1092 = vld [vmem:[#allocation2 + $0x220] sm:$0xff]
  %v1093 = vld [vmem:[#allocation2 + $0x228] sm:$0xff]
  %v1094 = vld [vmem:[#allocation2 + $0x230] sm:$0xff]
  %v1095 = vld [vmem:[#allocation2 + $0x238] sm:$0xff]
  %v1096 = vld [vmem:[#allocation2 + $0x240] sm:$0xff]
  %v1097 = vld [vmem:[#allocation2 + $0x248] sm:$0xff]
  %v1098 = vld [vmem:[#allocation2 + $0x250] sm:$0xff]
  %v1099 = vld [vmem:[#allocation2 + $0x258] sm:$0xff]
  %v1100 = vld [vmem:[#allocation2 + $0x260] sm:$0xff]
  %v1101 = vld [vmem:[#allocation2 + $0x268] sm:$0xff]
  %v1102 = vld [vmem:[#allocation2 + $0x270] sm:$0xff]
  %v1103 = vld [vmem:[#allocation2 + $0x278] sm:$0xff]
  %v1104 = vld [vmem:[#allocation2 + $0x280] sm:$0xff]
  %v1105 = vld [vmem:[#allocation2 + $0x288] sm:$0xff]
  %v1106 = vld [vmem:[#allocation2 + $0x290] sm:$0xff]
  %v1107 = vld [vmem:[#allocation2 + $0x298] sm:$0xff]
  %v1108 = vld [vmem:[#allocation2 + $0x2a0] sm:$0xff]
  %v1109 = vld [vmem:[#allocation2 + $0x2a8] sm:$0xff]
  %v1110 = vld [vmem:[#allocation2 + $0x2b0] sm:$0xff]
  %v1111 = vld [vmem:[#allocation2 + $0x2b8] sm:$0xff]
  %v1112 = vld [vmem:[#allocation2 + $0x2c0] sm:$0xff]
  %v1113 = vld [vmem:[#allocation2 + $0x2c8] sm:$0xff]
  %v1114 = vld [vmem:[#allocation2 + $0x2d0] sm:$0xff]
  %v1115 = vld [vmem:[#allocation2 + $0x2d8] sm:$0xff]
  %v1116 = vld [vmem:[#allocation2 + $0x2e0] sm:$0xff]
  %v1117 = vld [vmem:[#allocation2 + $0x2e8] sm:$0xff]
  %v1118 = vld [vmem:[#allocation2 + $0x2f0] sm:$0xff]
  %v1119 = vld [vmem:[#allocation2 + $0x2f8] sm:$0xff]
  %v1120 = vld [vmem:[#allocation2 + $0x300] sm:$0xff]
  %v1121 = vld [vmem:[#allocation2 + $0x308] sm:$0xff]
  %v1122 = vld [vmem:[#allocation2 + $0x310] sm:$0xff]
  %v1123 = vld [vmem:[#allocation2 + $0x318] sm:$0xff]
  %v1124 = vld [vmem:[#allocation2 + $0x320] sm:$0xff]
  %v1125 = vld [vmem:[#allocation2 + $0x328] sm:$0xff]
  %v1126 = vld [vmem:[#allocation2 + $0x330] sm:$0xff]
  %v1127 = vld [vmem:[#allocation2 + $0x338] sm:$0xff]
  %v1128 = vld [vmem:[#allocation2 + $0x340] sm:$0xff]
  %v1129 = vld [vmem:[#allocation2 + $0x348] sm:$0xff]
  %v1130 = vld [vmem:[#allocation2 + $0x350] sm:$0xff]
  %v1131 = vld [vmem:[#allocation2 + $0x358] sm:$0xff]
  %v1132 = vld [vmem:[#allocation2 + $0x360] sm:$0xff]
  %v1133 = vld [vmem:[#allocation2 + $0x368] sm:$0xff]
  %v1134 = vld [vmem:[#allocation2 + $0x370] sm:$0xff]
  %v1135 = vld [vmem:[#allocation2 + $0x378] sm:$0xff]
  %v1136 = vld [vmem:[#allocation2 + $0x380] sm:$0xff]
  %v1137 = vld [vmem:[#allocation2 + $0x388] sm:$0xff]
  %v1138 = vld [vmem:[#allocation2 + $0x390] sm:$0xff]
  %v1139 = vld [vmem:[#allocation2 + $0x398] sm:$0xff]
  %v1140 = vld [vmem:[#allocation2 + $0x3a0] sm:$0xff]
  %v1141 = vld [vmem:[#allocation2 + $0x3a8] sm:$0xff]
  %v1142 = vld [vmem:[#allocation2 + $0x3b0] sm:$0xff]
  %v1143 = vld [vmem:[#allocation2 + $0x3b8] sm:$0xff]
  %v1144 = vld [vmem:[#allocation2 + $0x3c0] sm:$0xff]
  %v1145 = vld [vmem:[#allocation2 + $0x3c8] sm:$0xff]
  %v1146 = vld [vmem:[#allocation2 + $0x3d0] sm:$0xff]
  %v1147 = vld [vmem:[#allocation2 + $0x3d8] sm:$0xff]
  %v1148 = vld [vmem:[#allocation2 + $0x3e0] sm:$0xff]
  %v1149 = vld [vmem:[#allocation2 + $0x3e8] sm:$0xff]
  %v1150 = vld [vmem:[#allocation2 + $0x3f0] sm:$0xff]
  %v1151 = vld [vmem:[#allocation2 + $0x3f8] sm:$0xff]
  %v1152 = vld [vmem:[#allocation2 + $0x400] sm:$0xff]
  %v1153 = vld [vmem:[#allocation2 + $0x408] sm:$0xff]
  %v1154 = vld [vmem:[#allocation2 + $0x410] sm:$0xff]
  %v1155 = vld [vmem:[#allocation2 + $0x418] sm:$0xff]
  %v1156 = vld [vmem:[#allocation2 + $0x420] sm:$0xff]
  %v1157 = vld [vmem:[#allocation2 + $0x428] sm:$0xff]
  %v1158 = vld [vmem:[#allocation2 + $0x430] sm:$0xff]
  %vm1159 = vcmask 588800
  %v1161 = vsel %vm1159, %v1021, 0
  %v1164 = vsel %vm1159, %v1022, 0
  %v1167 = vsel %vm1159, %v1023, 0
  %1169 = vmatpush.msra.mxu0 0.0
  %1170 = vmatpush.msra.mxu0 0.0
  %1171 = vmatpush.msra.mxu0 0.0
  %1172 = vmatpush.msra.mxu0 0.0
  %1173 = vmatpush.msra.mxu0 0.0
  %1174 = vmatpush.msra.mxu0 0.0
  %1175 = vmatpush.msra.mxu0 0.0
  %1176 = vmatpush.msra.mxu0 %v1144
  %1177 = vmatpush.msra.mxu0 %v1129
  %1178 = vmatpush.msra.mxu0 %v1114
  %1179 = vmatpush.msra.mxu0 %v1099
  %1180 = vmatpush.msra.mxu0 %v1084
  %1181 = vmatpush.msra.mxu0 %v1069
  %1182 = vmatpush.msra.mxu0 %v1054
  %1183 = vmatpush.msra.mxu0 %v1039
  %1184 = vmatpush.msra.mxu0 %v1024
  %1185 = vmatmul.f32.gmra.mxu0 %v1161
  %v1186 = vpop.f32.mrf.mxu0
  %v1187 = vadd.f32 0.0, %v1186
  %1188 = vmatmul.f32.gmra.mxu0 %v1164
  %v1189 = vpop.f32.mrf.mxu0
  %v1190 = vadd.f32 0.0, %v1189
  %1191 = vmatmul.f32.gmra.mxu0 %v1167
  %v1192 = vpop.f32.mrf.mxu0
  %v1193 = vadd.f32 0.0, %v1192
  %1194 = vdwg.mxu0
  %1195 = vmatpush.msra.mxu0 0.0
  %1196 = vmatpush.msra.mxu0 0.0
  %1197 = vmatpush.msra.mxu0 0.0
  %1198 = vmatpush.msra.mxu0 0.0
  %1199 = vmatpush.msra.mxu0 0.0
  %1200 = vmatpush.msra.mxu0 0.0
  %1201 = vmatpush.msra.mxu0 0.0
  %1202 = vmatpush.msra.mxu0 %v1145
  %1203 = vmatpush.msra.mxu0 %v1130
  %1204 = vmatpush.msra.mxu0 %v1115
  %1205 = vmatpush.msra.mxu0 %v1100
  %1206 = vmatpush.msra.mxu0 %v1085
  %1207 = vmatpush.msra.mxu0 %v1070
  %1208 = vmatpush.msra.mxu0 %v1055
  %1209 = vmatpush.msra.mxu0 %v1040
  %1210 = vmatpush.msra.mxu0 %v1025
  %1211 = vmatmul.f32.gmra.mxu0 %v1161
  %v1212 = vpop.f32.mrf.mxu0
  %v1213 = vadd.f32 0.0, %v1212
  %1214 = vmatmul.f32.gmra.mxu0 %v1164
  %v1215 = vpop.f32.mrf.mxu0
  %v1216 = vadd.f32 0.0, %v1215
  %1217 = vmatmul.f32.gmra.mxu0 %v1167
  %v1218 = vpop.f32.mrf.mxu0
  %v1219 = vadd.f32 0.0, %v1218
  %1220 = vdwg.mxu0
  %1221 = vmatpush.msra.mxu0 0.0
  %1222 = vmatpush.msra.mxu0 0.0
  %1223 = vmatpush.msra.mxu0 0.0
  %1224 = vmatpush.msra.mxu0 0.0
  %1225 = vmatpush.msra.mxu0 0.0
  %1226 = vmatpush.msra.mxu0 0.0
  %1227 = vmatpush.msra.mxu0 0.0
  %1228 = vmatpush.msra.mxu0 %v1146
  %1229 = vmatpush.msra.mxu0 %v1131
  %1230 = vmatpush.msra.mxu0 %v1116
  %1231 = vmatpush.msra.mxu0 %v1101
  %1232 = vmatpush.msra.mxu0 %v1086
  %1233 = vmatpush.msra.mxu0 %v1071
  %1234 = vmatpush.msra.mxu0 %v1056
  %1235 = vmatpush.msra.mxu0 %v1041
  %1236 = vmatpush.msra.mxu0 %v1026
  %1237 = vmatmul.f32.gmra.mxu0 %v1161
  %v1238 = vpop.f32.mrf.mxu0
  %v1239 = vadd.f32 0.0, %v1238
  %1240 = vmatmul.f32.gmra.mxu0 %v1164
  %v1241 = vpop.f32.mrf.mxu0
  %v1242 = vadd.f32 0.0, %v1241
  %1243 = vmatmul.f32.gmra.mxu0 %v1167
  %v1244 = vpop.f32.mrf.mxu0
  %v1245 = vadd.f32 0.0, %v1244
  %1246 = vdwg.mxu0
  %1247 = vmatpush.msra.mxu0 0.0
  %1248 = vmatpush.msra.mxu0 0.0
  %1249 = vmatpush.msra.mxu0 0.0
  %1250 = vmatpush.msra.mxu0 0.0
  %1251 = vmatpush.msra.mxu0 0.0
  %1252 = vmatpush.msra.mxu0 0.0
  %1253 = vmatpush.msra.mxu0 0.0
  %1254 = vmatpush.msra.mxu0 %v1147
  %1255 = vmatpush.msra.mxu0 %v1132
  %1256 = vmatpush.msra.mxu0 %v1117
  %1257 = vmatpush.msra.mxu0 %v1102
  %1258 = vmatpush.msra.mxu0 %v1087
  %1259 = vmatpush.msra.mxu0 %v1072
  %1260 = vmatpush.msra.mxu0 %v1057
  %1261 = vmatpush.msra.mxu0 %v1042
  %1262 = vmatpush.msra.mxu0 %v1027
  %1263 = vmatmul.f32.gmra.mxu0 %v1161
  %v1264 = vpop.f32.mrf.mxu0
  %v1265 = vadd.f32 0.0, %v1264
  %1266 = vmatmul.f32.gmra.mxu0 %v1164
  %v1267 = vpop.f32.mrf.mxu0
  %v1268 = vadd.f32 0.0, %v1267
  %1269 = vmatmul.f32.gmra.mxu0 %v1167
  %v1270 = vpop.f32.mrf.mxu0
  %v1271 = vadd.f32 0.0, %v1270
  %1272 = vdwg.mxu0
  %1273 = vmatpush.msra.mxu0 0.0
  %1274 = vmatpush.msra.mxu0 0.0
  %1275 = vmatpush.msra.mxu0 0.0
  %1276 = vmatpush.msra.mxu0 0.0
  %1277 = vmatpush.msra.mxu0 0.0
  %1278 = vmatpush.msra.mxu0 0.0
  %1279 = vmatpush.msra.mxu0 0.0
  %1280 = vmatpush.msra.mxu0 %v1148
  %1281 = vmatpush.msra.mxu0 %v1133
  %1282 = vmatpush.msra.mxu0 %v1118
  %1283 = vmatpush.msra.mxu0 %v1103
  %1284 = vmatpush.msra.mxu0 %v1088
  %1285 = vmatpush.msra.mxu0 %v1073
  %1286 = vmatpush.msra.mxu0 %v1058
  %1287 = vmatpush.msra.mxu0 %v1043
  %1288 = vmatpush.msra.mxu0 %v1028
  %1289 = vmatmul.f32.gmra.mxu0 %v1161
  %v1290 = vpop.f32.mrf.mxu0
  %v1291 = vadd.f32 0.0, %v1290
  %1292 = vmatmul.f32.gmra.mxu0 %v1164
  %v1293 = vpop.f32.mrf.mxu0
  %v1294 = vadd.f32 0.0, %v1293
  %1295 = vmatmul.f32.gmra.mxu0 %v1167
  %v1296 = vpop.f32.mrf.mxu0
  %v1297 = vadd.f32 0.0, %v1296
  %1298 = vdwg.mxu0
  %1299 = vmatpush.msra.mxu0 0.0
  %1300 = vmatpush.msra.mxu0 0.0
  %1301 = vmatpush.msra.mxu0 0.0
  %1302 = vmatpush.msra.mxu0 0.0
  %1303 = vmatpush.msra.mxu0 0.0
  %1304 = vmatpush.msra.mxu0 0.0
  %1305 = vmatpush.msra.mxu0 0.0
  %1306 = vmatpush.msra.mxu0 %v1149
  %1307 = vmatpush.msra.mxu0 %v1134
  %1308 = vmatpush.msra.mxu0 %v1119
  %1309 = vmatpush.msra.mxu0 %v1104
  %1310 = vmatpush.msra.mxu0 %v1089
  %1311 = vmatpush.msra.mxu0 %v1074
  %1312 = vmatpush.msra.mxu0 %v1059
  %1313 = vmatpush.msra.mxu0 %v1044
  %1314 = vmatpush.msra.mxu0 %v1029
  %1315 = vmatmul.f32.gmra.mxu0 %v1161
  %v1316 = vpop.f32.mrf.mxu0
  %v1317 = vadd.f32 0.0, %v1316
  %1318 = vmatmul.f32.gmra.mxu0 %v1164
  %v1319 = vpop.f32.mrf.mxu0
  %v1320 = vadd.f32 0.0, %v1319
  %1321 = vmatmul.f32.gmra.mxu0 %v1167
  %v1322 = vpop.f32.mrf.mxu0
  %v1323 = vadd.f32 0.0, %v1322
  %1324 = vdwg.mxu0
  %1325 = vmatpush.msra.mxu0 0.0
  %1326 = vmatpush.msra.mxu0 0.0
  %1327 = vmatpush.msra.mxu0 0.0
  %1328 = vmatpush.msra.mxu0 0.0
  %1329 = vmatpush.msra.mxu0 0.0
  %1330 = vmatpush.msra.mxu0 0.0
  %1331 = vmatpush.msra.mxu0 0.0
  %1332 = vmatpush.msra.mxu0 %v1150
  %1333 = vmatpush.msra.mxu0 %v1135
  %1334 = vmatpush.msra.mxu0 %v1120
  %1335 = vmatpush.msra.mxu0 %v1105
  %1336 = vmatpush.msra.mxu0 %v1090
  %1337 = vmatpush.msra.mxu0 %v1075
  %1338 = vmatpush.msra.mxu0 %v1060
  %1339 = vmatpush.msra.mxu0 %v1045
  %1340 = vmatpush.msra.mxu0 %v1030
  %1341 = vmatmul.f32.gmra.mxu0 %v1161
  %v1342 = vpop.f32.mrf.mxu0
  %v1343 = vadd.f32 0.0, %v1342
  %1344 = vmatmul.f32.gmra.mxu0 %v1164
  %v1345 = vpop.f32.mrf.mxu0
  %v1346 = vadd.f32 0.0, %v1345
  %1347 = vmatmul.f32.gmra.mxu0 %v1167
  %v1348 = vpop.f32.mrf.mxu0
  %v1349 = vadd.f32 0.0, %v1348
  %1350 = vdwg.mxu0
  %1351 = vmatpush.msra.mxu0 0.0
  %1352 = vmatpush.msra.mxu0 0.0
  %1353 = vmatpush.msra.mxu0 0.0
  %1354 = vmatpush.msra.mxu0 0.0
  %1355 = vmatpush.msra.mxu0 0.0
  %1356 = vmatpush.msra.mxu0 0.0
  %1357 = vmatpush.msra.mxu0 0.0
  %1358 = vmatpush.msra.mxu0 %v1151
  %1359 = vmatpush.msra.mxu0 %v1136
  %1360 = vmatpush.msra.mxu0 %v1121
  %1361 = vmatpush.msra.mxu0 %v1106
  %1362 = vmatpush.msra.mxu0 %v1091
  %1363 = vmatpush.msra.mxu0 %v1076
  %1364 = vmatpush.msra.mxu0 %v1061
  %1365 = vmatpush.msra.mxu0 %v1046
  %1366 = vmatpush.msra.mxu0 %v1031
  %1367 = vmatmul.f32.gmra.mxu0 %v1161
  %v1368 = vpop.f32.mrf.mxu0
  %v1369 = vadd.f32 0.0, %v1368
  %1370 = vmatmul.f32.gmra.mxu0 %v1164
  %v1371 = vpop.f32.mrf.mxu0
  %v1372 = vadd.f32 0.0, %v1371
  %1373 = vmatmul.f32.gmra.mxu0 %v1167
  %v1374 = vpop.f32.mrf.mxu0
  %v1375 = vadd.f32 0.0, %v1374
  %1376 = vdwg.mxu0
  %1377 = vmatpush.msra.mxu0 0.0
  %1378 = vmatpush.msra.mxu0 0.0
  %1379 = vmatpush.msra.mxu0 0.0
  %1380 = vmatpush.msra.mxu0 0.0
  %1381 = vmatpush.msra.mxu0 0.0
  %1382 = vmatpush.msra.mxu0 0.0
  %1383 = vmatpush.msra.mxu0 0.0
  %1384 = vmatpush.msra.mxu0 %v1152
  %1385 = vmatpush.msra.mxu0 %v1137
  %1386 = vmatpush.msra.mxu0 %v1122
  %1387 = vmatpush.msra.mxu0 %v1107
  %1388 = vmatpush.msra.mxu0 %v1092
  %1389 = vmatpush.msra.mxu0 %v1077
  %1390 = vmatpush.msra.mxu0 %v1062
  %1391 = vmatpush.msra.mxu0 %v1047
  %1392 = vmatpush.msra.mxu0 %v1032
  %1393 = vmatmul.f32.gmra.mxu0 %v1161
  %v1394 = vpop.f32.mrf.mxu0
  %v1395 = vadd.f32 0.0, %v1394
  %1396 = vmatmul.f32.gmra.mxu0 %v1164
  %v1397 = vpop.f32.mrf.mxu0
  %v1398 = vadd.f32 0.0, %v1397
  %1399 = vmatmul.f32.gmra.mxu0 %v1167
  %v1400 = vpop.f32.mrf.mxu0
  %v1401 = vadd.f32 0.0, %v1400
  %1402 = vdwg.mxu0
  %1403 = vmatpush.msra.mxu0 0.0
  %1404 = vmatpush.msra.mxu0 0.0
  %1405 = vmatpush.msra.mxu0 0.0
  %1406 = vmatpush.msra.mxu0 0.0
  %1407 = vmatpush.msra.mxu0 0.0
  %1408 = vmatpush.msra.mxu0 0.0
  %1409 = vmatpush.msra.mxu0 0.0
  %1410 = vmatpush.msra.mxu0 %v1153
  %1411 = vmatpush.msra.mxu0 %v1138
  %1412 = vmatpush.msra.mxu0 %v1123
  %1413 = vmatpush.msra.mxu0 %v1108
  %1414 = vmatpush.msra.mxu0 %v1093
  %1415 = vmatpush.msra.mxu0 %v1078
  %1416 = vmatpush.msra.mxu0 %v1063
  %1417 = vmatpush.msra.mxu0 %v1048
  %1418 = vmatpush.msra.mxu0 %v1033
  %1419 = vmatmul.f32.gmra.mxu0 %v1161
  %v1420 = vpop.f32.mrf.mxu0
  %v1421 = vadd.f32 0.0, %v1420
  %1422 = vmatmul.f32.gmra.mxu0 %v1164
  %v1423 = vpop.f32.mrf.mxu0
  %v1424 = vadd.f32 0.0, %v1423
  %1425 = vmatmul.f32.gmra.mxu0 %v1167
  %v1426 = vpop.f32.mrf.mxu0
  %v1427 = vadd.f32 0.0, %v1426
  %1428 = vdwg.mxu0
  %1429 = vmatpush.msra.mxu0 0.0
  %1430 = vmatpush.msra.mxu0 0.0
  %1431 = vmatpush.msra.mxu0 0.0
  %1432 = vmatpush.msra.mxu0 0.0
  %1433 = vmatpush.msra.mxu0 0.0
  %1434 = vmatpush.msra.mxu0 0.0
  %1435 = vmatpush.msra.mxu0 0.0
  %1436 = vmatpush.msra.mxu0 %v1154
  %1437 = vmatpush.msra.mxu0 %v1139
  %1438 = vmatpush.msra.mxu0 %v1124
  %1439 = vmatpush.msra.mxu0 %v1109
  %1440 = vmatpush.msra.mxu0 %v1094
  %1441 = vmatpush.msra.mxu0 %v1079
  %1442 = vmatpush.msra.mxu0 %v1064
  %1443 = vmatpush.msra.mxu0 %v1049
  %1444 = vmatpush.msra.mxu0 %v1034
  %1445 = vmatmul.f32.gmra.mxu0 %v1161
  %v1446 = vpop.f32.mrf.mxu0
  %v1447 = vadd.f32 0.0, %v1446
  %1448 = vmatmul.f32.gmra.mxu0 %v1164
  %v1449 = vpop.f32.mrf.mxu0
  %v1450 = vadd.f32 0.0, %v1449
  %1451 = vmatmul.f32.gmra.mxu0 %v1167
  %v1452 = vpop.f32.mrf.mxu0
  %v1453 = vadd.f32 0.0, %v1452
  %1454 = vdwg.mxu0
  %1455 = vmatpush.msra.mxu0 0.0
  %1456 = vmatpush.msra.mxu0 0.0
  %1457 = vmatpush.msra.mxu0 0.0
  %1458 = vmatpush.msra.mxu0 0.0
  %1459 = vmatpush.msra.mxu0 0.0
  %1460 = vmatpush.msra.mxu0 0.0
  %1461 = vmatpush.msra.mxu0 0.0
  %1462 = vmatpush.msra.mxu0 %v1155
  %1463 = vmatpush.msra.mxu0 %v1140
  %1464 = vmatpush.msra.mxu0 %v1125
  %1465 = vmatpush.msra.mxu0 %v1110
  %1466 = vmatpush.msra.mxu0 %v1095
  %1467 = vmatpush.msra.mxu0 %v1080
  %1468 = vmatpush.msra.mxu0 %v1065
  %1469 = vmatpush.msra.mxu0 %v1050
  %1470 = vmatpush.msra.mxu0 %v1035
  %1471 = vmatmul.f32.gmra.mxu0 %v1161
  %v1472 = vpop.f32.mrf.mxu0
  %v1473 = vadd.f32 0.0, %v1472
  %1474 = vmatmul.f32.gmra.mxu0 %v1164
  %v1475 = vpop.f32.mrf.mxu0
  %v1476 = vadd.f32 0.0, %v1475
  %1477 = vmatmul.f32.gmra.mxu0 %v1167
  %v1478 = vpop.f32.mrf.mxu0
  %v1479 = vadd.f32 0.0, %v1478
  %1480 = vdwg.mxu0
  %1481 = vmatpush.msra.mxu0 0.0
  %1482 = vmatpush.msra.mxu0 0.0
  %1483 = vmatpush.msra.mxu0 0.0
  %1484 = vmatpush.msra.mxu0 0.0
  %1485 = vmatpush.msra.mxu0 0.0
  %1486 = vmatpush.msra.mxu0 0.0
  %1487 = vmatpush.msra.mxu0 0.0
  %1488 = vmatpush.msra.mxu0 %v1156
  %1489 = vmatpush.msra.mxu0 %v1141
  %1490 = vmatpush.msra.mxu0 %v1126
  %1491 = vmatpush.msra.mxu0 %v1111
  %1492 = vmatpush.msra.mxu0 %v1096
  %1493 = vmatpush.msra.mxu0 %v1081
  %1494 = vmatpush.msra.mxu0 %v1066
  %1495 = vmatpush.msra.mxu0 %v1051
  %1496 = vmatpush.msra.mxu0 %v1036
  %1497 = vmatmul.f32.gmra.mxu0 %v1161
  %v1498 = vpop.f32.mrf.mxu0
  %v1499 = vadd.f32 0.0, %v1498
  %1500 = vmatmul.f32.gmra.mxu0 %v1164
  %v1501 = vpop.f32.mrf.mxu0
  %v1502 = vadd.f32 0.0, %v1501
  %1503 = vmatmul.f32.gmra.mxu0 %v1167
  %v1504 = vpop.f32.mrf.mxu0
  %v1505 = vadd.f32 0.0, %v1504
  %1506 = vdwg.mxu0
  %1507 = vmatpush.msra.mxu0 0.0
  %1508 = vmatpush.msra.mxu0 0.0
  %1509 = vmatpush.msra.mxu0 0.0
  %1510 = vmatpush.msra.mxu0 0.0
  %1511 = vmatpush.msra.mxu0 0.0
  %1512 = vmatpush.msra.mxu0 0.0
  %1513 = vmatpush.msra.mxu0 0.0
  %1514 = vmatpush.msra.mxu0 %v1157
  %1515 = vmatpush.msra.mxu0 %v1142
  %1516 = vmatpush.msra.mxu0 %v1127
  %1517 = vmatpush.msra.mxu0 %v1112
  %1518 = vmatpush.msra.mxu0 %v1097
  %1519 = vmatpush.msra.mxu0 %v1082
  %1520 = vmatpush.msra.mxu0 %v1067
  %1521 = vmatpush.msra.mxu0 %v1052
  %1522 = vmatpush.msra.mxu0 %v1037
  %1523 = vmatmul.f32.gmra.mxu0 %v1161
  %v1524 = vpop.f32.mrf.mxu0
  %v1525 = vadd.f32 0.0, %v1524
  %1526 = vmatmul.f32.gmra.mxu0 %v1164
  %v1527 = vpop.f32.mrf.mxu0
  %v1528 = vadd.f32 0.0, %v1527
  %1529 = vmatmul.f32.gmra.mxu0 %v1167
  %v1530 = vpop.f32.mrf.mxu0
  %v1531 = vadd.f32 0.0, %v1530
  %1532 = vdwg.mxu0
  %1533 = vmatpush.msra.mxu0 0.0
  %1534 = vmatpush.msra.mxu0 0.0
  %1535 = vmatpush.msra.mxu0 0.0
  %1536 = vmatpush.msra.mxu0 0.0
  %1537 = vmatpush.msra.mxu0 0.0
  %1538 = vmatpush.msra.mxu0 0.0
  %1539 = vmatpush.msra.mxu0 0.0
  %1540 = vmatpush.msra.mxu0 %v1158
  %1541 = vmatpush.msra.mxu0 %v1143
  %1542 = vmatpush.msra.mxu0 %v1128
  %1543 = vmatpush.msra.mxu0 %v1113
  %1544 = vmatpush.msra.mxu0 %v1098
  %1545 = vmatpush.msra.mxu0 %v1083
  %1546 = vmatpush.msra.mxu0 %v1068
  %1547 = vmatpush.msra.mxu0 %v1053
  %1548 = vmatpush.msra.mxu0 %v1038
  %1549 = vmatmul.f32.gmra.mxu0 %v1161
  %v1550 = vpop.f32.mrf.mxu0
  %1551 = vmatmul.f32.gmra.mxu0 %v1164
  %v1552 = vpop.f32.mrf.mxu0
  %v1553 = vadd.f32 0.0, %v1552
  %1554 = vmatmul.f32.gmra.mxu0 %v1167
  %v1555 = vpop.f32.mrf.mxu0
  %v1556 = vadd.f32 0.0, %v1555
  %1557 = vdwg.mxu0
  %1573 = vrot.lane.b32.xlu0 %v1190, 127
  %v1574 = vpop.permute.xlu0 %1573
  %1575 = vrot.lane.b32.xlu0 %v1216, 127
  %v1576 = vpop.permute.xlu0 %1575
  %1577 = vrot.lane.b32.xlu0 %v1242, 127
  %v1578 = vpop.permute.xlu0 %1577
  %1579 = vrot.lane.b32.xlu0 %v1268, 127
  %v1580 = vpop.permute.xlu0 %1579
  %1581 = vrot.lane.b32.xlu0 %v1294, 127
  %v1582 = vpop.permute.xlu0 %1581
  %1583 = vrot.lane.b32.xlu0 %v1320, 127
  %v1584 = vpop.permute.xlu0 %1583
  %1585 = vrot.lane.b32.xlu0 %v1346, 127
  %v1586 = vpop.permute.xlu0 %1585
  %1587 = vrot.lane.b32.xlu0 %v1372, 127
  %v1588 = vpop.permute.xlu0 %1587
  %1589 = vrot.lane.b32.xlu0 %v1398, 127
  %v1590 = vpop.permute.xlu0 %1589
  %1591 = vrot.lane.b32.xlu0 %v1424, 127
  %v1592 = vpop.permute.xlu0 %1591
  %1593 = vrot.lane.b32.xlu0 %v1450, 127
  %v1594 = vpop.permute.xlu0 %1593
  %1595 = vrot.lane.b32.xlu0 %v1476, 127
  %v1596 = vpop.permute.xlu0 %1595
  %1597 = vrot.lane.b32.xlu0 %v1502, 127
  %v1598 = vpop.permute.xlu0 %1597
  %1599 = vrot.lane.b32.xlu0 %v1528, 127
  %v1600 = vpop.permute.xlu0 %1599
  %1601 = vrot.lane.b32.xlu0 %v1553, 127
  %v1602 = vpop.permute.xlu0 %1601
  %vm1603 = vcmask 1039360
  %v1604 = vsel %vm1603, %v1574, %v1576
  %v1605 = vsel %vm1603, %v1576, %v1578
  %v1606 = vsel %vm1603, %v1578, %v1580
  %v1607 = vsel %vm1603, %v1580, %v1582
  %v1608 = vsel %vm1603, %v1582, %v1584
  %v1609 = vsel %vm1603, %v1584, %v1586
  %v1610 = vsel %vm1603, %v1586, %v1588
  %v1611 = vsel %vm1603, %v1588, %v1590
  %v1612 = vsel %vm1603, %v1590, %v1592
  %v1613 = vsel %vm1603, %v1592, %v1594
  %v1614 = vsel %vm1603, %v1594, %v1596
  %v1615 = vsel %vm1603, %v1596, %v1598
  %v1616 = vsel %vm1603, %v1598, %v1600
  %v1617 = vsel %vm1603, %v1600, %v1602
  %v1632 = vadd.f32 %v1187, %v1604
  %v1633 = vadd.f32 %v1213, %v1605
  %v1634 = vadd.f32 %v1239, %v1606
  %v1635 = vadd.f32 %v1265, %v1607
  %v1636 = vadd.f32 %v1291, %v1608
  %v1637 = vadd.f32 %v1317, %v1609
  %v1638 = vadd.f32 %v1343, %v1610
  %v1639 = vadd.f32 %v1369, %v1611
  %v1640 = vadd.f32 %v1395, %v1612
  %v1641 = vadd.f32 %v1421, %v1613
  %v1642 = vadd.f32 %v1447, %v1614
  %v1643 = vadd.f32 %v1473, %v1615
  %v1644 = vadd.f32 %v1499, %v1616
  %v1645 = vadd.f32 %v1525, %v1617
  %1661 = vrot.lane.b32.xlu0 %v1193, 126
  %v1662 = vpop.permute.xlu0 %1661
  %1663 = vrot.lane.b32.xlu0 %v1219, 126
  %v1664 = vpop.permute.xlu0 %1663
  %1665 = vrot.lane.b32.xlu0 %v1245, 126
  %v1666 = vpop.permute.xlu0 %1665
  %1667 = vrot.lane.b32.xlu0 %v1271, 126
  %v1668 = vpop.permute.xlu0 %1667
  %1669 = vrot.lane.b32.xlu0 %v1297, 126
  %v1670 = vpop.permute.xlu0 %1669
  %1671 = vrot.lane.b32.xlu0 %v1323, 126
  %v1672 = vpop.permute.xlu0 %1671
  %1673 = vrot.lane.b32.xlu0 %v1349, 126
  %v1674 = vpop.permute.xlu0 %1673
  %1675 = vrot.lane.b32.xlu0 %v1375, 126
  %v1676 = vpop.permute.xlu0 %1675
  %1677 = vrot.lane.b32.xlu0 %v1401, 126
  %v1678 = vpop.permute.xlu0 %1677
  %1679 = vrot.lane.b32.xlu0 %v1427, 126
  %v1680 = vpop.permute.xlu0 %1679
  %1681 = vrot.lane.b32.xlu0 %v1453, 126
  %v1682 = vpop.permute.xlu0 %1681
  %1683 = vrot.lane.b32.xlu0 %v1479, 126
  %v1684 = vpop.permute.xlu0 %1683
  %1685 = vrot.lane.b32.xlu0 %v1505, 126
  %v1686 = vpop.permute.xlu0 %1685
  %1687 = vrot.lane.b32.xlu0 %v1531, 126
  %v1688 = vpop.permute.xlu0 %1687
  %1689 = vrot.lane.b32.xlu0 %v1556, 126
  %v1690 = vpop.permute.xlu0 %1689
  %vm1691 = vcmask 1031168
  %v1692 = vsel %vm1691, %v1662, %v1664
  %v1693 = vsel %vm1691, %v1664, %v1666
  %v1694 = vsel %vm1691, %v1666, %v1668
  %v1695 = vsel %vm1691, %v1668, %v1670
  %v1696 = vsel %vm1691, %v1670, %v1672
  %v1697 = vsel %vm1691, %v1672, %v1674
  %v1698 = vsel %vm1691, %v1674, %v1676
  %v1699 = vsel %vm1691, %v1676, %v1678
  %v1700 = vsel %vm1691, %v1678, %v1680
  %v1701 = vsel %vm1691, %v1680, %v1682
  %v1702 = vsel %vm1691, %v1682, %v1684
  %v1703 = vsel %vm1691, %v1684, %v1686
  %v1704 = vsel %vm1691, %v1686, %v1688
  %v1705 = vsel %vm1691, %v1688, %v1690
  %v1720 = vadd.f32 %v1632, %v1692
  %v1721 = vadd.f32 %v1633, %v1693
  %v1722 = vadd.f32 %v1634, %v1694
  %v1723 = vadd.f32 %v1635, %v1695
  %v1724 = vadd.f32 %v1636, %v1696
  %v1725 = vadd.f32 %v1637, %v1697
  %v1726 = vadd.f32 %v1638, %v1698
  %v1727 = vadd.f32 %v1639, %v1699
  %v1728 = vadd.f32 %v1640, %v1700
  %v1729 = vadd.f32 %v1641, %v1701
  %v1730 = vadd.f32 %v1642, %v1702
  %v1731 = vadd.f32 %v1643, %v1703
  %v1732 = vadd.f32 %v1644, %v1704
  %v1733 = vadd.f32 %v1645, %v1705
  %v1736 = vperm.slane %v29, 0
  %v1737 = vperm.slane %v29, 1
  %v1738 = vperm.slane %v29, 2
  %v1739 = vperm.slane %v29, 3
  %v1740 = vperm.slane %v29, 4
  %v1741 = vperm.slane %v29, 5
  %v1742 = vperm.slane %v29, 6
  %v1743 = vperm.slane %v29, 7
  %v1744 = vperm.slane %v30, 0
  %v1745 = vperm.slane %v30, 1
  %v1746 = vperm.slane %v30, 2
  %v1747 = vperm.slane %v30, 3
  %v1748 = vperm.slane %v30, 4
  %v1749 = vperm.slane %v30, 5
  %v1764 = vmul.f32 %v1720, %v1736
  %v1765 = vmul.f32 %v1721, %v1737
  %v1766 = vmul.f32 %v1722, %v1738
  %v1767 = vmul.f32 %v1723, %v1739
  %v1768 = vmul.f32 %v1724, %v1740
  %v1769 = vmul.f32 %v1725, %v1741
  %v1770 = vmul.f32 %v1726, %v1742
  %v1771 = vmul.f32 %v1727, %v1743
  %v1772 = vmul.f32 %v1728, %v1744
  %v1773 = vmul.f32 %v1729, %v1745
  %v1774 = vmul.f32 %v1730, %v1746
  %v1775 = vmul.f32 %v1731, %v1747
  %v1776 = vmul.f32 %v1732, %v1748
  %v1777 = vmul.f32 %v1733, %v1749
  %v1778 = vadd.f32 %v1764, %v1765
  %v1779 = vadd.f32 %v1778, %v1766
  %v1780 = vadd.f32 %v1779, %v1767
  %v1781 = vadd.f32 %v1780, %v1768
  %v1782 = vadd.f32 %v1781, %v1769
  %v1783 = vadd.f32 %v1782, %v1770
  %v1784 = vadd.f32 %v1783, %v1771
  %v1785 = vadd.f32 %v1784, %v1772
  %v1786 = vadd.f32 %v1785, %v1773
  %v1787 = vadd.f32 %v1786, %v1774
  %v1788 = vadd.f32 %v1787, %v1775
  %v1789 = vadd.f32 %v1788, %v1776
  %v1790 = vadd.f32 %v1789, %v1777
  %1791 = vadd.xlane.f32.xlu0 %v1790
  %v1792 = vpop.xlane.xlu0 %1791
  %v1793 = vmul.f32 %v1792, 0.0009765625
  %v1794 = vsub.f32 %v1720, %v1793
  %v1795 = vsub.f32 %v1721, %v1793
  %v1796 = vsub.f32 %v1722, %v1793
  %v1797 = vsub.f32 %v1723, %v1793
  %v1798 = vsub.f32 %v1724, %v1793
  %v1799 = vsub.f32 %v1725, %v1793
  %v1800 = vsub.f32 %v1726, %v1793
  %v1801 = vsub.f32 %v1727, %v1793
  %v1802 = vsub.f32 %v1728, %v1793
  %v1803 = vsub.f32 %v1729, %v1793
  %v1804 = vsub.f32 %v1730, %v1793
  %v1805 = vsub.f32 %v1731, %v1793
  %v1806 = vsub.f32 %v1732, %v1793
  %v1807 = vsub.f32 %v1733, %v1793
  %v1808 = vmul.f32 %v1794, %v1736
  %v1809 = vmul.f32 %v1795, %v1737
  %v1810 = vmul.f32 %v1796, %v1738
  %v1811 = vmul.f32 %v1797, %v1739
  %v1812 = vmul.f32 %v1798, %v1740
  %v1813 = vmul.f32 %v1799, %v1741
  %v1814 = vmul.f32 %v1800, %v1742
  %v1815 = vmul.f32 %v1801, %v1743
  %v1816 = vmul.f32 %v1802, %v1744
  %v1817 = vmul.f32 %v1803, %v1745
  %v1818 = vmul.f32 %v1804, %v1746
  %v1819 = vmul.f32 %v1805, %v1747
  %v1820 = vmul.f32 %v1806, %v1748
  %v1821 = vmul.f32 %v1807, %v1749
  %v1822 = vmul.f32 %v1808, %v1808
  %v1823 = vmul.f32 %v1809, %v1809
  %v1824 = vmul.f32 %v1810, %v1810
  %v1825 = vmul.f32 %v1811, %v1811
  %v1826 = vmul.f32 %v1812, %v1812
  %v1827 = vmul.f32 %v1813, %v1813
  %v1828 = vmul.f32 %v1814, %v1814
  %v1829 = vmul.f32 %v1815, %v1815
  %v1830 = vmul.f32 %v1816, %v1816
  %v1831 = vmul.f32 %v1817, %v1817
  %v1832 = vmul.f32 %v1818, %v1818
  %v1833 = vmul.f32 %v1819, %v1819
  %v1834 = vmul.f32 %v1820, %v1820
  %v1835 = vmul.f32 %v1821, %v1821
  %v1836 = vadd.f32 %v1822, %v1823
  %v1837 = vadd.f32 %v1836, %v1824
  %v1838 = vadd.f32 %v1837, %v1825
  %v1839 = vadd.f32 %v1838, %v1826
  %v1840 = vadd.f32 %v1839, %v1827
  %v1841 = vadd.f32 %v1840, %v1828
  %v1842 = vadd.f32 %v1841, %v1829
  %v1843 = vadd.f32 %v1842, %v1830
  %v1844 = vadd.f32 %v1843, %v1831
  %v1845 = vadd.f32 %v1844, %v1832
  %v1846 = vadd.f32 %v1845, %v1833
  %v1847 = vadd.f32 %v1846, %v1834
  %v1848 = vadd.f32 %v1847, %v1835
  %1849 = vadd.xlane.f32.xlu0 %v1848
  %v1850 = vpop.xlane.xlu0 %1849
  %v1851 = vmul.f32 %v1850, 0.0009765625
  %v1852 = vld [vmem:[%s3] sm:$0xff]
  %v1853 = vadd.f32 %v1851, 1e-05
  %v1854 = vrsqrt.pop %v1853
  %v1855 = vmul.f32 %v1854, %v1853
  %v1856 = vmul.f32 %v1855, %v1854
  %v1857 = vmul.f32 0.5, %v1856
  %v1858 = vsub.f32 1.5, %v1857
  %v1859 = vmul.f32 %v1854, %v1858
  %vm1860 = vweird.f32 %v1853
  %vm1861 = vweird.f32 %v1854
  %vm1862 = vmor %vm1860, %vm1861
  %v1863 = vsel %vm1862, %v1854, %v1859
  %v1864 = vmul.f32 %v1852, %v1863
  %v1865 = vld [vmem:[%s4] sm:$0xff]
  %v1866 = vmul.f32 %v1793, %v1864
  %v1867 = vsub.f32 %v1865, %v1866
  %1869 = vset.pattern.permute.xlu0 0
  %1870 = vperm.xlu0 %1869, %v1864
  %v1871 = vpop.permute.xlu0 %1870
  %v1873 = vmul.f32 %v1720, %v1871
  %v1874 = vmul.f32 %v1721, %v1871
  %v1875 = vmul.f32 %v1722, %v1871
  %v1876 = vmul.f32 %v1723, %v1871
  %v1877 = vmul.f32 %v1724, %v1871
  %v1878 = vmul.f32 %v1725, %v1871
  %v1879 = vmul.f32 %v1726, %v1871
  %v1880 = vmul.f32 %v1727, %v1871
  %v1881 = vmul.f32 %v1728, %v1871
  %v1882 = vmul.f32 %v1729, %v1871
  %v1883 = vmul.f32 %v1730, %v1871
  %v1884 = vmul.f32 %v1731, %v1871
  %v1885 = vmul.f32 %v1732, %v1871
  %v1886 = vmul.f32 %v1733, %v1871
  %1888 = vset.pattern.permute.xlu0 0
  %1889 = vperm.xlu0 %1888, %v1867
  %v1890 = vpop.permute.xlu0 %1889
  %v1892 = vadd.f32 %v1873, %v1890
  %v1893 = vadd.f32 %v1874, %v1890
  %v1894 = vadd.f32 %v1875, %v1890
  %v1895 = vadd.f32 %v1876, %v1890
  %v1896 = vadd.f32 %v1877, %v1890
  %v1897 = vadd.f32 %v1878, %v1890
  %v1898 = vadd.f32 %v1879, %v1890
  %v1899 = vadd.f32 %v1880, %v1890
  %v1900 = vadd.f32 %v1881, %v1890
  %v1901 = vadd.f32 %v1882, %v1890
  %v1902 = vadd.f32 %v1883, %v1890
  %v1903 = vadd.f32 %v1884, %v1890
  %v1904 = vadd.f32 %v1885, %v1890
  %v1905 = vadd.f32 %v1886, %v1890
  %vm1906 = vcmp.ge.f32.partialorder %v1892, 0.0
  %vm1907 = vcmp.ge.f32.partialorder %v1893, 0.0
  %vm1908 = vcmp.ge.f32.partialorder %v1894, 0.0
  %vm1909 = vcmp.ge.f32.partialorder %v1895, 0.0
  %vm1910 = vcmp.ge.f32.partialorder %v1896, 0.0
  %vm1911 = vcmp.ge.f32.partialorder %v1897, 0.0
  %vm1912 = vcmp.ge.f32.partialorder %v1898, 0.0
  %vm1913 = vcmp.ge.f32.partialorder %v1899, 0.0
  %vm1914 = vcmp.ge.f32.partialorder %v1900, 0.0
  %vm1915 = vcmp.ge.f32.partialorder %v1901, 0.0
  %vm1916 = vcmp.ge.f32.partialorder %v1902, 0.0
  %vm1917 = vcmp.ge.f32.partialorder %v1903, 0.0
  %vm1918 = vcmp.ge.f32.partialorder %v1904, 0.0
  %vm1919 = vcmp.ge.f32.partialorder %v1905, 0.0
  %v1920 = vmul.f32 %v1892, 0.2
  %v1921 = vmul.f32 %v1893, 0.2
  %v1922 = vmul.f32 %v1894, 0.2
  %v1923 = vmul.f32 %v1895, 0.2
  %v1924 = vmul.f32 %v1896, 0.2
  %v1925 = vmul.f32 %v1897, 0.2
  %v1926 = vmul.f32 %v1898, 0.2
  %v1927 = vmul.f32 %v1899, 0.2
  %v1928 = vmul.f32 %v1900, 0.2
  %v1929 = vmul.f32 %v1901, 0.2
  %v1930 = vmul.f32 %v1902, 0.2
  %v1931 = vmul.f32 %v1903, 0.2
  %v1932 = vmul.f32 %v1904, 0.2
  %v1933 = vmul.f32 %v1905, 0.2
  %v1934 = vsel %vm1906, %v1892, %v1920
  %v1935 = vsel %vm1907, %v1893, %v1921
  %v1936 = vsel %vm1908, %v1894, %v1922
  %v1937 = vsel %vm1909, %v1895, %v1923
  %v1938 = vsel %vm1910, %v1896, %v1924
  %v1939 = vsel %vm1911, %v1897, %v1925
  %v1940 = vsel %vm1912, %v1898, %v1926
  %v1941 = vsel %vm1913, %v1899, %v1927
  %v1942 = vsel %vm1914, %v1900, %v1928
  %v1943 = vsel %vm1915, %v1901, %v1929
  %v1944 = vsel %vm1916, %v1902, %v1930
  %v1945 = vsel %vm1917, %v1903, %v1931
  %v1946 = vsel %vm1918, %v1904, %v1932
  %v1947 = vsel %vm1919, %v1905, %v1933
  %v1948 = vmul.f32 %v1934, %v1736
  %v1949 = vmul.f32 %v1935, %v1737
  %v1950 = vmul.f32 %v1936, %v1738
  %v1951 = vmul.f32 %v1937, %v1739
  %v1952 = vmul.f32 %v1938, %v1740
  %v1953 = vmul.f32 %v1939, %v1741
  %v1954 = vmul.f32 %v1940, %v1742
  %v1955 = vmul.f32 %v1941, %v1743
  %v1956 = vmul.f32 %v1942, %v1744
  %v1957 = vmul.f32 %v1943, %v1745
  %v1958 = vmul.f32 %v1944, %v1746
  %v1959 = vmul.f32 %v1945, %v1747
  %v1960 = vmul.f32 %v1946, %v1748
  %v1961 = vmul.f32 %v1947, %v1749
  %1962 = vst [vmem:[#allocation3] sm:$0xff] 0.0
  %1963 = vst [vmem:[#allocation3 + $0x78] sm:$0xff] 0.0
  %1964 = vst [vmem:[#allocation3 + $0x80] sm:$0xff] 0.0
  %1965 = vst [vmem:[#allocation3 + $0x8] sm:$0xff] %v1948
  %1966 = vst [vmem:[#allocation3 + $0x10] sm:$0xff] %v1949
  %1967 = vst [vmem:[#allocation3 + $0x18] sm:$0xff] %v1950
  %1968 = vst [vmem:[#allocation3 + $0x20] sm:$0xff] %v1951
  %1969 = vst [vmem:[#allocation3 + $0x28] sm:$0xff] %v1952
  %1970 = vst [vmem:[#allocation3 + $0x30] sm:$0xff] %v1953
  %1971 = vst [vmem:[#allocation3 + $0x38] sm:$0xff] %v1954
  %1972 = vst [vmem:[#allocation3 + $0x40] sm:$0xff] %v1955
  %1973 = vst [vmem:[#allocation3 + $0x48] sm:$0xff] %v1956
  %1974 = vst [vmem:[#allocation3 + $0x50] sm:$0xff] %v1957
  %1975 = vst [vmem:[#allocation3 + $0x58] sm:$0xff] %v1958
  %1976 = vst [vmem:[#allocation3 + $0x60] sm:$0xff] %v1959
  %1977 = vst [vmem:[#allocation3 + $0x68] sm:$0xff] %v1960
  %1978 = vst [vmem:[#allocation3 + $0x70] sm:$0xff] %v1961
  %v1979 = vld [vmem:[#allocation3] sm:$0xff]
  %v1980 = vld [vmem:[#allocation3 + $0x8] sm:$0xff]
  %v1981 = vld [vmem:[#allocation3 + $0x10] sm:$0xff]
  %v1982 = vld [vmem:[#allocation3 + $0x18] sm:$0xff]
  %v1983 = vld [vmem:[#allocation3 + $0x20] sm:$0xff]
  %v1984 = vld [vmem:[#allocation3 + $0x28] sm:$0xff]
  %v1985 = vld [vmem:[#allocation3 + $0x30] sm:$0xff]
  %v1986 = vld [vmem:[#allocation3 + $0x38] sm:$0xff]
  %v1987 = vld [vmem:[#allocation3 + $0x40] sm:$0xff]
  %v1988 = vld [vmem:[#allocation3 + $0x48] sm:$0xff]
  %v1989 = vld [vmem:[#allocation3 + $0x50] sm:$0xff]
  %v1990 = vld [vmem:[#allocation3 + $0x58] sm:$0xff]
  %v1991 = vld [vmem:[#allocation3 + $0x60] sm:$0xff]
  %v1992 = vld [vmem:[#allocation3 + $0x68] sm:$0xff]
  %v1993 = vld [vmem:[#allocation3 + $0x70] sm:$0xff]
  %v1994 = vld [vmem:[#allocation3 + $0x78] sm:$0xff]
  %2011 = vrot.lane.b32.xlu0 %v1979, 111
  %v2012 = vpop.permute.xlu0 %2011
  %2013 = vrot.lane.b32.xlu0 %v1980, 111
  %v2014 = vpop.permute.xlu0 %2013
  %2015 = vrot.lane.b32.xlu0 %v1981, 111
  %v2016 = vpop.permute.xlu0 %2015
  %2017 = vrot.lane.b32.xlu0 %v1982, 111
  %v2018 = vpop.permute.xlu0 %2017
  %2019 = vrot.lane.b32.xlu0 %v1983, 111
  %v2020 = vpop.permute.xlu0 %2019
  %2021 = vrot.lane.b32.xlu0 %v1984, 111
  %v2022 = vpop.permute.xlu0 %2021
  %2023 = vrot.lane.b32.xlu0 %v1985, 111
  %v2024 = vpop.permute.xlu0 %2023
  %2025 = vrot.lane.b32.xlu0 %v1986, 111
  %v2026 = vpop.permute.xlu0 %2025
  %2027 = vrot.lane.b32.xlu0 %v1987, 111
  %v2028 = vpop.permute.xlu0 %2027
  %2029 = vrot.lane.b32.xlu0 %v1988, 111
  %v2030 = vpop.permute.xlu0 %2029
  %2031 = vrot.lane.b32.xlu0 %v1989, 111
  %v2032 = vpop.permute.xlu0 %2031
  %2033 = vrot.lane.b32.xlu0 %v1990, 111
  %v2034 = vpop.permute.xlu0 %2033
  %2035 = vrot.lane.b32.xlu0 %v1991, 111
  %v2036 = vpop.permute.xlu0 %2035
  %2037 = vrot.lane.b32.xlu0 %v1992, 111
  %v2038 = vpop.permute.xlu0 %2037
  %2039 = vrot.lane.b32.xlu0 %v1993, 111
  %v2040 = vpop.permute.xlu0 %2039
  %2041 = vrot.lane.b32.xlu0 %v1994, 111
  %v2042 = vpop.permute.xlu0 %2041
  %v2043 = vsel %vm95, %v2012, %v2014
  %v2044 = vsel %vm95, %v2014, %v2016
  %v2045 = vsel %vm95, %v2016, %v2018
  %v2046 = vsel %vm95, %v2018, %v2020
  %v2047 = vsel %vm95, %v2020, %v2022
  %v2048 = vsel %vm95, %v2022, %v2024
  %v2049 = vsel %vm95, %v2024, %v2026
  %v2050 = vsel %vm95, %v2026, %v2028
  %v2051 = vsel %vm95, %v2028, %v2030
  %v2052 = vsel %vm95, %v2030, %v2032
  %v2053 = vsel %vm95, %v2032, %v2034
  %v2054 = vsel %vm95, %v2034, %v2036
  %v2055 = vsel %vm95, %v2036, %v2038
  %v2056 = vsel %vm95, %v2038, %v2040
  %v2057 = vsel %vm95, %v2040, %v2042
  %2073 = vst [vmem:[#allocation2] sm:$0xff] %v2043
  %2074 = vst [vmem:[#allocation2 + $0x8] sm:$0xff] %v2044
  %2075 = vst [vmem:[#allocation2 + $0x10] sm:$0xff] %v2045
  %2076 = vst [vmem:[#allocation2 + $0x18] sm:$0xff] %v2046
  %2077 = vst [vmem:[#allocation2 + $0x20] sm:$0xff] %v2047
  %2078 = vst [vmem:[#allocation2 + $0x28] sm:$0xff] %v2048
  %2079 = vst [vmem:[#allocation2 + $0x30] sm:$0xff] %v2049
  %2080 = vst [vmem:[#allocation2 + $0x38] sm:$0xff] %v2050
  %2081 = vst [vmem:[#allocation2 + $0x40] sm:$0xff] %v2051
  %2082 = vst [vmem:[#allocation2 + $0x48] sm:$0xff] %v2052
  %2083 = vst [vmem:[#allocation2 + $0x50] sm:$0xff] %v2053
  %2084 = vst [vmem:[#allocation2 + $0x58] sm:$0xff] %v2054
  %2085 = vst [vmem:[#allocation2 + $0x60] sm:$0xff] %v2055
  %2086 = vst [vmem:[#allocation2 + $0x68] sm:$0xff] %v2056
  %2087 = vst [vmem:[#allocation2 + $0x70] sm:$0xff] %v2057
  %v2088 = vld [vmem:[#allocation3] sm:$0xff]
  %v2089 = vld [vmem:[#allocation3 + $0x8] sm:$0xff]
  %v2090 = vld [vmem:[#allocation3 + $0x10] sm:$0xff]
  %v2091 = vld [vmem:[#allocation3 + $0x18] sm:$0xff]
  %v2092 = vld [vmem:[#allocation3 + $0x20] sm:$0xff]
  %v2093 = vld [vmem:[#allocation3 + $0x28] sm:$0xff]
  %v2094 = vld [vmem:[#allocation3 + $0x30] sm:$0xff]
  %v2095 = vld [vmem:[#allocation3 + $0x38] sm:$0xff]
  %v2096 = vld [vmem:[#allocation3 + $0x40] sm:$0xff]
  %v2097 = vld [vmem:[#allocation3 + $0x48] sm:$0xff]
  %v2098 = vld [vmem:[#allocation3 + $0x50] sm:$0xff]
  %v2099 = vld [vmem:[#allocation3 + $0x58] sm:$0xff]
  %v2100 = vld [vmem:[#allocation3 + $0x60] sm:$0xff]
  %v2101 = vld [vmem:[#allocation3 + $0x68] sm:$0xff]
  %v2102 = vld [vmem:[#allocation3 + $0x70] sm:$0xff]
  %v2103 = vld [vmem:[#allocation3 + $0x78] sm:$0xff]
  %2120 = vrot.lane.b32.xlu0 %v2088, 101
  %v2121 = vpop.permute.xlu0 %2120
  %2122 = vrot.lane.b32.xlu0 %v2089, 101
  %v2123 = vpop.permute.xlu0 %2122
  %2124 = vrot.lane.b32.xlu0 %v2090, 101
  %v2125 = vpop.permute.xlu0 %2124
  %2126 = vrot.lane.b32.xlu0 %v2091, 101
  %v2127 = vpop.permute.xlu0 %2126
  %2128 = vrot.lane.b32.xlu0 %v2092, 101
  %v2129 = vpop.permute.xlu0 %2128
  %2130 = vrot.lane.b32.xlu0 %v2093, 101
  %v2131 = vpop.permute.xlu0 %2130
  %2132 = vrot.lane.b32.xlu0 %v2094, 101
  %v2133 = vpop.permute.xlu0 %2132
  %2134 = vrot.lane.b32.xlu0 %v2095, 101
  %v2135 = vpop.permute.xlu0 %2134
  %2136 = vrot.lane.b32.xlu0 %v2096, 101
  %v2137 = vpop.permute.xlu0 %2136
  %2138 = vrot.lane.b32.xlu0 %v2097, 101
  %v2139 = vpop.permute.xlu0 %2138
  %2140 = vrot.lane.b32.xlu0 %v2098, 101
  %v2141 = vpop.permute.xlu0 %2140
  %2142 = vrot.lane.b32.xlu0 %v2099, 101
  %v2143 = vpop.permute.xlu0 %2142
  %2144 = vrot.lane.b32.xlu0 %v2100, 101
  %v2145 = vpop.permute.xlu0 %2144
  %2146 = vrot.lane.b32.xlu0 %v2101, 101
  %v2147 = vpop.permute.xlu0 %2146
  %2148 = vrot.lane.b32.xlu0 %v2102, 101
  %v2149 = vpop.permute.xlu0 %2148
  %2150 = vrot.lane.b32.xlu0 %v2103, 101
  %v2151 = vpop.permute.xlu0 %2150
  %v2152 = vsel %vm205, %v2121, %v2123
  %v2153 = vsel %vm205, %v2123, %v2125
  %v2154 = vsel %vm205, %v2125, %v2127
  %v2155 = vsel %vm205, %v2127, %v2129
  %v2156 = vsel %vm205, %v2129, %v2131
  %v2157 = vsel %vm205, %v2131, %v2133
  %v2158 = vsel %vm205, %v2133, %v2135
  %v2159 = vsel %vm205, %v2135, %v2137
  %v2160 = vsel %vm205, %v2137, %v2139
  %v2161 = vsel %vm205, %v2139, %v2141
  %v2162 = vsel %vm205, %v2141, %v2143
  %v2163 = vsel %vm205, %v2143, %v2145
  %v2164 = vsel %vm205, %v2145, %v2147
  %v2165 = vsel %vm205, %v2147, %v2149
  %v2166 = vsel %vm205, %v2149, %v2151
  %2182 = vst [vmem:[#allocation2 + $0x78] sm:$0xff] %v2152
  %2183 = vst [vmem:[#allocation2 + $0x80] sm:$0xff] %v2153
  %2184 = vst [vmem:[#allocation2 + $0x88] sm:$0xff] %v2154
  %2185 = vst [vmem:[#allocation2 + $0x90] sm:$0xff] %v2155
  %2186 = vst [vmem:[#allocation2 + $0x98] sm:$0xff] %v2156
  %2187 = vst [vmem:[#allocation2 + $0xa0] sm:$0xff] %v2157
  %2188 = vst [vmem:[#allocation2 + $0xa8] sm:$0xff] %v2158
  %2189 = vst [vmem:[#allocation2 + $0xb0] sm:$0xff] %v2159
  %2190 = vst [vmem:[#allocation2 + $0xb8] sm:$0xff] %v2160
  %2191 = vst [vmem:[#allocation2 + $0xc0] sm:$0xff] %v2161
  %2192 = vst [vmem:[#allocation2 + $0xc8] sm:$0xff] %v2162
  %2193 = vst [vmem:[#allocation2 + $0xd0] sm:$0xff] %v2163
  %2194 = vst [vmem:[#allocation2 + $0xd8] sm:$0xff] %v2164
  %2195 = vst [vmem:[#allocation2 + $0xe0] sm:$0xff] %v2165
  %2196 = vst [vmem:[#allocation2 + $0xe8] sm:$0xff] %v2166
  %v2197 = vld [vmem:[#allocation3] sm:$0xff]
  %v2198 = vld [vmem:[#allocation3 + $0x8] sm:$0xff]
  %v2199 = vld [vmem:[#allocation3 + $0x10] sm:$0xff]
  %v2200 = vld [vmem:[#allocation3 + $0x18] sm:$0xff]
  %v2201 = vld [vmem:[#allocation3 + $0x20] sm:$0xff]
  %v2202 = vld [vmem:[#allocation3 + $0x28] sm:$0xff]
  %v2203 = vld [vmem:[#allocation3 + $0x30] sm:$0xff]
  %v2204 = vld [vmem:[#allocation3 + $0x38] sm:$0xff]
  %v2205 = vld [vmem:[#allocation3 + $0x40] sm:$0xff]
  %v2206 = vld [vmem:[#allocation3 + $0x48] sm:$0xff]
  %v2207 = vld [vmem:[#allocation3 + $0x50] sm:$0xff]
  %v2208 = vld [vmem:[#allocation3 + $0x58] sm:$0xff]
  %v2209 = vld [vmem:[#allocation3 + $0x60] sm:$0xff]
  %v2210 = vld [vmem:[#allocation3 + $0x68] sm:$0xff]
  %v2211 = vld [vmem:[#allocation3 + $0x70] sm:$0xff]
  %v2212 = vld [vmem:[#allocation3 + $0x78] sm:$0xff]
  %2229 = vrot.lane.b32.xlu0 %v2197, 91
  %v2230 = vpop.permute.xlu0 %2229
  %2231 = vrot.lane.b32.xlu0 %v2198, 91
  %v2232 = vpop.permute.xlu0 %2231
  %2233 = vrot.lane.b32.xlu0 %v2199, 91
  %v2234 = vpop.permute.xlu0 %2233
  %2235 = vrot.lane.b32.xlu0 %v2200, 91
  %v2236 = vpop.permute.xlu0 %2235
  %2237 = vrot.lane.b32.xlu0 %v2201, 91
  %v2238 = vpop.permute.xlu0 %2237
  %2239 = vrot.lane.b32.xlu0 %v2202, 91
  %v2240 = vpop.permute.xlu0 %2239
  %2241 = vrot.lane.b32.xlu0 %v2203, 91
  %v2242 = vpop.permute.xlu0 %2241
  %2243 = vrot.lane.b32.xlu0 %v2204, 91
  %v2244 = vpop.permute.xlu0 %2243
  %2245 = vrot.lane.b32.xlu0 %v2205, 91
  %v2246 = vpop.permute.xlu0 %2245
  %2247 = vrot.lane.b32.xlu0 %v2206, 91
  %v2248 = vpop.permute.xlu0 %2247
  %2249 = vrot.lane.b32.xlu0 %v2207, 91
  %v2250 = vpop.permute.xlu0 %2249
  %2251 = vrot.lane.b32.xlu0 %v2208, 91
  %v2252 = vpop.permute.xlu0 %2251
  %2253 = vrot.lane.b32.xlu0 %v2209, 91
  %v2254 = vpop.permute.xlu0 %2253
  %2255 = vrot.lane.b32.xlu0 %v2210, 91
  %v2256 = vpop.permute.xlu0 %2255
  %2257 = vrot.lane.b32.xlu0 %v2211, 91
  %v2258 = vpop.permute.xlu0 %2257
  %2259 = vrot.lane.b32.xlu0 %v2212, 91
  %v2260 = vpop.permute.xlu0 %2259
  %v2261 = vsel %vm315, %v2230, %v2232
  %v2262 = vsel %vm315, %v2232, %v2234
  %v2263 = vsel %vm315, %v2234, %v2236
  %v2264 = vsel %vm315, %v2236, %v2238
  %v2265 = vsel %vm315, %v2238, %v2240
  %v2266 = vsel %vm315, %v2240, %v2242
  %v2267 = vsel %vm315, %v2242, %v2244
  %v2268 = vsel %vm315, %v2244, %v2246
  %v2269 = vsel %vm315, %v2246, %v2248
  %v2270 = vsel %vm315, %v2248, %v2250
  %v2271 = vsel %vm315, %v2250, %v2252
  %v2272 = vsel %vm315, %v2252, %v2254
  %v2273 = vsel %vm315, %v2254, %v2256
  %v2274 = vsel %vm315, %v2256, %v2258
  %v2275 = vsel %vm315, %v2258, %v2260
  %2291 = vst [vmem:[#allocation2 + $0xf0] sm:$0xff] %v2261
  %2292 = vst [vmem:[#allocation2 + $0xf8] sm:$0xff] %v2262
  %2293 = vst [vmem:[#allocation2 + $0x100] sm:$0xff] %v2263
  %2294 = vst [vmem:[#allocation2 + $0x108] sm:$0xff] %v2264
  %2295 = vst [vmem:[#allocation2 + $0x110] sm:$0xff] %v2265
  %2296 = vst [vmem:[#allocation2 + $0x118] sm:$0xff] %v2266
  %2297 = vst [vmem:[#allocation2 + $0x120] sm:$0xff] %v2267
  %2298 = vst [vmem:[#allocation2 + $0x128] sm:$0xff] %v2268
  %2299 = vst [vmem:[#allocation2 + $0x130] sm:$0xff] %v2269
  %2300 = vst [vmem:[#allocation2 + $0x138] sm:$0xff] %v2270
  %2301 = vst [vmem:[#allocation2 + $0x140] sm:$0xff] %v2271
  %2302 = vst [vmem:[#allocation2 + $0x148] sm:$0xff] %v2272
  %2303 = vst [vmem:[#allocation2 + $0x150] sm:$0xff] %v2273
  %2304 = vst [vmem:[#allocation2 + $0x158] sm:$0xff] %v2274
  %2305 = vst [vmem:[#allocation2 + $0x160] sm:$0xff] %v2275
  %v2306 = vld [vmem:[#allocation3] sm:$0xff]
  %v2307 = vld [vmem:[#allocation3 + $0x8] sm:$0xff]
  %v2308 = vld [vmem:[#allocation3 + $0x10] sm:$0xff]
  %v2309 = vld [vmem:[#allocation3 + $0x18] sm:$0xff]
  %v2310 = vld [vmem:[#allocation3 + $0x20] sm:$0xff]
  %v2311 = vld [vmem:[#allocation3 + $0x28] sm:$0xff]
  %v2312 = vld [vmem:[#allocation3 + $0x30] sm:$0xff]
  %v2313 = vld [vmem:[#allocation3 + $0x38] sm:$0xff]
  %v2314 = vld [vmem:[#allocation3 + $0x40] sm:$0xff]
  %v2315 = vld [vmem:[#allocation3 + $0x48] sm:$0xff]
  %v2316 = vld [vmem:[#allocation3 + $0x50] sm:$0xff]
  %v2317 = vld [vmem:[#allocation3 + $0x58] sm:$0xff]
  %v2318 = vld [vmem:[#allocation3 + $0x60] sm:$0xff]
  %v2319 = vld [vmem:[#allocation3 + $0x68] sm:$0xff]
  %v2320 = vld [vmem:[#allocation3 + $0x70] sm:$0xff]
  %v2321 = vld [vmem:[#allocation3 + $0x78] sm:$0xff]
  %2338 = vrot.lane.b32.xlu0 %v2306, 11
  %v2339 = vpop.permute.xlu0 %2338
  %2340 = vrot.lane.b32.xlu0 %v2307, 11
  %v2341 = vpop.permute.xlu0 %2340
  %2342 = vrot.lane.b32.xlu0 %v2308, 11
  %v2343 = vpop.permute.xlu0 %2342
  %2344 = vrot.lane.b32.xlu0 %v2309, 11
  %v2345 = vpop.permute.xlu0 %2344
  %2346 = vrot.lane.b32.xlu0 %v2310, 11
  %v2347 = vpop.permute.xlu0 %2346
  %2348 = vrot.lane.b32.xlu0 %v2311, 11
  %v2349 = vpop.permute.xlu0 %2348
  %2350 = vrot.lane.b32.xlu0 %v2312, 11
  %v2351 = vpop.permute.xlu0 %2350
  %2352 = vrot.lane.b32.xlu0 %v2313, 11
  %v2353 = vpop.permute.xlu0 %2352
  %2354 = vrot.lane.b32.xlu0 %v2314, 11
  %v2355 = vpop.permute.xlu0 %2354
  %2356 = vrot.lane.b32.xlu0 %v2315, 11
  %v2357 = vpop.permute.xlu0 %2356
  %2358 = vrot.lane.b32.xlu0 %v2316, 11
  %v2359 = vpop.permute.xlu0 %2358
  %2360 = vrot.lane.b32.xlu0 %v2317, 11
  %v2361 = vpop.permute.xlu0 %2360
  %2362 = vrot.lane.b32.xlu0 %v2318, 11
  %v2363 = vpop.permute.xlu0 %2362
  %2364 = vrot.lane.b32.xlu0 %v2319, 11
  %v2365 = vpop.permute.xlu0 %2364
  %2366 = vrot.lane.b32.xlu0 %v2320, 11
  %v2367 = vpop.permute.xlu0 %2366
  %2368 = vrot.lane.b32.xlu0 %v2321, 11
  %v2369 = vpop.permute.xlu0 %2368
  %v2370 = vsel %vm425, %v2339, %v2341
  %v2371 = vsel %vm425, %v2341, %v2343
  %v2372 = vsel %vm425, %v2343, %v2345
  %v2373 = vsel %vm425, %v2345, %v2347
  %v2374 = vsel %vm425, %v2347, %v2349
  %v2375 = vsel %vm425, %v2349, %v2351
  %v2376 = vsel %vm425, %v2351, %v2353
  %v2377 = vsel %vm425, %v2353, %v2355
  %v2378 = vsel %vm425, %v2355, %v2357
  %v2379 = vsel %vm425, %v2357, %v2359
  %v2380 = vsel %vm425, %v2359, %v2361
  %v2381 = vsel %vm425, %v2361, %v2363
  %v2382 = vsel %vm425, %v2363, %v2365
  %v2383 = vsel %vm425, %v2365, %v2367
  %v2384 = vsel %vm425, %v2367, %v2369
  %2400 = vst [vmem:[#allocation2 + $0x168] sm:$0xff] %v2370
  %2401 = vst [vmem:[#allocation2 + $0x170] sm:$0xff] %v2371
  %2402 = vst [vmem:[#allocation2 + $0x178] sm:$0xff] %v2372
  %2403 = vst [vmem:[#allocation2 + $0x180] sm:$0xff] %v2373
  %2404 = vst [vmem:[#allocation2 + $0x188] sm:$0xff] %v2374
  %2405 = vst [vmem:[#allocation2 + $0x190] sm:$0xff] %v2375
  %2406 = vst [vmem:[#allocation2 + $0x198] sm:$0xff] %v2376
  %2407 = vst [vmem:[#allocation2 + $0x1a0] sm:$0xff] %v2377
  %2408 = vst [vmem:[#allocation2 + $0x1a8] sm:$0xff] %v2378
  %2409 = vst [vmem:[#allocation2 + $0x1b0] sm:$0xff] %v2379
  %2410 = vst [vmem:[#allocation2 + $0x1b8] sm:$0xff] %v2380
  %2411 = vst [vmem:[#allocation2 + $0x1c0] sm:$0xff] %v2381
  %2412 = vst [vmem:[#allocation2 + $0x1c8] sm:$0xff] %v2382
  %2413 = vst [vmem:[#allocation2 + $0x1d0] sm:$0xff] %v2383
  %2414 = vst [vmem:[#allocation2 + $0x1d8] sm:$0xff] %v2384
  %v2415 = vld [vmem:[#allocation3] sm:$0xff]
  %v2416 = vld [vmem:[#allocation3 + $0x8] sm:$0xff]
  %v2417 = vld [vmem:[#allocation3 + $0x10] sm:$0xff]
  %v2418 = vld [vmem:[#allocation3 + $0x18] sm:$0xff]
  %v2419 = vld [vmem:[#allocation3 + $0x20] sm:$0xff]
  %v2420 = vld [vmem:[#allocation3 + $0x28] sm:$0xff]
  %v2421 = vld [vmem:[#allocation3 + $0x30] sm:$0xff]
  %v2422 = vld [vmem:[#allocation3 + $0x38] sm:$0xff]
  %v2423 = vld [vmem:[#allocation3 + $0x40] sm:$0xff]
  %v2424 = vld [vmem:[#allocation3 + $0x48] sm:$0xff]
  %v2425 = vld [vmem:[#allocation3 + $0x50] sm:$0xff]
  %v2426 = vld [vmem:[#allocation3 + $0x58] sm:$0xff]
  %v2427 = vld [vmem:[#allocation3 + $0x60] sm:$0xff]
  %v2428 = vld [vmem:[#allocation3 + $0x68] sm:$0xff]
  %v2429 = vld [vmem:[#allocation3 + $0x70] sm:$0xff]
  %v2430 = vld [vmem:[#allocation3 + $0x78] sm:$0xff]
  %2447 = vrot.lane.b32.xlu0 %v2415, 1
  %v2448 = vpop.permute.xlu0 %2447
  %2449 = vrot.lane.b32.xlu0 %v2416, 1
  %v2450 = vpop.permute.xlu0 %2449
  %2451 = vrot.lane.b32.xlu0 %v2417, 1
  %v2452 = vpop.permute.xlu0 %2451
  %2453 = vrot.lane.b32.xlu0 %v2418, 1
  %v2454 = vpop.permute.xlu0 %2453
  %2455 = vrot.lane.b32.xlu0 %v2419, 1
  %v2456 = vpop.permute.xlu0 %2455
  %2457 = vrot.lane.b32.xlu0 %v2420, 1
  %v2458 = vpop.permute.xlu0 %2457
  %2459 = vrot.lane.b32.xlu0 %v2421, 1
  %v2460 = vpop.permute.xlu0 %2459
  %2461 = vrot.lane.b32.xlu0 %v2422, 1
  %v2462 = vpop.permute.xlu0 %2461
  %2463 = vrot.lane.b32.xlu0 %v2423, 1
  %v2464 = vpop.permute.xlu0 %2463
  %2465 = vrot.lane.b32.xlu0 %v2424, 1
  %v2466 = vpop.permute.xlu0 %2465
  %2467 = vrot.lane.b32.xlu0 %v2425, 1
  %v2468 = vpop.permute.xlu0 %2467
  %2469 = vrot.lane.b32.xlu0 %v2426, 1
  %v2470 = vpop.permute.xlu0 %2469
  %2471 = vrot.lane.b32.xlu0 %v2427, 1
  %v2472 = vpop.permute.xlu0 %2471
  %2473 = vrot.lane.b32.xlu0 %v2428, 1
  %v2474 = vpop.permute.xlu0 %2473
  %2475 = vrot.lane.b32.xlu0 %v2429, 1
  %v2476 = vpop.permute.xlu0 %2475
  %2477 = vrot.lane.b32.xlu0 %v2430, 1
  %v2478 = vpop.permute.xlu0 %2477
  %v2479 = vsel %vm535, %v2448, %v2450
  %v2480 = vsel %vm535, %v2450, %v2452
  %v2481 = vsel %vm535, %v2452, %v2454
  %v2482 = vsel %vm535, %v2454, %v2456
  %v2483 = vsel %vm535, %v2456, %v2458
  %v2484 = vsel %vm535, %v2458, %v2460
  %v2485 = vsel %vm535, %v2460, %v2462
  %v2486 = vsel %vm535, %v2462, %v2464
  %v2487 = vsel %vm535, %v2464, %v2466
  %v2488 = vsel %vm535, %v2466, %v2468
  %v2489 = vsel %vm535, %v2468, %v2470
  %v2490 = vsel %vm535, %v2470, %v2472
  %v2491 = vsel %vm535, %v2472, %v2474
  %v2492 = vsel %vm535, %v2474, %v2476
  %v2493 = vsel %vm535, %v2476, %v2478
  %2509 = vst [vmem:[#allocation2 + $0x1e0] sm:$0xff] %v2479
  %2510 = vst [vmem:[#allocation2 + $0x1e8] sm:$0xff] %v2480
  %2511 = vst [vmem:[#allocation2 + $0x1f0] sm:$0xff] %v2481
  %2512 = vst [vmem:[#allocation2 + $0x1f8] sm:$0xff] %v2482
  %2513 = vst [vmem:[#allocation2 + $0x200] sm:$0xff] %v2483
  %2514 = vst [vmem:[#allocation2 + $0x208] sm:$0xff] %v2484
  %2515 = vst [vmem:[#allocation2 + $0x210] sm:$0xff] %v2485
  %2516 = vst [vmem:[#allocation2 + $0x218] sm:$0xff] %v2486
  %2517 = vst [vmem:[#allocation2 + $0x220] sm:$0xff] %v2487
  %2518 = vst [vmem:[#allocation2 + $0x228] sm:$0xff] %v2488
  %2519 = vst [vmem:[#allocation2 + $0x230] sm:$0xff] %v2489
  %2520 = vst [vmem:[#allocation2 + $0x238] sm:$0xff] %v2490
  %2521 = vst [vmem:[#allocation2 + $0x240] sm:$0xff] %v2491
  %2522 = vst [vmem:[#allocation2 + $0x248] sm:$0xff] %v2492
  %2523 = vst [vmem:[#allocation2 + $0x250] sm:$0xff] %v2493
  %v2524 = vld [vmem:[#allocation3 + $0x8] sm:$0xff]
  %v2525 = vld [vmem:[#allocation3 + $0x10] sm:$0xff]
  %v2526 = vld [vmem:[#allocation3 + $0x18] sm:$0xff]
  %v2527 = vld [vmem:[#allocation3 + $0x20] sm:$0xff]
  %v2528 = vld [vmem:[#allocation3 + $0x28] sm:$0xff]
  %v2529 = vld [vmem:[#allocation3 + $0x30] sm:$0xff]
  %v2530 = vld [vmem:[#allocation3 + $0x38] sm:$0xff]
  %v2531 = vld [vmem:[#allocation3 + $0x40] sm:$0xff]
  %v2532 = vld [vmem:[#allocation3 + $0x48] sm:$0xff]
  %v2533 = vld [vmem:[#allocation3 + $0x50] sm:$0xff]
  %v2534 = vld [vmem:[#allocation3 + $0x58] sm:$0xff]
  %v2535 = vld [vmem:[#allocation3 + $0x60] sm:$0xff]
  %v2536 = vld [vmem:[#allocation3 + $0x68] sm:$0xff]
  %v2537 = vld [vmem:[#allocation3 + $0x70] sm:$0xff]
  %v2538 = vld [vmem:[#allocation3 + $0x78] sm:$0xff]
  %v2539 = vld [vmem:[#allocation3 + $0x80] sm:$0xff]
  %2556 = vrot.lane.b32.xlu0 %v2524, 119
  %v2557 = vpop.permute.xlu0 %2556
  %2558 = vrot.lane.b32.xlu0 %v2525, 119
  %v2559 = vpop.permute.xlu0 %2558
  %2560 = vrot.lane.b32.xlu0 %v2526, 119
  %v2561 = vpop.permute.xlu0 %2560
  %2562 = vrot.lane.b32.xlu0 %v2527, 119
  %v2563 = vpop.permute.xlu0 %2562
  %2564 = vrot.lane.b32.xlu0 %v2528, 119
  %v2565 = vpop.permute.xlu0 %2564
  %2566 = vrot.lane.b32.xlu0 %v2529, 119
  %v2567 = vpop.permute.xlu0 %2566
  %2568 = vrot.lane.b32.xlu0 %v2530, 119
  %v2569 = vpop.permute.xlu0 %2568
  %2570 = vrot.lane.b32.xlu0 %v2531, 119
  %v2571 = vpop.permute.xlu0 %2570
  %2572 = vrot.lane.b32.xlu0 %v2532, 119
  %v2573 = vpop.permute.xlu0 %2572
  %2574 = vrot.lane.b32.xlu0 %v2533, 119
  %v2575 = vpop.permute.xlu0 %2574
  %2576 = vrot.lane.b32.xlu0 %v2534, 119
  %v2577 = vpop.permute.xlu0 %2576
  %2578 = vrot.lane.b32.xlu0 %v2535, 119
  %v2579 = vpop.permute.xlu0 %2578
  %2580 = vrot.lane.b32.xlu0 %v2536, 119
  %v2581 = vpop.permute.xlu0 %2580
  %2582 = vrot.lane.b32.xlu0 %v2537, 119
  %v2583 = vpop.permute.xlu0 %2582
  %2584 = vrot.lane.b32.xlu0 %v2538, 119
  %v2585 = vpop.permute.xlu0 %2584
  %2586 = vrot.lane.b32.xlu0 %v2539, 119
  %v2587 = vpop.permute.xlu0 %2586
  %v2588 = vsel %vm645, %v2557, %v2559
  %v2589 = vsel %vm645, %v2559, %v2561
  %v2590 = vsel %vm645, %v2561, %v2563
  %v2591 = vsel %vm645, %v2563, %v2565
  %v2592 = vsel %vm645, %v2565, %v2567
  %v2593 = vsel %vm645, %v2567, %v2569
  %v2594 = vsel %vm645, %v2569, %v2571
  %v2595 = vsel %vm645, %v2571, %v2573
  %v2596 = vsel %vm645, %v2573, %v2575
  %v2597 = vsel %vm645, %v2575, %v2577
  %v2598 = vsel %vm645, %v2577, %v2579
  %v2599 = vsel %vm645, %v2579, %v2581
  %v2600 = vsel %vm645, %v2581, %v2583
  %v2601 = vsel %vm645, %v2583, %v2585
  %v2602 = vsel %vm645, %v2585, %v2587
  %2618 = vst [vmem:[#allocation2 + $0x258] sm:$0xff] %v2588
  %2619 = vst [vmem:[#allocation2 + $0x260] sm:$0xff] %v2589
  %2620 = vst [vmem:[#allocation2 + $0x268] sm:$0xff] %v2590
  %2621 = vst [vmem:[#allocation2 + $0x270] sm:$0xff] %v2591
  %2622 = vst [vmem:[#allocation2 + $0x278] sm:$0xff] %v2592
  %2623 = vst [vmem:[#allocation2 + $0x280] sm:$0xff] %v2593
  %2624 = vst [vmem:[#allocation2 + $0x288] sm:$0xff] %v2594
  %2625 = vst [vmem:[#allocation2 + $0x290] sm:$0xff] %v2595
  %2626 = vst [vmem:[#allocation2 + $0x298] sm:$0xff] %v2596
  %2627 = vst [vmem:[#allocation2 + $0x2a0] sm:$0xff] %v2597
  %2628 = vst [vmem:[#allocation2 + $0x2a8] sm:$0xff] %v2598
  %2629 = vst [vmem:[#allocation2 + $0x2b0] sm:$0xff] %v2599
  %2630 = vst [vmem:[#allocation2 + $0x2b8] sm:$0xff] %v2600
  %2631 = vst [vmem:[#allocation2 + $0x2c0] sm:$0xff] %v2601
  %2632 = vst [vmem:[#allocation2 + $0x2c8] sm:$0xff] %v2602
  %v2633 = vld [vmem:[#allocation3 + $0x8] sm:$0xff]
  %v2634 = vld [vmem:[#allocation3 + $0x10] sm:$0xff]
  %v2635 = vld [vmem:[#allocation3 + $0x18] sm:$0xff]
  %v2636 = vld [vmem:[#allocation3 + $0x20] sm:$0xff]
  %v2637 = vld [vmem:[#allocation3 + $0x28] sm:$0xff]
  %v2638 = vld [vmem:[#allocation3 + $0x30] sm:$0xff]
  %v2639 = vld [vmem:[#allocation3 + $0x38] sm:$0xff]
  %v2640 = vld [vmem:[#allocation3 + $0x40] sm:$0xff]
  %v2641 = vld [vmem:[#allocation3 + $0x48] sm:$0xff]
  %v2642 = vld [vmem:[#allocation3 + $0x50] sm:$0xff]
  %v2643 = vld [vmem:[#allocation3 + $0x58] sm:$0xff]
  %v2644 = vld [vmem:[#allocation3 + $0x60] sm:$0xff]
  %v2645 = vld [vmem:[#allocation3 + $0x68] sm:$0xff]
  %v2646 = vld [vmem:[#allocation3 + $0x70] sm:$0xff]
  %v2647 = vld [vmem:[#allocation3 + $0x78] sm:$0xff]
  %v2648 = vld [vmem:[#allocation3 + $0x80] sm:$0xff]
  %2665 = vrot.lane.b32.xlu0 %v2633, 39
  %v2666 = vpop.permute.xlu0 %2665
  %2667 = vrot.lane.b32.xlu0 %v2634, 39
  %v2668 = vpop.permute.xlu0 %2667
  %2669 = vrot.lane.b32.xlu0 %v2635, 39
  %v2670 = vpop.permute.xlu0 %2669
  %2671 = vrot.lane.b32.xlu0 %v2636, 39
  %v2672 = vpop.permute.xlu0 %2671
  %2673 = vrot.lane.b32.xlu0 %v2637, 39
  %v2674 = vpop.permute.xlu0 %2673
  %2675 = vrot.lane.b32.xlu0 %v2638, 39
  %v2676 = vpop.permute.xlu0 %2675
  %2677 = vrot.lane.b32.xlu0 %v2639, 39
  %v2678 = vpop.permute.xlu0 %2677
  %2679 = vrot.lane.b32.xlu0 %v2640, 39
  %v2680 = vpop.permute.xlu0 %2679
  %2681 = vrot.lane.b32.xlu0 %v2641, 39
  %v2682 = vpop.permute.xlu0 %2681
  %2683 = vrot.lane.b32.xlu0 %v2642, 39
  %v2684 = vpop.permute.xlu0 %2683
  %2685 = vrot.lane.b32.xlu0 %v2643, 39
  %v2686 = vpop.permute.xlu0 %2685
  %2687 = vrot.lane.b32.xlu0 %v2644, 39
  %v2688 = vpop.permute.xlu0 %2687
  %2689 = vrot.lane.b32.xlu0 %v2645, 39
  %v2690 = vpop.permute.xlu0 %2689
  %2691 = vrot.lane.b32.xlu0 %v2646, 39
  %v2692 = vpop.permute.xlu0 %2691
  %2693 = vrot.lane.b32.xlu0 %v2647, 39
  %v2694 = vpop.permute.xlu0 %2693
  %2695 = vrot.lane.b32.xlu0 %v2648, 39
  %v2696 = vpop.permute.xlu0 %2695
  %v2697 = vsel %vm755, %v2666, %v2668
  %v2698 = vsel %vm755, %v2668, %v2670
  %v2699 = vsel %vm755, %v2670, %v2672
  %v2700 = vsel %vm755, %v2672, %v2674
  %v2701 = vsel %vm755, %v2674, %v2676
  %v2702 = vsel %vm755, %v2676, %v2678
  %v2703 = vsel %vm755, %v2678, %v2680
  %v2704 = vsel %vm755, %v2680, %v2682
  %v2705 = vsel %vm755, %v2682, %v2684
  %v2706 = vsel %vm755, %v2684, %v2686
  %v2707 = vsel %vm755, %v2686, %v2688
  %v2708 = vsel %vm755, %v2688, %v2690
  %v2709 = vsel %vm755, %v2690, %v2692
  %v2710 = vsel %vm755, %v2692, %v2694
  %v2711 = vsel %vm755, %v2694, %v2696
  %2727 = vst [vmem:[#allocation2 + $0x2d0] sm:$0xff] %v2697
  %2728 = vst [vmem:[#allocation2 + $0x2d8] sm:$0xff] %v2698
  %2729 = vst [vmem:[#allocation2 + $0x2e0] sm:$0xff] %v2699
  %2730 = vst [vmem:[#allocation2 + $0x2e8] sm:$0xff] %v2700
  %2731 = vst [vmem:[#allocation2 + $0x2f0] sm:$0xff] %v2701
  %2732 = vst [vmem:[#allocation2 + $0x2f8] sm:$0xff] %v2702
  %2733 = vst [vmem:[#allocation2 + $0x300] sm:$0xff] %v2703
  %2734 = vst [vmem:[#allocation2 + $0x308] sm:$0xff] %v2704
  %2735 = vst [vmem:[#allocation2 + $0x310] sm:$0xff] %v2705
  %2736 = vst [vmem:[#allocation2 + $0x318] sm:$0xff] %v2706
  %2737 = vst [vmem:[#allocation2 + $0x320] sm:$0xff] %v2707
  %2738 = vst [vmem:[#allocation2 + $0x328] sm:$0xff] %v2708
  %2739 = vst [vmem:[#allocation2 + $0x330] sm:$0xff] %v2709
  %2740 = vst [vmem:[#allocation2 + $0x338] sm:$0xff] %v2710
  %2741 = vst [vmem:[#allocation2 + $0x340] sm:$0xff] %v2711
  %v2742 = vld [vmem:[#allocation3 + $0x8] sm:$0xff]
  %v2743 = vld [vmem:[#allocation3 + $0x10] sm:$0xff]
  %v2744 = vld [vmem:[#allocation3 + $0x18] sm:$0xff]
  %v2745 = vld [vmem:[#allocation3 + $0x20] sm:$0xff]
  %v2746 = vld [vmem:[#allocation3 + $0x28] sm:$0xff]
  %v2747 = vld [vmem:[#allocation3 + $0x30] sm:$0xff]
  %v2748 = vld [vmem:[#allocation3 + $0x38] sm:$0xff]
  %v2749 = vld [vmem:[#allocation3 + $0x40] sm:$0xff]
  %v2750 = vld [vmem:[#allocation3 + $0x48] sm:$0xff]
  %v2751 = vld [vmem:[#allocation3 + $0x50] sm:$0xff]
  %v2752 = vld [vmem:[#allocation3 + $0x58] sm:$0xff]
  %v2753 = vld [vmem:[#allocation3 + $0x60] sm:$0xff]
  %v2754 = vld [vmem:[#allocation3 + $0x68] sm:$0xff]
  %v2755 = vld [vmem:[#allocation3 + $0x70] sm:$0xff]
  %v2756 = vld [vmem:[#allocation3 + $0x78] sm:$0xff]
  %v2757 = vld [vmem:[#allocation3 + $0x80] sm:$0xff]
  %2774 = vrot.lane.b32.xlu0 %v2742, 29
  %v2775 = vpop.permute.xlu0 %2774
  %2776 = vrot.lane.b32.xlu0 %v2743, 29
  %v2777 = vpop.permute.xlu0 %2776
  %2778 = vrot.lane.b32.xlu0 %v2744, 29
  %v2779 = vpop.permute.xlu0 %2778
  %2780 = vrot.lane.b32.xlu0 %v2745, 29
  %v2781 = vpop.permute.xlu0 %2780
  %2782 = vrot.lane.b32.xlu0 %v2746, 29
  %v2783 = vpop.permute.xlu0 %2782
  %2784 = vrot.lane.b32.xlu0 %v2747, 29
  %v2785 = vpop.permute.xlu0 %2784
  %2786 = vrot.lane.b32.xlu0 %v2748, 29
  %v2787 = vpop.permute.xlu0 %2786
  %2788 = vrot.lane.b32.xlu0 %v2749, 29
  %v2789 = vpop.permute.xlu0 %2788
  %2790 = vrot.lane.b32.xlu0 %v2750, 29
  %v2791 = vpop.permute.xlu0 %2790
  %2792 = vrot.lane.b32.xlu0 %v2751, 29
  %v2793 = vpop.permute.xlu0 %2792
  %2794 = vrot.lane.b32.xlu0 %v2752, 29
  %v2795 = vpop.permute.xlu0 %2794
  %2796 = vrot.lane.b32.xlu0 %v2753, 29
  %v2797 = vpop.permute.xlu0 %2796
  %2798 = vrot.lane.b32.xlu0 %v2754, 29
  %v2799 = vpop.permute.xlu0 %2798
  %2800 = vrot.lane.b32.xlu0 %v2755, 29
  %v2801 = vpop.permute.xlu0 %2800
  %2802 = vrot.lane.b32.xlu0 %v2756, 29
  %v2803 = vpop.permute.xlu0 %2802
  %2804 = vrot.lane.b32.xlu0 %v2757, 29
  %v2805 = vpop.permute.xlu0 %2804
  %v2806 = vsel %vm865, %v2775, %v2777
  %v2807 = vsel %vm865, %v2777, %v2779
  %v2808 = vsel %vm865, %v2779, %v2781
  %v2809 = vsel %vm865, %v2781, %v2783
  %v2810 = vsel %vm865, %v2783, %v2785
  %v2811 = vsel %vm865, %v2785, %v2787
  %v2812 = vsel %vm865, %v2787, %v2789
  %v2813 = vsel %vm865, %v2789, %v2791
  %v2814 = vsel %vm865, %v2791, %v2793
  %v2815 = vsel %vm865, %v2793, %v2795
  %v2816 = vsel %vm865, %v2795, %v2797
  %v2817 = vsel %vm865, %v2797, %v2799
  %v2818 = vsel %vm865, %v2799, %v2801
  %v2819 = vsel %vm865, %v2801, %v2803
  %v2820 = vsel %vm865, %v2803, %v2805
  %2836 = vst [vmem:[#allocation2 + $0x348] sm:$0xff] %v2806
  %2837 = vst [vmem:[#allocation2 + $0x350] sm:$0xff] %v2807
  %2838 = vst [vmem:[#allocation2 + $0x358] sm:$0xff] %v2808
  %2839 = vst [vmem:[#allocation2 + $0x360] sm:$0xff] %v2809
  %2840 = vst [vmem:[#allocation2 + $0x368] sm:$0xff] %v2810
  %2841 = vst [vmem:[#allocation2 + $0x370] sm:$0xff] %v2811
  %2842 = vst [vmem:[#allocation2 + $0x378] sm:$0xff] %v2812
  %2843 = vst [vmem:[#allocation2 + $0x380] sm:$0xff] %v2813
  %2844 = vst [vmem:[#allocation2 + $0x388] sm:$0xff] %v2814
  %2845 = vst [vmem:[#allocation2 + $0x390] sm:$0xff] %v2815
  %2846 = vst [vmem:[#allocation2 + $0x398] sm:$0xff] %v2816
  %2847 = vst [vmem:[#allocation2 + $0x3a0] sm:$0xff] %v2817
  %2848 = vst [vmem:[#allocation2 + $0x3a8] sm:$0xff] %v2818
  %2849 = vst [vmem:[#allocation2 + $0x3b0] sm:$0xff] %v2819
  %2850 = vst [vmem:[#allocation2 + $0x3b8] sm:$0xff] %v2820
  %v2851 = vld [vmem:[#allocation3 + $0x8] sm:$0xff]
  %v2852 = vld [vmem:[#allocation3 + $0x10] sm:$0xff]
  %v2853 = vld [vmem:[#allocation3 + $0x18] sm:$0xff]
  %v2854 = vld [vmem:[#allocation3 + $0x20] sm:$0xff]
  %v2855 = vld [vmem:[#allocation3 + $0x28] sm:$0xff]
  %v2856 = vld [vmem:[#allocation3 + $0x30] sm:$0xff]
  %v2857 = vld [vmem:[#allocation3 + $0x38] sm:$0xff]
  %v2858 = vld [vmem:[#allocation3 + $0x40] sm:$0xff]
  %v2859 = vld [vmem:[#allocation3 + $0x48] sm:$0xff]
  %v2860 = vld [vmem:[#allocation3 + $0x50] sm:$0xff]
  %v2861 = vld [vmem:[#allocation3 + $0x58] sm:$0xff]
  %v2862 = vld [vmem:[#allocation3 + $0x60] sm:$0xff]
  %v2863 = vld [vmem:[#allocation3 + $0x68] sm:$0xff]
  %v2864 = vld [vmem:[#allocation3 + $0x70] sm:$0xff]
  %v2865 = vld [vmem:[#allocation3 + $0x78] sm:$0xff]
  %v2866 = vld [vmem:[#allocation3 + $0x80] sm:$0xff]
  %2883 = vrot.lane.b32.xlu0 %v2851, 19
  %v2884 = vpop.permute.xlu0 %2883
  %2885 = vrot.lane.b32.xlu0 %v2852, 19
  %v2886 = vpop.permute.xlu0 %2885
  %2887 = vrot.lane.b32.xlu0 %v2853, 19
  %v2888 = vpop.permute.xlu0 %2887
  %2889 = vrot.lane.b32.xlu0 %v2854, 19
  %v2890 = vpop.permute.xlu0 %2889
  %2891 = vrot.lane.b32.xlu0 %v2855, 19
  %v2892 = vpop.permute.xlu0 %2891
  %2893 = vrot.lane.b32.xlu0 %v2856, 19
  %v2894 = vpop.permute.xlu0 %2893
  %2895 = vrot.lane.b32.xlu0 %v2857, 19
  %v2896 = vpop.permute.xlu0 %2895
  %2897 = vrot.lane.b32.xlu0 %v2858, 19
  %v2898 = vpop.permute.xlu0 %2897
  %2899 = vrot.lane.b32.xlu0 %v2859, 19
  %v2900 = vpop.permute.xlu0 %2899
  %2901 = vrot.lane.b32.xlu0 %v2860, 19
  %v2902 = vpop.permute.xlu0 %2901
  %2903 = vrot.lane.b32.xlu0 %v2861, 19
  %v2904 = vpop.permute.xlu0 %2903
  %2905 = vrot.lane.b32.xlu0 %v2862, 19
  %v2906 = vpop.permute.xlu0 %2905
  %2907 = vrot.lane.b32.xlu0 %v2863, 19
  %v2908 = vpop.permute.xlu0 %2907
  %2909 = vrot.lane.b32.xlu0 %v2864, 19
  %v2910 = vpop.permute.xlu0 %2909
  %2911 = vrot.lane.b32.xlu0 %v2865, 19
  %v2912 = vpop.permute.xlu0 %2911
  %2913 = vrot.lane.b32.xlu0 %v2866, 19
  %v2914 = vpop.permute.xlu0 %2913
  %v2915 = vsel %vm975, %v2884, %v2886
  %v2916 = vsel %vm975, %v2886, %v2888
  %v2917 = vsel %vm975, %v2888, %v2890
  %v2918 = vsel %vm975, %v2890, %v2892
  %v2919 = vsel %vm975, %v2892, %v2894
  %v2920 = vsel %vm975, %v2894, %v2896
  %v2921 = vsel %vm975, %v2896, %v2898
  %v2922 = vsel %vm975, %v2898, %v2900
  %v2923 = vsel %vm975, %v2900, %v2902
  %v2924 = vsel %vm975, %v2902, %v2904
  %v2925 = vsel %vm975, %v2904, %v2906
  %v2926 = vsel %vm975, %v2906, %v2908
  %v2927 = vsel %vm975, %v2908, %v2910
  %v2928 = vsel %vm975, %v2910, %v2912
  %v2929 = vsel %vm975, %v2912, %v2914
  %2945 = vst [vmem:[#allocation2 + $0x3c0] sm:$0xff] %v2915
  %2946 = vst [vmem:[#allocation2 + $0x3c8] sm:$0xff] %v2916
  %2947 = vst [vmem:[#allocation2 + $0x3d0] sm:$0xff] %v2917
  %2948 = vst [vmem:[#allocation2 + $0x3d8] sm:$0xff] %v2918
  %2949 = vst [vmem:[#allocation2 + $0x3e0] sm:$0xff] %v2919
  %2950 = vst [vmem:[#allocation2 + $0x3e8] sm:$0xff] %v2920
  %2951 = vst [vmem:[#allocation2 + $0x3f0] sm:$0xff] %v2921
  %2952 = vst [vmem:[#allocation2 + $0x3f8] sm:$0xff] %v2922
  %2953 = vst [vmem:[#allocation2 + $0x400] sm:$0xff] %v2923
  %2954 = vst [vmem:[#allocation2 + $0x408] sm:$0xff] %v2924
  %2955 = vst [vmem:[#allocation2 + $0x410] sm:$0xff] %v2925
  %2956 = vst [vmem:[#allocation2 + $0x418] sm:$0xff] %v2926
  %2957 = vst [vmem:[#allocation2 + $0x420] sm:$0xff] %v2927
  %2958 = vst [vmem:[#allocation2 + $0x428] sm:$0xff] %v2928
  %2959 = vst [vmem:[#allocation2 + $0x430] sm:$0xff] %v2929
  %v2960 = vld [vmem:[%s5] sm:$0xff]
  %v2961 = vld [vmem:[%s5 + $0x8] sm:$0xff]
  %v2962 = vld [vmem:[%s5 + $0x10] sm:$0xff]
  %v2963 = vld [vmem:[#allocation2] sm:$0xff]
  %v2964 = vld [vmem:[#allocation2 + $0x8] sm:$0xff]
  %v2965 = vld [vmem:[#allocation2 + $0x10] sm:$0xff]
  %v2966 = vld [vmem:[#allocation2 + $0x18] sm:$0xff]
  %v2967 = vld [vmem:[#allocation2 + $0x20] sm:$0xff]
  %v2968 = vld [vmem:[#allocation2 + $0x28] sm:$0xff]
  %v2969 = vld [vmem:[#allocation2 + $0x30] sm:$0xff]
  %v2970 = vld [vmem:[#allocation2 + $0x38] sm:$0xff]
  %v2971 = vld [vmem:[#allocation2 + $0x40] sm:$0xff]
  %v2972 = vld [vmem:[#allocation2 + $0x48] sm:$0xff]
  %v2973 = vld [vmem:[#allocation2 + $0x50] sm:$0xff]
  %v2974 = vld [vmem:[#allocation2 + $0x58] sm:$0xff]
  %v2975 = vld [vmem:[#allocation2 + $0x60] sm:$0xff]
  %v2976 = vld [vmem:[#allocation2 + $0x68] sm:$0xff]
  %v2977 = vld [vmem:[#allocation2 + $0x70] sm:$0xff]
  %v2978 = vld [vmem:[#allocation2 + $0x78] sm:$0xff]
  %v2979 = vld [vmem:[#allocation2 + $0x80] sm:$0xff]
  %v2980 = vld [vmem:[#allocation2 + $0x88] sm:$0xff]
  %v2981 = vld [vmem:[#allocation2 + $0x90] sm:$0xff]
  %v2982 = vld [vmem:[#allocation2 + $0x98] sm:$0xff]
  %v2983 = vld [vmem:[#allocation2 + $0xa0] sm:$0xff]
  %v2984 = vld [vmem:[#allocation2 + $0xa8] sm:$0xff]
  %v2985 = vld [vmem:[#allocation2 + $0xb0] sm:$0xff]
  %v2986 = vld [vmem:[#allocation2 + $0xb8] sm:$0xff]
  %v2987 = vld [vmem:[#allocation2 + $0xc0] sm:$0xff]
  %v2988 = vld [vmem:[#allocation2 + $0xc8] sm:$0xff]
  %v2989 = vld [vmem:[#allocation2 + $0xd0] sm:$0xff]
  %v2990 = vld [vmem:[#allocation2 + $0xd8] sm:$0xff]
  %v2991 = vld [vmem:[#allocation2 + $0xe0] sm:$0xff]
  %v2992 = vld [vmem:[#allocation2 + $0xe8] sm:$0xff]
  %v2993 = vld [vmem:[#allocation2 + $0xf0] sm:$0xff]
  %v2994 = vld [vmem:[#allocation2 + $0xf8] sm:$0xff]
  %v2995 = vld [vmem:[#allocation2 + $0x100] sm:$0xff]
  %v2996 = vld [vmem:[#allocation2 + $0x108] sm:$0xff]
  %v2997 = vld [vmem:[#allocation2 + $0x110] sm:$0xff]
  %v2998 = vld [vmem:[#allocation2 + $0x118] sm:$0xff]
  %v2999 = vld [vmem:[#allocation2 + $0x120] sm:$0xff]
  %v3000 = vld [vmem:[#allocation2 + $0x128] sm:$0xff]
  %v3001 = vld [vmem:[#allocation2 + $0x130] sm:$0xff]
  %v3002 = vld [vmem:[#allocation2 + $0x138] sm:$0xff]
  %v3003 = vld [vmem:[#allocation2 + $0x140] sm:$0xff]
  %v3004 = vld [vmem:[#allocation2 + $0x148] sm:$0xff]
  %v3005 = vld [vmem:[#allocation2 + $0x150] sm:$0xff]
  %v3006 = vld [vmem:[#allocation2 + $0x158] sm:$0xff]
  %v3007 = vld [vmem:[#allocation2 + $0x160] sm:$0xff]
  %v3008 = vld [vmem:[#allocation2 + $0x168] sm:$0xff]
  %v3009 = vld [vmem:[#allocation2 + $0x170] sm:$0xff]
  %v3010 = vld [vmem:[#allocation2 + $0x178] sm:$0xff]
  %v3011 = vld [vmem:[#allocation2 + $0x180] sm:$0xff]
  %v3012 = vld [vmem:[#allocation2 + $0x188] sm:$0xff]
  %v3013 = vld [vmem:[#allocation2 + $0x190] sm:$0xff]
  %v3014 = vld [vmem:[#allocation2 + $0x198] sm:$0xff]
  %v3015 = vld [vmem:[#allocation2 + $0x1a0] sm:$0xff]
  %v3016 = vld [vmem:[#allocation2 + $0x1a8] sm:$0xff]
  %v3017 = vld [vmem:[#allocation2 + $0x1b0] sm:$0xff]
  %v3018 = vld [vmem:[#allocation2 + $0x1b8] sm:$0xff]
  %v3019 = vld [vmem:[#allocation2 + $0x1c0] sm:$0xff]
  %v3020 = vld [vmem:[#allocation2 + $0x1c8] sm:$0xff]
  %v3021 = vld [vmem:[#allocation2 + $0x1d0] sm:$0xff]
  %v3022 = vld [vmem:[#allocation2 + $0x1d8] sm:$0xff]
  %v3023 = vld [vmem:[#allocation2 + $0x1e0] sm:$0xff]
  %v3024 = vld [vmem:[#allocation2 + $0x1e8] sm:$0xff]
  %v3025 = vld [vmem:[#allocation2 + $0x1f0] sm:$0xff]
  %v3026 = vld [vmem:[#allocation2 + $0x1f8] sm:$0xff]
  %v3027 = vld [vmem:[#allocation2 + $0x200] sm:$0xff]
  %v3028 = vld [vmem:[#allocation2 + $0x208] sm:$0xff]
  %v3029 = vld [vmem:[#allocation2 + $0x210] sm:$0xff]
  %v3030 = vld [vmem:[#allocation2 + $0x218] sm:$0xff]
  %v3031 = vld [vmem:[#allocation2 + $0x220] sm:$0xff]
  %v3032 = vld [vmem:[#allocation2 + $0x228] sm:$0xff]
  %v3033 = vld [vmem:[#allocation2 + $0x230] sm:$0xff]
  %v3034 = vld [vmem:[#allocation2 + $0x238] sm:$0xff]
  %v3035 = vld [vmem:[#allocation2 + $0x240] sm:$0xff]
  %v3036 = vld [vmem:[#allocation2 + $0x248] sm:$0xff]
  %v3037 = vld [vmem:[#allocation2 + $0x250] sm:$0xff]
  %v3038 = vld [vmem:[#allocation2 + $0x258] sm:$0xff]
  %v3039 = vld [vmem:[#allocation2 + $0x260] sm:$0xff]
  %v3040 = vld [vmem:[#allocation2 + $0x268] sm:$0xff]
  %v3041 = vld [vmem:[#allocation2 + $0x270] sm:$0xff]
  %v3042 = vld [vmem:[#allocation2 + $0x278] sm:$0xff]
  %v3043 = vld [vmem:[#allocation2 + $0x280] sm:$0xff]
  %v3044 = vld [vmem:[#allocation2 + $0x288] sm:$0xff]
  %v3045 = vld [vmem:[#allocation2 + $0x290] sm:$0xff]
  %v3046 = vld [vmem:[#allocation2 + $0x298] sm:$0xff]
  %v3047 = vld [vmem:[#allocation2 + $0x2a0] sm:$0xff]
  %v3048 = vld [vmem:[#allocation2 + $0x2a8] sm:$0xff]
  %v3049 = vld [vmem:[#allocation2 + $0x2b0] sm:$0xff]
  %v3050 = vld [vmem:[#allocation2 + $0x2b8] sm:$0xff]
  %v3051 = vld [vmem:[#allocation2 + $0x2c0] sm:$0xff]
  %v3052 = vld [vmem:[#allocation2 + $0x2c8] sm:$0xff]
  %v3053 = vld [vmem:[#allocation2 + $0x2d0] sm:$0xff]
  %v3054 = vld [vmem:[#allocation2 + $0x2d8] sm:$0xff]
  %v3055 = vld [vmem:[#allocation2 + $0x2e0] sm:$0xff]
  %v3056 = vld [vmem:[#allocation2 + $0x2e8] sm:$0xff]
  %v3057 = vld [vmem:[#allocation2 + $0x2f0] sm:$0xff]
  %v3058 = vld [vmem:[#allocation2 + $0x2f8] sm:$0xff]
  %v3059 = vld [vmem:[#allocation2 + $0x300] sm:$0xff]
  %v3060 = vld [vmem:[#allocation2 + $0x308] sm:$0xff]
  %v3061 = vld [vmem:[#allocation2 + $0x310] sm:$0xff]
  %v3062 = vld [vmem:[#allocation2 + $0x318] sm:$0xff]
  %v3063 = vld [vmem:[#allocation2 + $0x320] sm:$0xff]
  %v3064 = vld [vmem:[#allocation2 + $0x328] sm:$0xff]
  %v3065 = vld [vmem:[#allocation2 + $0x330] sm:$0xff]
  %v3066 = vld [vmem:[#allocation2 + $0x338] sm:$0xff]
  %v3067 = vld [vmem:[#allocation2 + $0x340] sm:$0xff]
  %v3068 = vld [vmem:[#allocation2 + $0x348] sm:$0xff]
  %v3069 = vld [vmem:[#allocation2 + $0x350] sm:$0xff]
  %v3070 = vld [vmem:[#allocation2 + $0x358] sm:$0xff]
  %v3071 = vld [vmem:[#allocation2 + $0x360] sm:$0xff]
  %v3072 = vld [vmem:[#allocation2 + $0x368] sm:$0xff]
  %v3073 = vld [vmem:[#allocation2 + $0x370] sm:$0xff]
  %v3074 = vld [vmem:[#allocation2 + $0x378] sm:$0xff]
  %v3075 = vld [vmem:[#allocation2 + $0x380] sm:$0xff]
  %v3076 = vld [vmem:[#allocation2 + $0x388] sm:$0xff]
  %v3077 = vld [vmem:[#allocation2 + $0x390] sm:$0xff]
  %v3078 = vld [vmem:[#allocation2 + $0x398] sm:$0xff]
  %v3079 = vld [vmem:[#allocation2 + $0x3a0] sm:$0xff]
  %v3080 = vld [vmem:[#allocation2 + $0x3a8] sm:$0xff]
  %v3081 = vld [vmem:[#allocation2 + $0x3b0] sm:$0xff]
  %v3082 = vld [vmem:[#allocation2 + $0x3b8] sm:$0xff]
  %v3083 = vld [vmem:[#allocation2 + $0x3c0] sm:$0xff]
  %v3084 = vld [vmem:[#allocation2 + $0x3c8] sm:$0xff]
  %v3085 = vld [vmem:[#allocation2 + $0x3d0] sm:$0xff]
  %v3086 = vld [vmem:[#allocation2 + $0x3d8] sm:$0xff]
  %v3087 = vld [vmem:[#allocation2 + $0x3e0] sm:$0xff]
  %v3088 = vld [vmem:[#allocation2 + $0x3e8] sm:$0xff]
  %v3089 = vld [vmem:[#allocation2 + $0x3f0] sm:$0xff]
  %v3090 = vld [vmem:[#allocation2 + $0x3f8] sm:$0xff]
  %v3091 = vld [vmem:[#allocation2 + $0x400] sm:$0xff]
  %v3092 = vld [vmem:[#allocation2 + $0x408] sm:$0xff]
  %v3093 = vld [vmem:[#allocation2 + $0x410] sm:$0xff]
  %v3094 = vld [vmem:[#allocation2 + $0x418] sm:$0xff]
  %v3095 = vld [vmem:[#allocation2 + $0x420] sm:$0xff]
  %v3096 = vld [vmem:[#allocation2 + $0x428] sm:$0xff]
  %v3097 = vld [vmem:[#allocation2 + $0x430] sm:$0xff]
  %v3099 = vsel %vm1159, %v2960, 0
  %v3102 = vsel %vm1159, %v2961, 0
  %v3105 = vsel %vm1159, %v2962, 0
  %3107 = vmatpush.msra.mxu0 0.0
  %3108 = vmatpush.msra.mxu0 0.0
  %3109 = vmatpush.msra.mxu0 0.0
  %3110 = vmatpush.msra.mxu0 0.0
  %3111 = vmatpush.msra.mxu0 0.0
  %3112 = vmatpush.msra.mxu0 0.0
  %3113 = vmatpush.msra.mxu0 0.0
  %3114 = vmatpush.msra.mxu0 %v3083
  %3115 = vmatpush.msra.mxu0 %v3068
  %3116 = vmatpush.msra.mxu0 %v3053
  %3117 = vmatpush.msra.mxu0 %v3038
  %3118 = vmatpush.msra.mxu0 %v3023
  %3119 = vmatpush.msra.mxu0 %v3008
  %3120 = vmatpush.msra.mxu0 %v2993
  %3121 = vmatpush.msra.mxu0 %v2978
  %3122 = vmatpush.msra.mxu0 %v2963
  %3123 = vmatmul.f32.gmra.mxu0 %v3099
  %v3124 = vpop.f32.mrf.mxu0
  %v3125 = vadd.f32 0.0, %v3124
  %3126 = vmatmul.f32.gmra.mxu0 %v3102
  %v3127 = vpop.f32.mrf.mxu0
  %v3128 = vadd.f32 0.0, %v3127
  %3129 = vmatmul.f32.gmra.mxu0 %v3105
  %v3130 = vpop.f32.mrf.mxu0
  %v3131 = vadd.f32 0.0, %v3130
  %3132 = vdwg.mxu0
  %3133 = vmatpush.msra.mxu0 0.0
  %3134 = vmatpush.msra.mxu0 0.0
  %3135 = vmatpush.msra.mxu0 0.0
  %3136 = vmatpush.msra.mxu0 0.0
  %3137 = vmatpush.msra.mxu0 0.0
  %3138 = vmatpush.msra.mxu0 0.0
  %3139 = vmatpush.msra.mxu0 0.0
  %3140 = vmatpush.msra.mxu0 %v3084
  %3141 = vmatpush.msra.mxu0 %v3069
  %3142 = vmatpush.msra.mxu0 %v3054
  %3143 = vmatpush.msra.mxu0 %v3039
  %3144 = vmatpush.msra.mxu0 %v3024
  %3145 = vmatpush.msra.mxu0 %v3009
  %3146 = vmatpush.msra.mxu0 %v2994
  %3147 = vmatpush.msra.mxu0 %v2979
  %3148 = vmatpush.msra.mxu0 %v2964
  %3149 = vmatmul.f32.gmra.mxu0 %v3099
  %v3150 = vpop.f32.mrf.mxu0
  %v3151 = vadd.f32 0.0, %v3150
  %3152 = vmatmul.f32.gmra.mxu0 %v3102
  %v3153 = vpop.f32.mrf.mxu0
  %v3154 = vadd.f32 0.0, %v3153
  %3155 = vmatmul.f32.gmra.mxu0 %v3105
  %v3156 = vpop.f32.mrf.mxu0
  %v3157 = vadd.f32 0.0, %v3156
  %3158 = vdwg.mxu0
  %3159 = vmatpush.msra.mxu0 0.0
  %3160 = vmatpush.msra.mxu0 0.0
  %3161 = vmatpush.msra.mxu0 0.0
  %3162 = vmatpush.msra.mxu0 0.0
  %3163 = vmatpush.msra.mxu0 0.0
  %3164 = vmatpush.msra.mxu0 0.0
  %3165 = vmatpush.msra.mxu0 0.0
  %3166 = vmatpush.msra.mxu0 %v3085
  %3167 = vmatpush.msra.mxu0 %v3070
  %3168 = vmatpush.msra.mxu0 %v3055
  %3169 = vmatpush.msra.mxu0 %v3040
  %3170 = vmatpush.msra.mxu0 %v3025
  %3171 = vmatpush.msra.mxu0 %v3010
  %3172 = vmatpush.msra.mxu0 %v2995
  %3173 = vmatpush.msra.mxu0 %v2980
  %3174 = vmatpush.msra.mxu0 %v2965
  %3175 = vmatmul.f32.gmra.mxu0 %v3099
  %v3176 = vpop.f32.mrf.mxu0
  %v3177 = vadd.f32 0.0, %v3176
  %3178 = vmatmul.f32.gmra.mxu0 %v3102
  %v3179 = vpop.f32.mrf.mxu0
  %v3180 = vadd.f32 0.0, %v3179
  %3181 = vmatmul.f32.gmra.mxu0 %v3105
  %v3182 = vpop.f32.mrf.mxu0
  %v3183 = vadd.f32 0.0, %v3182
  %3184 = vdwg.mxu0
  %3185 = vmatpush.msra.mxu0 0.0
  %3186 = vmatpush.msra.mxu0 0.0
  %3187 = vmatpush.msra.mxu0 0.0
  %3188 = vmatpush.msra.mxu0 0.0
  %3189 = vmatpush.msra.mxu0 0.0
  %3190 = vmatpush.msra.mxu0 0.0
  %3191 = vmatpush.msra.mxu0 0.0
  %3192 = vmatpush.msra.mxu0 %v3086
  %3193 = vmatpush.msra.mxu0 %v3071
  %3194 = vmatpush.msra.mxu0 %v3056
  %3195 = vmatpush.msra.mxu0 %v3041
  %3196 = vmatpush.msra.mxu0 %v3026
  %3197 = vmatpush.msra.mxu0 %v3011
  %3198 = vmatpush.msra.mxu0 %v2996
  %3199 = vmatpush.msra.mxu0 %v2981
  %3200 = vmatpush.msra.mxu0 %v2966
  %3201 = vmatmul.f32.gmra.mxu0 %v3099
  %v3202 = vpop.f32.mrf.mxu0
  %v3203 = vadd.f32 0.0, %v3202
  %3204 = vmatmul.f32.gmra.mxu0 %v3102
  %v3205 = vpop.f32.mrf.mxu0
  %v3206 = vadd.f32 0.0, %v3205
  %3207 = vmatmul.f32.gmra.mxu0 %v3105
  %v3208 = vpop.f32.mrf.mxu0
  %v3209 = vadd.f32 0.0, %v3208
  %3210 = vdwg.mxu0
  %3211 = vmatpush.msra.mxu0 0.0
  %3212 = vmatpush.msra.mxu0 0.0
  %3213 = vmatpush.msra.mxu0 0.0
  %3214 = vmatpush.msra.mxu0 0.0
  %3215 = vmatpush.msra.mxu0 0.0
  %3216 = vmatpush.msra.mxu0 0.0
  %3217 = vmatpush.msra.mxu0 0.0
  %3218 = vmatpush.msra.mxu0 %v3087
  %3219 = vmatpush.msra.mxu0 %v3072
  %3220 = vmatpush.msra.mxu0 %v3057
  %3221 = vmatpush.msra.mxu0 %v3042
  %3222 = vmatpush.msra.mxu0 %v3027
  %3223 = vmatpush.msra.mxu0 %v3012
  %3224 = vmatpush.msra.mxu0 %v2997
  %3225 = vmatpush.msra.mxu0 %v2982
  %3226 = vmatpush.msra.mxu0 %v2967
  %3227 = vmatmul.f32.gmra.mxu0 %v3099
  %v3228 = vpop.f32.mrf.mxu0
  %v3229 = vadd.f32 0.0, %v3228
  %3230 = vmatmul.f32.gmra.mxu0 %v3102
  %v3231 = vpop.f32.mrf.mxu0
  %v3232 = vadd.f32 0.0, %v3231
  %3233 = vmatmul.f32.gmra.mxu0 %v3105
  %v3234 = vpop.f32.mrf.mxu0
  %v3235 = vadd.f32 0.0, %v3234
  %3236 = vdwg.mxu0
  %3237 = vmatpush.msra.mxu0 0.0
  %3238 = vmatpush.msra.mxu0 0.0
  %3239 = vmatpush.msra.mxu0 0.0
  %3240 = vmatpush.msra.mxu0 0.0
  %3241 = vmatpush.msra.mxu0 0.0
  %3242 = vmatpush.msra.mxu0 0.0
  %3243 = vmatpush.msra.mxu0 0.0
  %3244 = vmatpush.msra.mxu0 %v3088
  %3245 = vmatpush.msra.mxu0 %v3073
  %3246 = vmatpush.msra.mxu0 %v3058
  %3247 = vmatpush.msra.mxu0 %v3043
  %3248 = vmatpush.msra.mxu0 %v3028
  %3249 = vmatpush.msra.mxu0 %v3013
  %3250 = vmatpush.msra.mxu0 %v2998
  %3251 = vmatpush.msra.mxu0 %v2983
  %3252 = vmatpush.msra.mxu0 %v2968
  %3253 = vmatmul.f32.gmra.mxu0 %v3099
  %v3254 = vpop.f32.mrf.mxu0
  %v3255 = vadd.f32 0.0, %v3254
  %3256 = vmatmul.f32.gmra.mxu0 %v3102
  %v3257 = vpop.f32.mrf.mxu0
  %v3258 = vadd.f32 0.0, %v3257
  %3259 = vmatmul.f32.gmra.mxu0 %v3105
  %v3260 = vpop.f32.mrf.mxu0
  %v3261 = vadd.f32 0.0, %v3260
  %3262 = vdwg.mxu0
  %3263 = vmatpush.msra.mxu0 0.0
  %3264 = vmatpush.msra.mxu0 0.0
  %3265 = vmatpush.msra.mxu0 0.0
  %3266 = vmatpush.msra.mxu0 0.0
  %3267 = vmatpush.msra.mxu0 0.0
  %3268 = vmatpush.msra.mxu0 0.0
  %3269 = vmatpush.msra.mxu0 0.0
  %3270 = vmatpush.msra.mxu0 %v3089
  %3271 = vmatpush.msra.mxu0 %v3074
  %3272 = vmatpush.msra.mxu0 %v3059
  %3273 = vmatpush.msra.mxu0 %v3044
  %3274 = vmatpush.msra.mxu0 %v3029
  %3275 = vmatpush.msra.mxu0 %v3014
  %3276 = vmatpush.msra.mxu0 %v2999
  %3277 = vmatpush.msra.mxu0 %v2984
  %3278 = vmatpush.msra.mxu0 %v2969
  %3279 = vmatmul.f32.gmra.mxu0 %v3099
  %v3280 = vpop.f32.mrf.mxu0
  %v3281 = vadd.f32 0.0, %v3280
  %3282 = vmatmul.f32.gmra.mxu0 %v3102
  %v3283 = vpop.f32.mrf.mxu0
  %v3284 = vadd.f32 0.0, %v3283
  %3285 = vmatmul.f32.gmra.mxu0 %v3105
  %v3286 = vpop.f32.mrf.mxu0
  %v3287 = vadd.f32 0.0, %v3286
  %3288 = vdwg.mxu0
  %3289 = vmatpush.msra.mxu0 0.0
  %3290 = vmatpush.msra.mxu0 0.0
  %3291 = vmatpush.msra.mxu0 0.0
  %3292 = vmatpush.msra.mxu0 0.0
  %3293 = vmatpush.msra.mxu0 0.0
  %3294 = vmatpush.msra.mxu0 0.0
  %3295 = vmatpush.msra.mxu0 0.0
  %3296 = vmatpush.msra.mxu0 %v3090
  %3297 = vmatpush.msra.mxu0 %v3075
  %3298 = vmatpush.msra.mxu0 %v3060
  %3299 = vmatpush.msra.mxu0 %v3045
  %3300 = vmatpush.msra.mxu0 %v3030
  %3301 = vmatpush.msra.mxu0 %v3015
  %3302 = vmatpush.msra.mxu0 %v3000
  %3303 = vmatpush.msra.mxu0 %v2985
  %3304 = vmatpush.msra.mxu0 %v2970
  %3305 = vmatmul.f32.gmra.mxu0 %v3099
  %v3306 = vpop.f32.mrf.mxu0
  %v3307 = vadd.f32 0.0, %v3306
  %3308 = vmatmul.f32.gmra.mxu0 %v3102
  %v3309 = vpop.f32.mrf.mxu0
  %v3310 = vadd.f32 0.0, %v3309
  %3311 = vmatmul.f32.gmra.mxu0 %v3105
  %v3312 = vpop.f32.mrf.mxu0
  %v3313 = vadd.f32 0.0, %v3312
  %3314 = vdwg.mxu0
  %3315 = vmatpush.msra.mxu0 0.0
  %3316 = vmatpush.msra.mxu0 0.0
  %3317 = vmatpush.msra.mxu0 0.0
  %3318 = vmatpush.msra.mxu0 0.0
  %3319 = vmatpush.msra.mxu0 0.0
  %3320 = vmatpush.msra.mxu0 0.0
  %3321 = vmatpush.msra.mxu0 0.0
  %3322 = vmatpush.msra.mxu0 %v3091
  %3323 = vmatpush.msra.mxu0 %v3076
  %3324 = vmatpush.msra.mxu0 %v3061
  %3325 = vmatpush.msra.mxu0 %v3046
  %3326 = vmatpush.msra.mxu0 %v3031
  %3327 = vmatpush.msra.mxu0 %v3016
  %3328 = vmatpush.msra.mxu0 %v3001
  %3329 = vmatpush.msra.mxu0 %v2986
  %3330 = vmatpush.msra.mxu0 %v2971
  %3331 = vmatmul.f32.gmra.mxu0 %v3099
  %v3332 = vpop.f32.mrf.mxu0
  %v3333 = vadd.f32 0.0, %v3332
  %3334 = vmatmul.f32.gmra.mxu0 %v3102
  %v3335 = vpop.f32.mrf.mxu0
  %v3336 = vadd.f32 0.0, %v3335
  %3337 = vmatmul.f32.gmra.mxu0 %v3105
  %v3338 = vpop.f32.mrf.mxu0
  %v3339 = vadd.f32 0.0, %v3338
  %3340 = vdwg.mxu0
  %3341 = vmatpush.msra.mxu0 0.0
  %3342 = vmatpush.msra.mxu0 0.0
  %3343 = vmatpush.msra.mxu0 0.0
  %3344 = vmatpush.msra.mxu0 0.0
  %3345 = vmatpush.msra.mxu0 0.0
  %3346 = vmatpush.msra.mxu0 0.0
  %3347 = vmatpush.msra.mxu0 0.0
  %3348 = vmatpush.msra.mxu0 %v3092
  %3349 = vmatpush.msra.mxu0 %v3077
  %3350 = vmatpush.msra.mxu0 %v3062
  %3351 = vmatpush.msra.mxu0 %v3047
  %3352 = vmatpush.msra.mxu0 %v3032
  %3353 = vmatpush.msra.mxu0 %v3017
  %3354 = vmatpush.msra.mxu0 %v3002
  %3355 = vmatpush.msra.mxu0 %v2987
  %3356 = vmatpush.msra.mxu0 %v2972
  %3357 = vmatmul.f32.gmra.mxu0 %v3099
  %v3358 = vpop.f32.mrf.mxu0
  %v3359 = vadd.f32 0.0, %v3358
  %3360 = vmatmul.f32.gmra.mxu0 %v3102
  %v3361 = vpop.f32.mrf.mxu0
  %v3362 = vadd.f32 0.0, %v3361
  %3363 = vmatmul.f32.gmra.mxu0 %v3105
  %v3364 = vpop.f32.mrf.mxu0
  %v3365 = vadd.f32 0.0, %v3364
  %3366 = vdwg.mxu0
  %3367 = vmatpush.msra.mxu0 0.0
  %3368 = vmatpush.msra.mxu0 0.0
  %3369 = vmatpush.msra.mxu0 0.0
  %3370 = vmatpush.msra.mxu0 0.0
  %3371 = vmatpush.msra.mxu0 0.0
  %3372 = vmatpush.msra.mxu0 0.0
  %3373 = vmatpush.msra.mxu0 0.0
  %3374 = vmatpush.msra.mxu0 %v3093
  %3375 = vmatpush.msra.mxu0 %v3078
  %3376 = vmatpush.msra.mxu0 %v3063
  %3377 = vmatpush.msra.mxu0 %v3048
  %3378 = vmatpush.msra.mxu0 %v3033
  %3379 = vmatpush.msra.mxu0 %v3018
  %3380 = vmatpush.msra.mxu0 %v3003
  %3381 = vmatpush.msra.mxu0 %v2988
  %3382 = vmatpush.msra.mxu0 %v2973
  %3383 = vmatmul.f32.gmra.mxu0 %v3099
  %v3384 = vpop.f32.mrf.mxu0
  %v3385 = vadd.f32 0.0, %v3384
  %3386 = vmatmul.f32.gmra.mxu0 %v3102
  %v3387 = vpop.f32.mrf.mxu0
  %v3388 = vadd.f32 0.0, %v3387
  %3389 = vmatmul.f32.gmra.mxu0 %v3105
  %v3390 = vpop.f32.mrf.mxu0
  %v3391 = vadd.f32 0.0, %v3390
  %3392 = vdwg.mxu0
  %3393 = vmatpush.msra.mxu0 0.0
  %3394 = vmatpush.msra.mxu0 0.0
  %3395 = vmatpush.msra.mxu0 0.0
  %3396 = vmatpush.msra.mxu0 0.0
  %3397 = vmatpush.msra.mxu0 0.0
  %3398 = vmatpush.msra.mxu0 0.0
  %3399 = vmatpush.msra.mxu0 0.0
  %3400 = vmatpush.msra.mxu0 %v3094
  %3401 = vmatpush.msra.mxu0 %v3079
  %3402 = vmatpush.msra.mxu0 %v3064
  %3403 = vmatpush.msra.mxu0 %v3049
  %3404 = vmatpush.msra.mxu0 %v3034
  %3405 = vmatpush.msra.mxu0 %v3019
  %3406 = vmatpush.msra.mxu0 %v3004
  %3407 = vmatpush.msra.mxu0 %v2989
  %3408 = vmatpush.msra.mxu0 %v2974
  %3409 = vmatmul.f32.gmra.mxu0 %v3099
  %v3410 = vpop.f32.mrf.mxu0
  %v3411 = vadd.f32 0.0, %v3410
  %3412 = vmatmul.f32.gmra.mxu0 %v3102
  %v3413 = vpop.f32.mrf.mxu0
  %v3414 = vadd.f32 0.0, %v3413
  %3415 = vmatmul.f32.gmra.mxu0 %v3105
  %v3416 = vpop.f32.mrf.mxu0
  %v3417 = vadd.f32 0.0, %v3416
  %3418 = vdwg.mxu0
  %3419 = vmatpush.msra.mxu0 0.0
  %3420 = vmatpush.msra.mxu0 0.0
  %3421 = vmatpush.msra.mxu0 0.0
  %3422 = vmatpush.msra.mxu0 0.0
  %3423 = vmatpush.msra.mxu0 0.0
  %3424 = vmatpush.msra.mxu0 0.0
  %3425 = vmatpush.msra.mxu0 0.0
  %3426 = vmatpush.msra.mxu0 %v3095
  %3427 = vmatpush.msra.mxu0 %v3080
  %3428 = vmatpush.msra.mxu0 %v3065
  %3429 = vmatpush.msra.mxu0 %v3050
  %3430 = vmatpush.msra.mxu0 %v3035
  %3431 = vmatpush.msra.mxu0 %v3020
  %3432 = vmatpush.msra.mxu0 %v3005
  %3433 = vmatpush.msra.mxu0 %v2990
  %3434 = vmatpush.msra.mxu0 %v2975
  %3435 = vmatmul.f32.gmra.mxu0 %v3099
  %v3436 = vpop.f32.mrf.mxu0
  %v3437 = vadd.f32 0.0, %v3436
  %3438 = vmatmul.f32.gmra.mxu0 %v3102
  %v3439 = vpop.f32.mrf.mxu0
  %v3440 = vadd.f32 0.0, %v3439
  %3441 = vmatmul.f32.gmra.mxu0 %v3105
  %v3442 = vpop.f32.mrf.mxu0
  %v3443 = vadd.f32 0.0, %v3442
  %3444 = vdwg.mxu0
  %3445 = vmatpush.msra.mxu0 0.0
  %3446 = vmatpush.msra.mxu0 0.0
  %3447 = vmatpush.msra.mxu0 0.0
  %3448 = vmatpush.msra.mxu0 0.0
  %3449 = vmatpush.msra.mxu0 0.0
  %3450 = vmatpush.msra.mxu0 0.0
  %3451 = vmatpush.msra.mxu0 0.0
  %3452 = vmatpush.msra.mxu0 %v3096
  %3453 = vmatpush.msra.mxu0 %v3081
  %3454 = vmatpush.msra.mxu0 %v3066
  %3455 = vmatpush.msra.mxu0 %v3051
  %3456 = vmatpush.msra.mxu0 %v3036
  %3457 = vmatpush.msra.mxu0 %v3021
  %3458 = vmatpush.msra.mxu0 %v3006
  %3459 = vmatpush.msra.mxu0 %v2991
  %3460 = vmatpush.msra.mxu0 %v2976
  %3461 = vmatmul.f32.gmra.mxu0 %v3099
  %v3462 = vpop.f32.mrf.mxu0
  %v3463 = vadd.f32 0.0, %v3462
  %3464 = vmatmul.f32.gmra.mxu0 %v3102
  %v3465 = vpop.f32.mrf.mxu0
  %v3466 = vadd.f32 0.0, %v3465
  %3467 = vmatmul.f32.gmra.mxu0 %v3105
  %v3468 = vpop.f32.mrf.mxu0
  %v3469 = vadd.f32 0.0, %v3468
  %3470 = vdwg.mxu0
  %3471 = vmatpush.msra.mxu0 0.0
  %3472 = vmatpush.msra.mxu0 0.0
  %3473 = vmatpush.msra.mxu0 0.0
  %3474 = vmatpush.msra.mxu0 0.0
  %3475 = vmatpush.msra.mxu0 0.0
  %3476 = vmatpush.msra.mxu0 0.0
  %3477 = vmatpush.msra.mxu0 0.0
  %3478 = vmatpush.msra.mxu0 %v3097
  %3479 = vmatpush.msra.mxu0 %v3082
  %3480 = vmatpush.msra.mxu0 %v3067
  %3481 = vmatpush.msra.mxu0 %v3052
  %3482 = vmatpush.msra.mxu0 %v3037
  %3483 = vmatpush.msra.mxu0 %v3022
  %3484 = vmatpush.msra.mxu0 %v3007
  %3485 = vmatpush.msra.mxu0 %v2992
  %3486 = vmatpush.msra.mxu0 %v2977
  %3487 = vmatmul.f32.gmra.mxu0 %v3099
  %v3488 = vpop.f32.mrf.mxu0
  %3489 = vmatmul.f32.gmra.mxu0 %v3102
  %v3490 = vpop.f32.mrf.mxu0
  %v3491 = vadd.f32 0.0, %v3490
  %3492 = vmatmul.f32.gmra.mxu0 %v3105
  %v3493 = vpop.f32.mrf.mxu0
  %v3494 = vadd.f32 0.0, %v3493
  %3495 = vdwg.mxu0
  %3511 = vrot.lane.b32.xlu0 %v3128, 127
  %v3512 = vpop.permute.xlu0 %3511
  %3513 = vrot.lane.b32.xlu0 %v3154, 127
  %v3514 = vpop.permute.xlu0 %3513
  %3515 = vrot.lane.b32.xlu0 %v3180, 127
  %v3516 = vpop.permute.xlu0 %3515
  %3517 = vrot.lane.b32.xlu0 %v3206, 127
  %v3518 = vpop.permute.xlu0 %3517
  %3519 = vrot.lane.b32.xlu0 %v3232, 127
  %v3520 = vpop.permute.xlu0 %3519
  %3521 = vrot.lane.b32.xlu0 %v3258, 127
  %v3522 = vpop.permute.xlu0 %3521
  %3523 = vrot.lane.b32.xlu0 %v3284, 127
  %v3524 = vpop.permute.xlu0 %3523
  %3525 = vrot.lane.b32.xlu0 %v3310, 127
  %v3526 = vpop.permute.xlu0 %3525
  %3527 = vrot.lane.b32.xlu0 %v3336, 127
  %v3528 = vpop.permute.xlu0 %3527
  %3529 = vrot.lane.b32.xlu0 %v3362, 127
  %v3530 = vpop.permute.xlu0 %3529
  %3531 = vrot.lane.b32.xlu0 %v3388, 127
  %v3532 = vpop.permute.xlu0 %3531
  %3533 = vrot.lane.b32.xlu0 %v3414, 127
  %v3534 = vpop.permute.xlu0 %3533
  %3535 = vrot.lane.b32.xlu0 %v3440, 127
  %v3536 = vpop.permute.xlu0 %3535
  %3537 = vrot.lane.b32.xlu0 %v3466, 127
  %v3538 = vpop.permute.xlu0 %3537
  %3539 = vrot.lane.b32.xlu0 %v3491, 127
  %v3540 = vpop.permute.xlu0 %3539
  %v3541 = vsel %vm1603, %v3512, %v3514
  %v3542 = vsel %vm1603, %v3514, %v3516
  %v3543 = vsel %vm1603, %v3516, %v3518
  %v3544 = vsel %vm1603, %v3518, %v3520
  %v3545 = vsel %vm1603, %v3520, %v3522
  %v3546 = vsel %vm1603, %v3522, %v3524
  %v3547 = vsel %vm1603, %v3524, %v3526
  %v3548 = vsel %vm1603, %v3526, %v3528
  %v3549 = vsel %vm1603, %v3528, %v3530
  %v3550 = vsel %vm1603, %v3530, %v3532
  %v3551 = vsel %vm1603, %v3532, %v3534
  %v3552 = vsel %vm1603, %v3534, %v3536
  %v3553 = vsel %vm1603, %v3536, %v3538
  %v3554 = vsel %vm1603, %v3538, %v3540
  %v3569 = vadd.f32 %v3125, %v3541
  %v3570 = vadd.f32 %v3151, %v3542
  %v3571 = vadd.f32 %v3177, %v3543
  %v3572 = vadd.f32 %v3203, %v3544
  %v3573 = vadd.f32 %v3229, %v3545
  %v3574 = vadd.f32 %v3255, %v3546
  %v3575 = vadd.f32 %v3281, %v3547
  %v3576 = vadd.f32 %v3307, %v3548
  %v3577 = vadd.f32 %v3333, %v3549
  %v3578 = vadd.f32 %v3359, %v3550
  %v3579 = vadd.f32 %v3385, %v3551
  %v3580 = vadd.f32 %v3411, %v3552
  %v3581 = vadd.f32 %v3437, %v3553
  %v3582 = vadd.f32 %v3463, %v3554
  %3598 = vrot.lane.b32.xlu0 %v3131, 126
  %v3599 = vpop.permute.xlu0 %3598
  %3600 = vrot.lane.b32.xlu0 %v3157, 126
  %v3601 = vpop.permute.xlu0 %3600
  %3602 = vrot.lane.b32.xlu0 %v3183, 126
  %v3603 = vpop.permute.xlu0 %3602
  %3604 = vrot.lane.b32.xlu0 %v3209, 126
  %v3605 = vpop.permute.xlu0 %3604
  %3606 = vrot.lane.b32.xlu0 %v3235, 126
  %v3607 = vpop.permute.xlu0 %3606
  %3608 = vrot.lane.b32.xlu0 %v3261, 126
  %v3609 = vpop.permute.xlu0 %3608
  %3610 = vrot.lane.b32.xlu0 %v3287, 126
  %v3611 = vpop.permute.xlu0 %3610
  %3612 = vrot.lane.b32.xlu0 %v3313, 126
  %v3613 = vpop.permute.xlu0 %3612
  %3614 = vrot.lane.b32.xlu0 %v3339, 126
  %v3615 = vpop.permute.xlu0 %3614
  %3616 = vrot.lane.b32.xlu0 %v3365, 126
  %v3617 = vpop.permute.xlu0 %3616
  %3618 = vrot.lane.b32.xlu0 %v3391, 126
  %v3619 = vpop.permute.xlu0 %3618
  %3620 = vrot.lane.b32.xlu0 %v3417, 126
  %v3621 = vpop.permute.xlu0 %3620
  %3622 = vrot.lane.b32.xlu0 %v3443, 126
  %v3623 = vpop.permute.xlu0 %3622
  %3624 = vrot.lane.b32.xlu0 %v3469, 126
  %v3625 = vpop.permute.xlu0 %3624
  %3626 = vrot.lane.b32.xlu0 %v3494, 126
  %v3627 = vpop.permute.xlu0 %3626
  %v3628 = vsel %vm1691, %v3599, %v3601
  %v3629 = vsel %vm1691, %v3601, %v3603
  %v3630 = vsel %vm1691, %v3603, %v3605
  %v3631 = vsel %vm1691, %v3605, %v3607
  %v3632 = vsel %vm1691, %v3607, %v3609
  %v3633 = vsel %vm1691, %v3609, %v3611
  %v3634 = vsel %vm1691, %v3611, %v3613
  %v3635 = vsel %vm1691, %v3613, %v3615
  %v3636 = vsel %vm1691, %v3615, %v3617
  %v3637 = vsel %vm1691, %v3617, %v3619
  %v3638 = vsel %vm1691, %v3619, %v3621
  %v3639 = vsel %vm1691, %v3621, %v3623
  %v3640 = vsel %vm1691, %v3623, %v3625
  %v3641 = vsel %vm1691, %v3625, %v3627
  %v3656 = vadd.f32 %v3569, %v3628
  %v3657 = vadd.f32 %v3570, %v3629
  %v3658 = vadd.f32 %v3571, %v3630
  %v3659 = vadd.f32 %v3572, %v3631
  %v3660 = vadd.f32 %v3573, %v3632
  %v3661 = vadd.f32 %v3574, %v3633
  %v3662 = vadd.f32 %v3575, %v3634
  %v3663 = vadd.f32 %v3576, %v3635
  %v3664 = vadd.f32 %v3577, %v3636
  %v3665 = vadd.f32 %v3578, %v3637
  %v3666 = vadd.f32 %v3579, %v3638
  %v3667 = vadd.f32 %v3580, %v3639
  %v3668 = vadd.f32 %v3581, %v3640
  %v3669 = vadd.f32 %v3582, %v3641
  %v3670 = vmul.f32 %v3656, %v1736
  %v3671 = vmul.f32 %v3657, %v1737
  %v3672 = vmul.f32 %v3658, %v1738
  %v3673 = vmul.f32 %v3659, %v1739
  %v3674 = vmul.f32 %v3660, %v1740
  %v3675 = vmul.f32 %v3661, %v1741
  %v3676 = vmul.f32 %v3662, %v1742
  %v3677 = vmul.f32 %v3663, %v1743
  %v3678 = vmul.f32 %v3664, %v1744
  %v3679 = vmul.f32 %v3665, %v1745
  %v3680 = vmul.f32 %v3666, %v1746
  %v3681 = vmul.f32 %v3667, %v1747
  %v3682 = vmul.f32 %v3668, %v1748
  %v3683 = vmul.f32 %v3669, %v1749
  %v3684 = vadd.f32 %v3670, %v3671
  %v3685 = vadd.f32 %v3684, %v3672
  %v3686 = vadd.f32 %v3685, %v3673
  %v3687 = vadd.f32 %v3686, %v3674
  %v3688 = vadd.f32 %v3687, %v3675
  %v3689 = vadd.f32 %v3688, %v3676
  %v3690 = vadd.f32 %v3689, %v3677
  %v3691 = vadd.f32 %v3690, %v3678
  %v3692 = vadd.f32 %v3691, %v3679
  %v3693 = vadd.f32 %v3692, %v3680
  %v3694 = vadd.f32 %v3693, %v3681
  %v3695 = vadd.f32 %v3694, %v3682
  %v3696 = vadd.f32 %v3695, %v3683
  %3697 = vadd.xlane.f32.xlu0 %v3696
  %v3698 = vpop.xlane.xlu0 %3697
  %v3699 = vmul.f32 %v3698, 0.0009765625
  %v3700 = vsub.f32 %v3656, %v3699
  %v3701 = vsub.f32 %v3657, %v3699
  %v3702 = vsub.f32 %v3658, %v3699
  %v3703 = vsub.f32 %v3659, %v3699
  %v3704 = vsub.f32 %v3660, %v3699
  %v3705 = vsub.f32 %v3661, %v3699
  %v3706 = vsub.f32 %v3662, %v3699
  %v3707 = vsub.f32 %v3663, %v3699
  %v3708 = vsub.f32 %v3664, %v3699
  %v3709 = vsub.f32 %v3665, %v3699
  %v3710 = vsub.f32 %v3666, %v3699
  %v3711 = vsub.f32 %v3667, %v3699
  %v3712 = vsub.f32 %v3668, %v3699
  %v3713 = vsub.f32 %v3669, %v3699
  %v3714 = vmul.f32 %v3700, %v1736
  %v3715 = vmul.f32 %v3701, %v1737
  %v3716 = vmul.f32 %v3702, %v1738
  %v3717 = vmul.f32 %v3703, %v1739
  %v3718 = vmul.f32 %v3704, %v1740
  %v3719 = vmul.f32 %v3705, %v1741
  %v3720 = vmul.f32 %v3706, %v1742
  %v3721 = vmul.f32 %v3707, %v1743
  %v3722 = vmul.f32 %v3708, %v1744
  %v3723 = vmul.f32 %v3709, %v1745
  %v3724 = vmul.f32 %v3710, %v1746
  %v3725 = vmul.f32 %v3711, %v1747
  %v3726 = vmul.f32 %v3712, %v1748
  %v3727 = vmul.f32 %v3713, %v1749
  %v3728 = vmul.f32 %v3714, %v3714
  %v3729 = vmul.f32 %v3715, %v3715
  %v3730 = vmul.f32 %v3716, %v3716
  %v3731 = vmul.f32 %v3717, %v3717
  %v3732 = vmul.f32 %v3718, %v3718
  %v3733 = vmul.f32 %v3719, %v3719
  %v3734 = vmul.f32 %v3720, %v3720
  %v3735 = vmul.f32 %v3721, %v3721
  %v3736 = vmul.f32 %v3722, %v3722
  %v3737 = vmul.f32 %v3723, %v3723
  %v3738 = vmul.f32 %v3724, %v3724
  %v3739 = vmul.f32 %v3725, %v3725
  %v3740 = vmul.f32 %v3726, %v3726
  %v3741 = vmul.f32 %v3727, %v3727
  %v3742 = vadd.f32 %v3728, %v3729
  %v3743 = vadd.f32 %v3742, %v3730
  %v3744 = vadd.f32 %v3743, %v3731
  %v3745 = vadd.f32 %v3744, %v3732
  %v3746 = vadd.f32 %v3745, %v3733
  %v3747 = vadd.f32 %v3746, %v3734
  %v3748 = vadd.f32 %v3747, %v3735
  %v3749 = vadd.f32 %v3748, %v3736
  %v3750 = vadd.f32 %v3749, %v3737
  %v3751 = vadd.f32 %v3750, %v3738
  %v3752 = vadd.f32 %v3751, %v3739
  %v3753 = vadd.f32 %v3752, %v3740
  %v3754 = vadd.f32 %v3753, %v3741
  %3755 = vadd.xlane.f32.xlu0 %v3754
  %v3756 = vpop.xlane.xlu0 %3755
  %v3757 = vmul.f32 %v3756, 0.0009765625
  %v3758 = vld [vmem:[%s6] sm:$0xff]
  %v3759 = vadd.f32 %v3757, 1e-05
  %v3760 = vrsqrt.pop %v3759
  %v3761 = vmul.f32 %v3760, %v3759
  %v3762 = vmul.f32 %v3761, %v3760
  %v3763 = vmul.f32 0.5, %v3762
  %v3764 = vsub.f32 1.5, %v3763
  %v3765 = vmul.f32 %v3760, %v3764
  %vm3766 = vweird.f32 %v3759
  %vm3767 = vweird.f32 %v3760
  %vm3768 = vmor %vm3766, %vm3767
  %v3769 = vsel %vm3768, %v3760, %v3765
  %v3770 = vmul.f32 %v3758, %v3769
  %v3771 = vld [vmem:[%s7] sm:$0xff]
  %v3772 = vmul.f32 %v3699, %v3770
  %v3773 = vsub.f32 %v3771, %v3772
  %3775 = vset.pattern.permute.xlu0 0
  %3776 = vperm.xlu0 %3775, %v3770
  %v3777 = vpop.permute.xlu0 %3776
  %v3779 = vmul.f32 %v3656, %v3777
  %v3780 = vmul.f32 %v3657, %v3777
  %v3781 = vmul.f32 %v3658, %v3777
  %v3782 = vmul.f32 %v3659, %v3777
  %v3783 = vmul.f32 %v3660, %v3777
  %v3784 = vmul.f32 %v3661, %v3777
  %v3785 = vmul.f32 %v3662, %v3777
  %v3786 = vmul.f32 %v3663, %v3777
  %v3787 = vmul.f32 %v3664, %v3777
  %v3788 = vmul.f32 %v3665, %v3777
  %v3789 = vmul.f32 %v3666, %v3777
  %v3790 = vmul.f32 %v3667, %v3777
  %v3791 = vmul.f32 %v3668, %v3777
  %v3792 = vmul.f32 %v3669, %v3777
  %3794 = vset.pattern.permute.xlu0 0
  %3795 = vperm.xlu0 %3794, %v3773
  %v3796 = vpop.permute.xlu0 %3795
  %v3798 = vadd.f32 %v3779, %v3796
  %v3799 = vadd.f32 %v3780, %v3796
  %v3800 = vadd.f32 %v3781, %v3796
  %v3801 = vadd.f32 %v3782, %v3796
  %v3802 = vadd.f32 %v3783, %v3796
  %v3803 = vadd.f32 %v3784, %v3796
  %v3804 = vadd.f32 %v3785, %v3796
  %v3805 = vadd.f32 %v3786, %v3796
  %v3806 = vadd.f32 %v3787, %v3796
  %v3807 = vadd.f32 %v3788, %v3796
  %v3808 = vadd.f32 %v3789, %v3796
  %v3809 = vadd.f32 %v3790, %v3796
  %v3810 = vadd.f32 %v3791, %v3796
  %v3811 = vadd.f32 %v3792, %v3796
  %vm3812 = vcmp.ge.f32.partialorder %v3798, 0.0
  %vm3813 = vcmp.ge.f32.partialorder %v3799, 0.0
  %vm3814 = vcmp.ge.f32.partialorder %v3800, 0.0
  %vm3815 = vcmp.ge.f32.partialorder %v3801, 0.0
  %vm3816 = vcmp.ge.f32.partialorder %v3802, 0.0
  %vm3817 = vcmp.ge.f32.partialorder %v3803, 0.0
  %vm3818 = vcmp.ge.f32.partialorder %v3804, 0.0
  %vm3819 = vcmp.ge.f32.partialorder %v3805, 0.0
  %vm3820 = vcmp.ge.f32.partialorder %v3806, 0.0
  %vm3821 = vcmp.ge.f32.partialorder %v3807, 0.0
  %vm3822 = vcmp.ge.f32.partialorder %v3808, 0.0
  %vm3823 = vcmp.ge.f32.partialorder %v3809, 0.0
  %vm3824 = vcmp.ge.f32.partialorder %v3810, 0.0
  %vm3825 = vcmp.ge.f32.partialorder %v3811, 0.0
  %v3826 = vmul.f32 %v3798, 0.2
  %v3827 = vmul.f32 %v3799, 0.2
  %v3828 = vmul.f32 %v3800, 0.2
  %v3829 = vmul.f32 %v3801, 0.2
  %v3830 = vmul.f32 %v3802, 0.2
  %v3831 = vmul.f32 %v3803, 0.2
  %v3832 = vmul.f32 %v3804, 0.2
  %v3833 = vmul.f32 %v3805, 0.2
  %v3834 = vmul.f32 %v3806, 0.2
  %v3835 = vmul.f32 %v3807, 0.2
  %v3836 = vmul.f32 %v3808, 0.2
  %v3837 = vmul.f32 %v3809, 0.2
  %v3838 = vmul.f32 %v3810, 0.2
  %v3839 = vmul.f32 %v3811, 0.2
  %v3840 = vsel %vm3812, %v3798, %v3826
  %v3841 = vsel %vm3813, %v3799, %v3827
  %v3842 = vsel %vm3814, %v3800, %v3828
  %v3843 = vsel %vm3815, %v3801, %v3829
  %v3844 = vsel %vm3816, %v3802, %v3830
  %v3845 = vsel %vm3817, %v3803, %v3831
  %v3846 = vsel %vm3818, %v3804, %v3832
  %v3847 = vsel %vm3819, %v3805, %v3833
  %v3848 = vsel %vm3820, %v3806, %v3834
  %v3849 = vsel %vm3821, %v3807, %v3835
  %v3850 = vsel %vm3822, %v3808, %v3836
  %v3851 = vsel %vm3823, %v3809, %v3837
  %v3852 = vsel %vm3824, %v3810, %v3838
  %v3853 = vsel %vm3825, %v3811, %v3839
  %v3854 = vmul.f32 %v3840, %v1736
  %v3855 = vmul.f32 %v3841, %v1737
  %v3856 = vmul.f32 %v3842, %v1738
  %v3857 = vmul.f32 %v3843, %v1739
  %v3858 = vmul.f32 %v3844, %v1740
  %v3859 = vmul.f32 %v3845, %v1741
  %v3860 = vmul.f32 %v3846, %v1742
  %v3861 = vmul.f32 %v3847, %v1743
  %v3862 = vmul.f32 %v3848, %v1744
  %v3863 = vmul.f32 %v3849, %v1745
  %v3864 = vmul.f32 %v3850, %v1746
  %v3865 = vmul.f32 %v3851, %v1747
  %v3866 = vmul.f32 %v3852, %v1748
  %v3867 = vmul.f32 %v3853, %v1749
  %v3868 = vld [vmem:[#allocation3 + $0x8] sm:$0xff]
  %v3869 = vld [vmem:[#allocation3 + $0x10] sm:$0xff]
  %v3870 = vld [vmem:[#allocation3 + $0x18] sm:$0xff]
  %v3871 = vld [vmem:[#allocation3 + $0x20] sm:$0xff]
  %v3872 = vld [vmem:[#allocation3 + $0x28] sm:$0xff]
  %v3873 = vld [vmem:[#allocation3 + $0x30] sm:$0xff]
  %v3874 = vld [vmem:[#allocation3 + $0x38] sm:$0xff]
  %v3875 = vld [vmem:[#allocation3 + $0x40] sm:$0xff]
  %v3876 = vld [vmem:[#allocation3 + $0x48] sm:$0xff]
  %v3877 = vld [vmem:[#allocation3 + $0x50] sm:$0xff]
  %v3878 = vld [vmem:[#allocation3 + $0x58] sm:$0xff]
  %v3879 = vld [vmem:[#allocation3 + $0x60] sm:$0xff]
  %v3880 = vld [vmem:[#allocation3 + $0x68] sm:$0xff]
  %v3881 = vld [vmem:[#allocation3 + $0x70] sm:$0xff]
  %v3882 = vadd.f32 %v3868, %v3854
  %v3883 = vadd.f32 %v3869, %v3855
  %v3884 = vadd.f32 %v3870, %v3856
  %v3885 = vadd.f32 %v3871, %v3857
  %v3886 = vadd.f32 %v3872, %v3858
  %v3887 = vadd.f32 %v3873, %v3859
  %v3888 = vadd.f32 %v3874, %v3860
  %v3889 = vadd.f32 %v3875, %v3861
  %v3890 = vadd.f32 %v3876, %v3862
  %v3891 = vadd.f32 %v3877, %v3863
  %v3892 = vadd.f32 %v3878, %v3864
  %v3893 = vadd.f32 %v3879, %v3865
  %v3894 = vadd.f32 %v3880, %v3866
  %v3895 = vadd.f32 %v3881, %v3867
  %3896 = vst [vmem:[%s8] sm:$0xff] %v3882
  %3897 = vst [vmem:[%s8 + $0x8] sm:$0xff] %v3883
  %3898 = vst [vmem:[%s8 + $0x10] sm:$0xff] %v3884
  %3899 = vst [vmem:[%s8 + $0x18] sm:$0xff] %v3885
  %3900 = vst [vmem:[%s8 + $0x20] sm:$0xff] %v3886
  %3901 = vst [vmem:[%s8 + $0x28] sm:$0xff] %v3887
  %3902 = vst [vmem:[%s8 + $0x30] sm:$0xff] %v3888
  %3903 = vst [vmem:[%s8 + $0x38] sm:$0xff] %v3889
  %3904 = vst [vmem:[%s8 + $0x40] sm:$0xff] %v3890
  %3905 = vst [vmem:[%s8 + $0x48] sm:$0xff] %v3891
  %3906 = vst [vmem:[%s8 + $0x50] sm:$0xff] %v3892
  %3907 = vst [vmem:[%s8 + $0x58] sm:$0xff] %v3893
  %3908 = vst [vmem:[%s8 + $0x60] sm:$0xff] %v3894
  %3909 = vst [vmem:[%s8 + $0x68] sm:$0xff] %v3895
  // Predicated region
  $region34: #{ss_multiscale_block3d.1} parent=0 // pred_check
    _
  $region35: #{ss_multiscale_block3d.1} parent=0 // pred_check_branch
    %3911 = sbr.rel (0) target = $region37
  $region36: #{ss_multiscale_block3d.1} parent=0 // pred_region
    _
  $region37: #{ss_multiscale_block3d.1} parent=0 // pred_fallthru
    _
  // Predicated region
  $region38: #{ss_multiscale_block3d.1} parent=0 // pred_check
    _
  $region39: #{ss_multiscale_block3d.1} parent=0 // pred_check_branch
    %3913 = sbr.rel (0) target = $region41
  $region40: #{ss_multiscale_block3d.1} parent=0 // pred_region
    _
  $region41: #{ss_multiscale_block3d.1} parent=0 // pred_fallthru
    _

</llo_original>
